<compile_context>
chip_gen: v6e
topology: v6e:2x2x1
jax: 0.10.0
libtpu: 0.0.40
codegen_flags: <defaults>
</compile_context>

<pallas_src>
import functools

import jax
import jax.numpy as jnp
import numpy as np
from jax.experimental import pallas as pl
from jax.experimental.pallas import tpu as pltpu


def _fused_conv_kernel(x_ref, w_ref, s_ref, shift_ref, o_ref, acc_ref, *, leak):
    """One grid step handles (n, output-D block i, D-tap dk).

    x_ref    : (1, Cin, BD, Ho, 2*W) f32  raw input slab; original image row
               h = 2*ho + hk lives at lanes [hk*W, (hk+1)*W) of row ho.
    w_ref    : (1, 4, Cin, Cout, 1, 1) f32  BN-scale-folded weights, tap=2*hk+wk.
    s_ref    : (W, 2*Wo) f32  constant 0/1 matrix; column wk*Wo+wo selects w=2*wo+wk.
    shift_ref: (Cout, 1, 1) f32  folded BN shift.
    o_ref    : (1, Cout, BD*Ho, Wo) f32  output block (N-leading layout).
    acc_ref  : (Cout, BD*Ho, Wo) f32  VMEM accumulator across the kd axis.
    """
    _, cin, bd, ho, w2 = x_ref.shape
    w_half = w2 // 2                       # = W (original image width)
    cout = o_ref.shape[1]
    bdho = o_ref.shape[2]                  # = bd * ho
    wo = o_ref.shape[3]

    dk = pl.program_id(2)
    kd = pl.num_programs(2)

    @pl.when(dk == 0)
    def _init():
        acc_ref[...] = jnp.zeros_like(acc_ref)

    for hk in range(2):
        # contiguous lane slice == rows h = 2*ho + hk of the original image
        xh = x_ref[0, :, :, :, hk * w_half:(hk + 1) * w_half]   # (Cin, BD, Ho, W)
        x2 = xh.reshape(cin * bd * ho, w_half)                  # merge leading dims
        # stride-2 W downsample for both wk taps at once, on the MXU (exact)
        xw = jnp.dot(x2, s_ref[...],
                     preferred_element_type=jnp.float32,
                     precision=jax.lax.Precision.HIGHEST)       # (Cin*BD*Ho, 2*Wo)
        for wk in range(2):
            xsel = xw[:, wk * wo:(wk + 1) * wo]                 # (Cin*BD*Ho, Wo)
            tap = jnp.zeros((cout, bdho, wo), jnp.float32)
            for c in range(cin):
                xc = xsel[c * bdho:(c + 1) * bdho, :]           # (BD*Ho, Wo)
                wt = w_ref[0, 2 * hk + wk, c]                   # (Cout, 1, 1)
                tap = tap + wt * xc[None, :, :]
            acc_ref[...] += tap

    @pl.when(dk == kd - 1)
    def _finish():
        y = acc_ref[...] + shift_ref[...]
        y = jnp.where(y > 0, y, leak * y)
        o_ref[0] = y.astype(o_ref.dtype)


def sparse_conv_downsample(x_ncdhw, weight, gamma, beta, running_mean,
                           running_var, *, batch_norm=True, leaky_relu=True,
                           eps=1e-5, leak=0.333, lane_target=16384):
    """Dense-equivalent forward of SparseConvolutionDownsample.

    x_ncdhw: (N, Cin, D, H, W) float32
    weight : (kd, 2, 2, Cin, Cout) float32   (filter_size=[nplanes, 2, 2])
    """
    N, Cin, D, H, W = x_ncdhw.shape
    kd, kh, kw, wci, Cout = weight.shape
    assert (kh, kw) == (2, 2) and H % 2 == 0 and W % 2 == 0 and wci == Cin
    Do, Ho, Wo = D - kd + 1, H // 2, W // 2
    assert Do >= 1

    # --- fold BN (inference / running stats) into weight scale + shift ---
    if batch_norm:
        scale = gamma / jnp.sqrt(running_var + eps)
        shift = beta - running_mean * scale
    else:
        scale = jnp.ones((Cout,), jnp.float32)
        shift = jnp.zeros((Cout,), jnp.float32)
    wf = weight.astype(jnp.float32) * scale[None, None, None, None, :]
    w_in = wf.reshape(kd, 4, Cin, Cout)[..., None, None]       # (kd,4,Cin,Cout,1,1)
    shift_in = shift.reshape(Cout, 1, 1).astype(jnp.float32)

    # --- constant 0/1 lane-selection matrix: S[w, wk*Wo+wo] = (w == 2*wo+wk) ---
    w_idx = np.arange(W)[:, None]
    col = np.arange(2 * Wo)[None, :]
    sel = jnp.asarray((w_idx == 2 * (col % Wo) + (col // Wo)).astype(np.float32))

    # --- pick the output D-block so each grid step emits a wide tile ---
    if kd == 1:
        target = max(1, lane_target // (Ho * Wo))
        cands = [b for b in range(1, Do + 1) if Do % b == 0]
        valid = [b for b in cands if (b * Ho) % 8 == 0 or b == Do]
        le = [b for b in valid if b <= target]
        BD = max(le) if le else min(valid)
    else:
        BD = 1
        if Ho % 8 != 0 and Do > 1:
            raise NotImplementedError(
                "nplanes>1 requires Ho % 8 == 0 (or Do == 1)")  # TODO(synk)

    slope = float(leak) if leaky_relu else 0.0

    # free (bitcast) reshape: (H, W) -> (Ho, 2*W); no data movement
    x5 = x_ncdhw.astype(jnp.float32).reshape(N, Cin, D, Ho, 2 * W)

    grid = (N, Do // BD, kd)

    m_total = N * Do * Ho * Wo
    K = kd * 4 * Cin
    cost = pl.CostEstimate(
        flops=2 * m_total * K * Cout
              + 2 * (2 * N * kd * Do * Ho * Cin) * W * (2 * Wo),
        transcendentals=0,
        bytes_accessed=x5.size * 4 * kd + m_total * Cout * 4
                       + int(w_in.size) * 4 + int(sel.size) * 4 + Cout * 4,
    )

    x_block_bytes = Cin * BD * Ho * 2 * W * 4
    o_block_bytes = Cout * BD * Ho * Wo * 4
    vmem_limit = int(min(100 * 2 ** 20,
                         max(32 * 2 ** 20, 6 * (x_block_bytes + o_block_bytes))))

    kernel = functools.partial(_fused_conv_kernel, leak=slope)

    out = pl.pallas_call(
        kernel,
        out_shape=jax.ShapeDtypeStruct((N, Cout, Do * Ho, Wo), jnp.float32),
        grid_spec=pltpu.PrefetchScalarGridSpec(
            num_scalar_prefetch=0,
            grid=grid,
            in_specs=[
                # raw activations: BD output D-slices (+dk offset for kd>1)
                pl.BlockSpec((1, Cin, BD, Ho, 2 * W),
                             lambda n, i, dk: (n, 0, i + dk, 0, 0)),
                # BN-folded tap weights for the current dk
                pl.BlockSpec((1, 4, Cin, Cout, 1, 1),
                             lambda n, i, dk: (dk, 0, 0, 0, 0, 0)),
                # constant lane-selection matrix (resident)
                pl.BlockSpec((W, 2 * Wo), lambda n, i, dk: (0, 0)),
                # BN shift (resident)
                pl.BlockSpec((Cout, 1, 1), lambda n, i, dk: (0, 0, 0)),
            ],
            out_specs=pl.BlockSpec((1, Cout, BD * Ho, Wo),
                                   lambda n, i, dk: (n, 0, i, 0)),
            scratch_shapes=[pltpu.VMEM((Cout, BD * Ho, Wo), jnp.float32)],
        ),
        compiler_params=pltpu.CompilerParams(
            dimension_semantics=("parallel", "parallel", "arbitrary"),
            vmem_limit_bytes=vmem_limit,
        ),
        cost_estimate=cost,
    )(x5, w_in, sel, shift_in)

    # free reshape back to NCDHW — no transpose, no copy
    return out.reshape(N, Cout, Do, Ho, Wo)


def _reference(x_ncdhw, weight, gamma, beta, running_mean, running_var,
               batch_norm, leaky_relu, eps=1e-5, leak=0.333):
    w_oidhw = jnp.transpose(weight, (4, 3, 0, 1, 2))
    y = jax.lax.conv_general_dilated(
        x_ncdhw, w_oidhw, window_strides=(1, 2, 2), padding="VALID",
        dimension_numbers=("NCDHW", "OIDHW", "NCDHW"),
        precision=jax.lax.Precision.HIGHEST)
    if batch_norm:
        s = (gamma / jnp.sqrt(running_var + eps)).reshape(1, -1, 1, 1, 1)
        b = (beta - running_mean * gamma / jnp.sqrt(running_var + eps)
             ).reshape(1, -1, 1, 1, 1)
        y = y * s + b
    slope = leak if leaky_relu else 0.0
    return jnp.where(y > 0, y, slope * y)


if __name__ == "__main__":
    # module config
    inplanes, outplanes, nplanes = 4, 8, 1
    batch_norm, leaky_relu = True, True

    # small deterministic input: N=2, Cin=4, D=2, H=W=16  (NCDHW)
    key = jax.random.PRNGKey(0)
    k_x, k_w, k_g, k_b, k_m, k_v = jax.random.split(key, 6)
    x = jax.random.normal(k_x, (2, inplanes, 2, 16, 16), jnp.float32)

    # deterministic parameters (conv weight, BN stats)
    weight = jax.random.normal(
        k_w, (nplanes, 2, 2, inplanes, outplanes), jnp.float32) * 0.1
    gamma = 1.0 + 0.1 * jax.random.normal(k_g, (outplanes,), jnp.float32)
    beta = 0.1 * jax.random.normal(k_b, (outplanes,), jnp.float32)
    running_mean = 0.1 * jax.random.normal(k_m, (outplanes,), jnp.float32)
    running_var = jnp.abs(1.0 + 0.1 * jax.random.normal(
        k_v, (outplanes,), jnp.float32))

    out = sparse_conv_downsample(
        x, weight, gamma, beta, running_mean, running_var,
        batch_norm=batch_norm, leaky_relu=leaky_relu)
    out = jax.block_until_ready(out)

    ref = _reference(x, weight, gamma, beta, running_mean, running_var,
                     batch_norm, leaky_relu)
    # full-f32 pipeline (HIGHEST precision on the MXU dot) -> tight tolerance.
    np.testing.assert_allclose(np.asarray(out), np.asarray(ref),
                               rtol=5e-3, atol=5e-3)
    print("KERNEL_OK")
</pallas_src>

<mosaic_0001>
module attributes {stable_mosaic.version = 11 : i64} {
  func.func @_fused_conv_kernel(%arg0: i32, %arg1: i32, %arg2: i32, %arg3: memref<1x4x2x8x32xf32, #tpu.memory_space<vmem>>, %arg4: memref<1x4x4x8x1x1xf32, #tpu.memory_space<vmem>>, %arg5: memref<16x16xf32, #tpu.memory_space<vmem>>, %arg6: memref<8x1x1xf32, #tpu.memory_space<vmem>>, %arg7: memref<1x8x16x8xf32, #tpu.memory_space<vmem>>, %arg8: memref<8x16x8xf32, #tpu.memory_space<vmem>>) attributes {dimension_semantics = [#tpu.dimension_semantics<parallel>, #tpu.dimension_semantics<parallel>, #tpu.dimension_semantics<arbitrary>], iteration_bounds = array<i64: 2, 1, 1>, scalar_prefetch = 0 : i64, scratch_operands = 1 : i64, tpu.core_type = #tpu.core_type<tc>, window_params = [{transform_indices = @transform_0, window_bounds = array<i64: 1, 4, 2, 8, 32>}, {transform_indices = @transform_1, window_bounds = array<i64: 1, 4, 4, 8, 1, 1>}, {pipeline_mode = #tpu.pipeline_mode<synchronous>, transform_indices = @transform_2, window_bounds = array<i64: 16, 16>}, {pipeline_mode = #tpu.pipeline_mode<synchronous>, transform_indices = @transform_3, window_bounds = array<i64: 8, 1, 1>}, {transform_indices = @transform_4, window_bounds = array<i64: 1, 8, 16, 8>}]} {
    %c0_i32 = arith.constant 0 : i32
    %0 = arith.cmpi eq, %arg2, %c0_i32 : i32
    %1 = arith.extui %0 : i1 to i32
    %c0_i32_0 = arith.constant 0 : i32
    %2 = arith.cmpi ne, %1, %c0_i32_0 : i32
    scf.if %2 {
      %cst_137 = arith.constant 0.000000e+00 : f32
      %164 = vector.broadcast %cst_137 : f32 to vector<8x16x8xf32>
      %c0_138 = arith.constant 0 : index
      %c0_139 = arith.constant 0 : index
      %c0_140 = arith.constant 0 : index
      %165 = vector.load %arg8[%c0_138, %c0_139, %c0_140] : memref<8x16x8xf32, #tpu.memory_space<vmem>>, vector<8x16x8xf32>
      tpu.vector_store %arg8[%c0_138, %c0_139, %c0_140], %164 {strides = array<i32>} : memref<8x16x8xf32, #tpu.memory_space<vmem>>, vector<8x16x8xf32>,
    } else {
    }
    %c0 = arith.constant 0 : index
    %c0_1 = arith.constant 0 : index
    %c0_2 = arith.constant 0 : index
    %c0_3 = arith.constant 0 : index
    %c0_4 = arith.constant 0 : index
    %3 = vector.load %arg3[%c0, %c0_1, %c0_2, %c0_3, %c0_4] : memref<1x4x2x8x32xf32, #tpu.memory_space<vmem>>, vector<1x4x2x8x16xf32>
    %4 = vector.shape_cast %3 : vector<1x4x2x8x16xf32> to vector<4x2x8x16xf32>
    %5 = vector.shape_cast %4 : vector<4x2x8x16xf32> to vector<64x16xf32>
    %c0_5 = arith.constant 0 : index
    %c0_6 = arith.constant 0 : index
    %6 = vector.load %arg5[%c0_5, %c0_6] : memref<16x16xf32, #tpu.memory_space<vmem>>, vector<16x16xf32>
    %cst = arith.constant dense<0.000000e+00> : vector<64x16xf32>
    %7 = tpu.matmul %5, %6, %cst {dimension_numbers = #tpu.dot_dimension_numbers<[1], [0], [0], [1], [0, 0, 1, 1], [], []>, precision = #tpu.contract_precision<fp32>} : vector<64x16xf32>, vector<16x16xf32>, vector<64x16xf32> -> vector<64x16xf32>
    %8 = vector.extract_strided_slice %7 {offsets = [0, 0], sizes = [64, 8], strides = [1, 1]} : vector<64x16xf32> to vector<64x8xf32>
    %cst_7 = arith.constant 0.000000e+00 : f32
    %9 = vector.broadcast %cst_7 : f32 to vector<8x16x8xf32>
    %10 = vector.extract_strided_slice %8 {offsets = [0, 0], sizes = [16, 8], strides = [1, 1]} : vector<64x8xf32> to vector<16x8xf32>
    %c0_8 = arith.constant 0 : index
    %c0_9 = arith.constant 0 : index
    %c0_10 = arith.constant 0 : index
    %c0_11 = arith.constant 0 : index
    %c0_12 = arith.constant 0 : index
    %c0_13 = arith.constant 0 : index
    %11 = vector.load %arg4[%c0_8, %c0_9, %c0_10, %c0_11, %c0_12, %c0_13] : memref<1x4x4x8x1x1xf32, #tpu.memory_space<vmem>>, vector<1x1x1x8x1x1xf32>
    %12 = vector.shape_cast %11 : vector<1x1x1x8x1x1xf32> to vector<8x1x1xf32>
    %13 = vector.shape_cast %10 : vector<16x8xf32> to vector<1x16x8xf32>
    %14 = vector.broadcast %12 : vector<8x1x1xf32> to vector<8x16x8xf32>
    %15 = vector.broadcast %13 : vector<1x16x8xf32> to vector<8x16x8xf32>
    %16 = arith.mulf %14, %15 : vector<8x16x8xf32>
    %17 = arith.addf %9, %16 : vector<8x16x8xf32>
    %18 = vector.extract_strided_slice %8 {offsets = [16, 0], sizes = [16, 8], strides = [1, 1]} : vector<64x8xf32> to vector<16x8xf32>
    %c0_14 = arith.constant 0 : index
    %c0_15 = arith.constant 0 : index
    %c1 = arith.constant 1 : index
    %c0_16 = arith.constant 0 : index
    %c0_17 = arith.constant 0 : index
    %c0_18 = arith.constant 0 : index
    %19 = vector.load %arg4[%c0_14, %c0_15, %c1, %c0_16, %c0_17, %c0_18] : memref<1x4x4x8x1x1xf32, #tpu.memory_space<vmem>>, vector<1x1x1x8x1x1xf32>
    %20 = vector.shape_cast %19 : vector<1x1x1x8x1x1xf32> to vector<8x1x1xf32>
    %21 = vector.shape_cast %18 : vector<16x8xf32> to vector<1x16x8xf32>
    %22 = vector.broadcast %20 : vector<8x1x1xf32> to vector<8x16x8xf32>
    %23 = vector.broadcast %21 : vector<1x16x8xf32> to vector<8x16x8xf32>
    %24 = arith.mulf %22, %23 : vector<8x16x8xf32>
    %25 = arith.addf %17, %24 : vector<8x16x8xf32>
    %26 = vector.extract_strided_slice %8 {offsets = [32, 0], sizes = [16, 8], strides = [1, 1]} : vector<64x8xf32> to vector<16x8xf32>
    %c0_19 = arith.constant 0 : index
    %c0_20 = arith.constant 0 : index
    %c2 = arith.constant 2 : index
    %c0_21 = arith.constant 0 : index
    %c0_22 = arith.constant 0 : index
    %c0_23 = arith.constant 0 : index
    %27 = vector.load %arg4[%c0_19, %c0_20, %c2, %c0_21, %c0_22, %c0_23] : memref<1x4x4x8x1x1xf32, #tpu.memory_space<vmem>>, vector<1x1x1x8x1x1xf32>
    %28 = vector.shape_cast %27 : vector<1x1x1x8x1x1xf32> to vector<8x1x1xf32>
    %29 = vector.shape_cast %26 : vector<16x8xf32> to vector<1x16x8xf32>
    %30 = vector.broadcast %28 : vector<8x1x1xf32> to vector<8x16x8xf32>
    %31 = vector.broadcast %29 : vector<1x16x8xf32> to vector<8x16x8xf32>
    %32 = arith.mulf %30, %31 : vector<8x16x8xf32>
    %33 = arith.addf %25, %32 : vector<8x16x8xf32>
    %34 = vector.extract_strided_slice %8 {offsets = [48, 0], sizes = [16, 8], strides = [1, 1]} : vector<64x8xf32> to vector<16x8xf32>
    %c0_24 = arith.constant 0 : index
    %c0_25 = arith.constant 0 : index
    %c3 = arith.constant 3 : index
    %c0_26 = arith.constant 0 : index
    %c0_27 = arith.constant 0 : index
    %c0_28 = arith.constant 0 : index
    %35 = vector.load %arg4[%c0_24, %c0_25, %c3, %c0_26, %c0_27, %c0_28] : memref<1x4x4x8x1x1xf32, #tpu.memory_space<vmem>>, vector<1x1x1x8x1x1xf32>
    %36 = vector.shape_cast %35 : vector<1x1x1x8x1x1xf32> to vector<8x1x1xf32>
    %37 = vector.shape_cast %34 : vector<16x8xf32> to vector<1x16x8xf32>
    %38 = vector.broadcast %36 : vector<8x1x1xf32> to vector<8x16x8xf32>
    %39 = vector.broadcast %37 : vector<1x16x8xf32> to vector<8x16x8xf32>
    %40 = arith.mulf %38, %39 : vector<8x16x8xf32>
    %41 = arith.addf %33, %40 : vector<8x16x8xf32>
    %c0_29 = arith.constant 0 : index
    %c0_30 = arith.constant 0 : index
    %c0_31 = arith.constant 0 : index
    %42 = vector.load %arg8[%c0_29, %c0_30, %c0_31] : memref<8x16x8xf32, #tpu.memory_space<vmem>>, vector<8x16x8xf32>
    %43 = arith.addf %42, %41 : vector<8x16x8xf32>
    %c0_32 = arith.constant 0 : index
    %c0_33 = arith.constant 0 : index
    %c0_34 = arith.constant 0 : index
    %44 = vector.load %arg8[%c0_32, %c0_33, %c0_34] : memref<8x16x8xf32, #tpu.memory_space<vmem>>, vector<8x16x8xf32>
    tpu.vector_store %arg8[%c0_32, %c0_33, %c0_34], %43 {strides = array<i32>} : memref<8x16x8xf32, #tpu.memory_space<vmem>>, vector<8x16x8xf32>,
    %45 = vector.extract_strided_slice %7 {offsets = [0, 8], sizes = [64, 8], strides = [1, 1]} : vector<64x16xf32> to vector<64x8xf32>
    %cst_35 = arith.constant 0.000000e+00 : f32
    %46 = vector.broadcast %cst_35 : f32 to vector<8x16x8xf32>
    %47 = vector.extract_strided_slice %45 {offsets = [0, 0], sizes = [16, 8], strides = [1, 1]} : vector<64x8xf32> to vector<16x8xf32>
    %c0_36 = arith.constant 0 : index
    %c1_37 = arith.constant 1 : index
    %c0_38 = arith.constant 0 : index
    %c0_39 = arith.constant 0 : index
    %c0_40 = arith.constant 0 : index
    %c0_41 = arith.constant 0 : index
    %48 = vector.load %arg4[%c0_36, %c1_37, %c0_38, %c0_39, %c0_40, %c0_41] : memref<1x4x4x8x1x1xf32, #tpu.memory_space<vmem>>, vector<1x1x1x8x1x1xf32>
    %49 = vector.shape_cast %48 : vector<1x1x1x8x1x1xf32> to vector<8x1x1xf32>
    %50 = vector.shape_cast %47 : vector<16x8xf32> to vector<1x16x8xf32>
    %51 = vector.broadcast %49 : vector<8x1x1xf32> to vector<8x16x8xf32>
    %52 = vector.broadcast %50 : vector<1x16x8xf32> to vector<8x16x8xf32>
    %53 = arith.mulf %51, %52 : vector<8x16x8xf32>
    %54 = arith.addf %46, %53 : vector<8x16x8xf32>
    %55 = vector.extract_strided_slice %45 {offsets = [16, 0], sizes = [16, 8], strides = [1, 1]} : vector<64x8xf32> to vector<16x8xf32>
    %c0_42 = arith.constant 0 : index
    %c1_43 = arith.constant 1 : index
    %c1_44 = arith.constant 1 : index
    %c0_45 = arith.constant 0 : index
    %c0_46 = arith.constant 0 : index
    %c0_47 = arith.constant 0 : index
    %56 = vector.load %arg4[%c0_42, %c1_43, %c1_44, %c0_45, %c0_46, %c0_47] : memref<1x4x4x8x1x1xf32, #tpu.memory_space<vmem>>, vector<1x1x1x8x1x1xf32>
    %57 = vector.shape_cast %56 : vector<1x1x1x8x1x1xf32> to vector<8x1x1xf32>
    %58 = vector.shape_cast %55 : vector<16x8xf32> to vector<1x16x8xf32>
    %59 = vector.broadcast %57 : vector<8x1x1xf32> to vector<8x16x8xf32>
    %60 = vector.broadcast %58 : vector<1x16x8xf32> to vector<8x16x8xf32>
    %61 = arith.mulf %59, %60 : vector<8x16x8xf32>
    %62 = arith.addf %54, %61 : vector<8x16x8xf32>
    %63 = vector.extract_strided_slice %45 {offsets = [32, 0], sizes = [16, 8], strides = [1, 1]} : vector<64x8xf32> to vector<16x8xf32>
    %c0_48 = arith.constant 0 : index
    %c1_49 = arith.constant 1 : index
    %c2_50 = arith.constant 2 : index
    %c0_51 = arith.constant 0 : index
    %c0_52 = arith.constant 0 : index
    %c0_53 = arith.constant 0 : index
    %64 = vector.load %arg4[%c0_48, %c1_49, %c2_50, %c0_51, %c0_52, %c0_53] : memref<1x4x4x8x1x1xf32, #tpu.memory_space<vmem>>, vector<1x1x1x8x1x1xf32>
    %65 = vector.shape_cast %64 : vector<1x1x1x8x1x1xf32> to vector<8x1x1xf32>
    %66 = vector.shape_cast %63 : vector<16x8xf32> to vector<1x16x8xf32>
    %67 = vector.broadcast %65 : vector<8x1x1xf32> to vector<8x16x8xf32>
    %68 = vector.broadcast %66 : vector<1x16x8xf32> to vector<8x16x8xf32>
    %69 = arith.mulf %67, %68 : vector<8x16x8xf32>
    %70 = arith.addf %62, %69 : vector<8x16x8xf32>
    %71 = vector.extract_strided_slice %45 {offsets = [48, 0], sizes = [16, 8], strides = [1, 1]} : vector<64x8xf32> to vector<16x8xf32>
    %c0_54 = arith.constant 0 : index
    %c1_55 = arith.constant 1 : index
    %c3_56 = arith.constant 3 : index
    %c0_57 = arith.constant 0 : index
    %c0_58 = arith.constant 0 : index
    %c0_59 = arith.constant 0 : index
    %72 = vector.load %arg4[%c0_54, %c1_55, %c3_56, %c0_57, %c0_58, %c0_59] : memref<1x4x4x8x1x1xf32, #tpu.memory_space<vmem>>, vector<1x1x1x8x1x1xf32>
    %73 = vector.shape_cast %72 : vector<1x1x1x8x1x1xf32> to vector<8x1x1xf32>
    %74 = vector.shape_cast %71 : vector<16x8xf32> to vector<1x16x8xf32>
    %75 = vector.broadcast %73 : vector<8x1x1xf32> to vector<8x16x8xf32>
    %76 = vector.broadcast %74 : vector<1x16x8xf32> to vector<8x16x8xf32>
    %77 = arith.mulf %75, %76 : vector<8x16x8xf32>
    %78 = arith.addf %70, %77 : vector<8x16x8xf32>
    %c0_60 = arith.constant 0 : index
    %c0_61 = arith.constant 0 : index
    %c0_62 = arith.constant 0 : index
    %79 = vector.load %arg8[%c0_60, %c0_61, %c0_62] : memref<8x16x8xf32, #tpu.memory_space<vmem>>, vector<8x16x8xf32>
    %80 = arith.addf %79, %78 : vector<8x16x8xf32>
    %c0_63 = arith.constant 0 : index
    %c0_64 = arith.constant 0 : index
    %c0_65 = arith.constant 0 : index
    %81 = vector.load %arg8[%c0_63, %c0_64, %c0_65] : memref<8x16x8xf32, #tpu.memory_space<vmem>>, vector<8x16x8xf32>
    tpu.vector_store %arg8[%c0_63, %c0_64, %c0_65], %80 {strides = array<i32>} : memref<8x16x8xf32, #tpu.memory_space<vmem>>, vector<8x16x8xf32>,
    %c0_66 = arith.constant 0 : index
    %c0_67 = arith.constant 0 : index
    %c0_68 = arith.constant 0 : index
    %c0_69 = arith.constant 0 : index
    %c16 = arith.constant 16 : index
    %82 = vector.load %arg3[%c0_66, %c0_67, %c0_68, %c0_69, %c16] : memref<1x4x2x8x32xf32, #tpu.memory_space<vmem>>, vector<1x4x2x8x16xf32>
    %83 = vector.shape_cast %82 : vector<1x4x2x8x16xf32> to vector<4x2x8x16xf32>
    %84 = vector.shape_cast %83 : vector<4x2x8x16xf32> to vector<64x16xf32>
    %c0_70 = arith.constant 0 : index
    %c0_71 = arith.constant 0 : index
    %85 = vector.load %arg5[%c0_70, %c0_71] : memref<16x16xf32, #tpu.memory_space<vmem>>, vector<16x16xf32>
    %cst_72 = arith.constant dense<0.000000e+00> : vector<64x16xf32>
    %86 = tpu.matmul %84, %85, %cst_72 {dimension_numbers = #tpu.dot_dimension_numbers<[1], [0], [0], [1], [0, 0, 1, 1], [], []>, precision = #tpu.contract_precision<fp32>} : vector<64x16xf32>, vector<16x16xf32>, vector<64x16xf32> -> vector<64x16xf32>
    %87 = vector.extract_strided_slice %86 {offsets = [0, 0], sizes = [64, 8], strides = [1, 1]} : vector<64x16xf32> to vector<64x8xf32>
    %cst_73 = arith.constant 0.000000e+00 : f32
    %88 = vector.broadcast %cst_73 : f32 to vector<8x16x8xf32>
    %89 = vector.extract_strided_slice %87 {offsets = [0, 0], sizes = [16, 8], strides = [1, 1]} : vector<64x8xf32> to vector<16x8xf32>
    %c0_74 = arith.constant 0 : index
    %c2_75 = arith.constant 2 : index
    %c0_76 = arith.constant 0 : index
    %c0_77 = arith.constant 0 : index
    %c0_78 = arith.constant 0 : index
    %c0_79 = arith.constant 0 : index
    %90 = vector.load %arg4[%c0_74, %c2_75, %c0_76, %c0_77, %c0_78, %c0_79] : memref<1x4x4x8x1x1xf32, #tpu.memory_space<vmem>>, vector<1x1x1x8x1x1xf32>
    %91 = vector.shape_cast %90 : vector<1x1x1x8x1x1xf32> to vector<8x1x1xf32>
    %92 = vector.shape_cast %89 : vector<16x8xf32> to vector<1x16x8xf32>
    %93 = vector.broadcast %91 : vector<8x1x1xf32> to vector<8x16x8xf32>
    %94 = vector.broadcast %92 : vector<1x16x8xf32> to vector<8x16x8xf32>
    %95 = arith.mulf %93, %94 : vector<8x16x8xf32>
    %96 = arith.addf %88, %95 : vector<8x16x8xf32>
    %97 = vector.extract_strided_slice %87 {offsets = [16, 0], sizes = [16, 8], strides = [1, 1]} : vector<64x8xf32> to vector<16x8xf32>
    %c0_80 = arith.constant 0 : index
    %c2_81 = arith.constant 2 : index
    %c1_82 = arith.constant 1 : index
    %c0_83 = arith.constant 0 : index
    %c0_84 = arith.constant 0 : index
    %c0_85 = arith.constant 0 : index
    %98 = vector.load %arg4[%c0_80, %c2_81, %c1_82, %c0_83, %c0_84, %c0_85] : memref<1x4x4x8x1x1xf32, #tpu.memory_space<vmem>>, vector<1x1x1x8x1x1xf32>
    %99 = vector.shape_cast %98 : vector<1x1x1x8x1x1xf32> to vector<8x1x1xf32>
    %100 = vector.shape_cast %97 : vector<16x8xf32> to vector<1x16x8xf32>
    %101 = vector.broadcast %99 : vector<8x1x1xf32> to vector<8x16x8xf32>
    %102 = vector.broadcast %100 : vector<1x16x8xf32> to vector<8x16x8xf32>
    %103 = arith.mulf %101, %102 : vector<8x16x8xf32>
    %104 = arith.addf %96, %103 : vector<8x16x8xf32>
    %105 = vector.extract_strided_slice %87 {offsets = [32, 0], sizes = [16, 8], strides = [1, 1]} : vector<64x8xf32> to vector<16x8xf32>
    %c0_86 = arith.constant 0 : index
    %c2_87 = arith.constant 2 : index
    %c2_88 = arith.constant 2 : index
    %c0_89 = arith.constant 0 : index
    %c0_90 = arith.constant 0 : index
    %c0_91 = arith.constant 0 : index
    %106 = vector.load %arg4[%c0_86, %c2_87, %c2_88, %c0_89, %c0_90, %c0_91] : memref<1x4x4x8x1x1xf32, #tpu.memory_space<vmem>>, vector<1x1x1x8x1x1xf32>
    %107 = vector.shape_cast %106 : vector<1x1x1x8x1x1xf32> to vector<8x1x1xf32>
    %108 = vector.shape_cast %105 : vector<16x8xf32> to vector<1x16x8xf32>
    %109 = vector.broadcast %107 : vector<8x1x1xf32> to vector<8x16x8xf32>
    %110 = vector.broadcast %108 : vector<1x16x8xf32> to vector<8x16x8xf32>
    %111 = arith.mulf %109, %110 : vector<8x16x8xf32>
    %112 = arith.addf %104, %111 : vector<8x16x8xf32>
    %113 = vector.extract_strided_slice %87 {offsets = [48, 0], sizes = [16, 8], strides = [1, 1]} : vector<64x8xf32> to vector<16x8xf32>
    %c0_92 = arith.constant 0 : index
    %c2_93 = arith.constant 2 : index
    %c3_94 = arith.constant 3 : index
    %c0_95 = arith.constant 0 : index
    %c0_96 = arith.constant 0 : index
    %c0_97 = arith.constant 0 : index
    %114 = vector.load %arg4[%c0_92, %c2_93, %c3_94, %c0_95, %c0_96, %c0_97] : memref<1x4x4x8x1x1xf32, #tpu.memory_space<vmem>>, vector<1x1x1x8x1x1xf32>
    %115 = vector.shape_cast %114 : vector<1x1x1x8x1x1xf32> to vector<8x1x1xf32>
    %116 = vector.shape_cast %113 : vector<16x8xf32> to vector<1x16x8xf32>
    %117 = vector.broadcast %115 : vector<8x1x1xf32> to vector<8x16x8xf32>
    %118 = vector.broadcast %116 : vector<1x16x8xf32> to vector<8x16x8xf32>
    %119 = arith.mulf %117, %118 : vector<8x16x8xf32>
    %120 = arith.addf %112, %119 : vector<8x16x8xf32>
    %c0_98 = arith.constant 0 : index
    %c0_99 = arith.constant 0 : index
    %c0_100 = arith.constant 0 : index
    %121 = vector.load %arg8[%c0_98, %c0_99, %c0_100] : memref<8x16x8xf32, #tpu.memory_space<vmem>>, vector<8x16x8xf32>
    %122 = arith.addf %121, %120 : vector<8x16x8xf32>
    %c0_101 = arith.constant 0 : index
    %c0_102 = arith.constant 0 : index
    %c0_103 = arith.constant 0 : index
    %123 = vector.load %arg8[%c0_101, %c0_102, %c0_103] : memref<8x16x8xf32, #tpu.memory_space<vmem>>, vector<8x16x8xf32>
    tpu.vector_store %arg8[%c0_101, %c0_102, %c0_103], %122 {strides = array<i32>} : memref<8x16x8xf32, #tpu.memory_space<vmem>>, vector<8x16x8xf32>,
    %124 = vector.extract_strided_slice %86 {offsets = [0, 8], sizes = [64, 8], strides = [1, 1]} : vector<64x16xf32> to vector<64x8xf32>
    %cst_104 = arith.constant 0.000000e+00 : f32
    %125 = vector.broadcast %cst_104 : f32 to vector<8x16x8xf32>
    %126 = vector.extract_strided_slice %124 {offsets = [0, 0], sizes = [16, 8], strides = [1, 1]} : vector<64x8xf32> to vector<16x8xf32>
    %c0_105 = arith.constant 0 : index
    %c3_106 = arith.constant 3 : index
    %c0_107 = arith.constant 0 : index
    %c0_108 = arith.constant 0 : index
    %c0_109 = arith.constant 0 : index
    %c0_110 = arith.constant 0 : index
    %127 = vector.load %arg4[%c0_105, %c3_106, %c0_107, %c0_108, %c0_109, %c0_110] : memref<1x4x4x8x1x1xf32, #tpu.memory_space<vmem>>, vector<1x1x1x8x1x1xf32>
    %128 = vector.shape_cast %127 : vector<1x1x1x8x1x1xf32> to vector<8x1x1xf32>
    %129 = vector.shape_cast %126 : vector<16x8xf32> to vector<1x16x8xf32>
    %130 = vector.broadcast %128 : vector<8x1x1xf32> to vector<8x16x8xf32>
    %131 = vector.broadcast %129 : vector<1x16x8xf32> to vector<8x16x8xf32>
    %132 = arith.mulf %130, %131 : vector<8x16x8xf32>
    %133 = arith.addf %125, %132 : vector<8x16x8xf32>
    %134 = vector.extract_strided_slice %124 {offsets = [16, 0], sizes = [16, 8], strides = [1, 1]} : vector<64x8xf32> to vector<16x8xf32>
    %c0_111 = arith.constant 0 : index
    %c3_112 = arith.constant 3 : index
    %c1_113 = arith.constant 1 : index
    %c0_114 = arith.constant 0 : index
    %c0_115 = arith.constant 0 : index
    %c0_116 = arith.constant 0 : index
    %135 = vector.load %arg4[%c0_111, %c3_112, %c1_113, %c0_114, %c0_115, %c0_116] : memref<1x4x4x8x1x1xf32, #tpu.memory_space<vmem>>, vector<1x1x1x8x1x1xf32>
    %136 = vector.shape_cast %135 : vector<1x1x1x8x1x1xf32> to vector<8x1x1xf32>
    %137 = vector.shape_cast %134 : vector<16x8xf32> to vector<1x16x8xf32>
    %138 = vector.broadcast %136 : vector<8x1x1xf32> to vector<8x16x8xf32>
    %139 = vector.broadcast %137 : vector<1x16x8xf32> to vector<8x16x8xf32>
    %140 = arith.mulf %138, %139 : vector<8x16x8xf32>
    %141 = arith.addf %133, %140 : vector<8x16x8xf32>
    %142 = vector.extract_strided_slice %124 {offsets = [32, 0], sizes = [16, 8], strides = [1, 1]} : vector<64x8xf32> to vector<16x8xf32>
    %c0_117 = arith.constant 0 : index
    %c3_118 = arith.constant 3 : index
    %c2_119 = arith.constant 2 : index
    %c0_120 = arith.constant 0 : index
    %c0_121 = arith.constant 0 : index
    %c0_122 = arith.constant 0 : index
    %143 = vector.load %arg4[%c0_117, %c3_118, %c2_119, %c0_120, %c0_121, %c0_122] : memref<1x4x4x8x1x1xf32, #tpu.memory_space<vmem>>, vector<1x1x1x8x1x1xf32>
    %144 = vector.shape_cast %143 : vector<1x1x1x8x1x1xf32> to vector<8x1x1xf32>
    %145 = vector.shape_cast %142 : vector<16x8xf32> to vector<1x16x8xf32>
    %146 = vector.broadcast %144 : vector<8x1x1xf32> to vector<8x16x8xf32>
    %147 = vector.broadcast %145 : vector<1x16x8xf32> to vector<8x16x8xf32>
    %148 = arith.mulf %146, %147 : vector<8x16x8xf32>
    %149 = arith.addf %141, %148 : vector<8x16x8xf32>
    %150 = vector.extract_strided_slice %124 {offsets = [48, 0], sizes = [16, 8], strides = [1, 1]} : vector<64x8xf32> to vector<16x8xf32>
    %c0_123 = arith.constant 0 : index
    %c3_124 = arith.constant 3 : index
    %c3_125 = arith.constant 3 : index
    %c0_126 = arith.constant 0 : index
    %c0_127 = arith.constant 0 : index
    %c0_128 = arith.constant 0 : index
    %151 = vector.load %arg4[%c0_123, %c3_124, %c3_125, %c0_126, %c0_127, %c0_128] : memref<1x4x4x8x1x1xf32, #tpu.memory_space<vmem>>, vector<1x1x1x8x1x1xf32>
    %152 = vector.shape_cast %151 : vector<1x1x1x8x1x1xf32> to vector<8x1x1xf32>
    %153 = vector.shape_cast %150 : vector<16x8xf32> to vector<1x16x8xf32>
    %154 = vector.broadcast %152 : vector<8x1x1xf32> to vector<8x16x8xf32>
    %155 = vector.broadcast %153 : vector<1x16x8xf32> to vector<8x16x8xf32>
    %156 = arith.mulf %154, %155 : vector<8x16x8xf32>
    %157 = arith.addf %149, %156 : vector<8x16x8xf32>
    %c0_129 = arith.constant 0 : index
    %c0_130 = arith.constant 0 : index
    %c0_131 = arith.constant 0 : index
    %158 = vector.load %arg8[%c0_129, %c0_130, %c0_131] : memref<8x16x8xf32, #tpu.memory_space<vmem>>, vector<8x16x8xf32>
    %159 = arith.addf %158, %157 : vector<8x16x8xf32>
    %c0_132 = arith.constant 0 : index
    %c0_133 = arith.constant 0 : index
    %c0_134 = arith.constant 0 : index
    %160 = vector.load %arg8[%c0_132, %c0_133, %c0_134] : memref<8x16x8xf32, #tpu.memory_space<vmem>>, vector<8x16x8xf32>
    tpu.vector_store %arg8[%c0_132, %c0_133, %c0_134], %159 {strides = array<i32>} : memref<8x16x8xf32, #tpu.memory_space<vmem>>, vector<8x16x8xf32>,
    %c0_i32_135 = arith.constant 0 : i32
    %161 = arith.cmpi eq, %arg2, %c0_i32_135 : i32
    %162 = arith.extui %161 : i1 to i32
    %c0_i32_136 = arith.constant 0 : i32
    %163 = arith.cmpi ne, %162, %c0_i32_136 : i32
    scf.if %163 {
      %c0_137 = arith.constant 0 : index
      %c0_138 = arith.constant 0 : index
      %c0_139 = arith.constant 0 : index
      %164 = vector.load %arg8[%c0_137, %c0_138, %c0_139] : memref<8x16x8xf32, #tpu.memory_space<vmem>>, vector<8x16x8xf32>
      %c0_140 = arith.constant 0 : index
      %c0_141 = arith.constant 0 : index
      %c0_142 = arith.constant 0 : index
      %165 = vector.load %arg6[%c0_140, %c0_141, %c0_142] : memref<8x1x1xf32, #tpu.memory_space<vmem>>, vector<8x1x1xf32>
      %166 = vector.broadcast %165 : vector<8x1x1xf32> to vector<8x16x8xf32>
      %167 = arith.addf %164, %166 : vector<8x16x8xf32>
      %cst_143 = arith.constant 0.000000e+00 : f32
      %168 = vector.broadcast %cst_143 : f32 to vector<8x16x8xf32>
      %169 = arith.cmpf ogt, %167, %168 : vector<8x16x8xf32>
      %cst_144 = arith.constant 3.330000e-01 : f32
      %170 = vector.broadcast %cst_144 : f32 to vector<8x16x8xf32>
      %171 = arith.mulf %170, %167 : vector<8x16x8xf32>
      %172 = arith.select %169, %167, %171 : vector<8x16x8xi1>, vector<8x16x8xf32>
      %c0_145 = arith.constant 0 : index
      %c0_146 = arith.constant 0 : index
      %c0_147 = arith.constant 0 : index
      %c0_148 = arith.constant 0 : index
      %173 = vector.load %arg7[%c0_145, %c0_146, %c0_147, %c0_148] : memref<1x8x16x8xf32, #tpu.memory_space<vmem>>, vector<1x8x16x8xf32>
      %174 = vector.shape_cast %173 : vector<1x8x16x8xf32> to vector<8x16x8xf32>
      %175 = vector.shape_cast %172 : vector<8x16x8xf32> to vector<1x8x16x8xf32>
      tpu.vector_store %arg7[%c0_145, %c0_146, %c0_147, %c0_148], %175 {strides = array<i32>} : memref<1x8x16x8xf32, #tpu.memory_space<vmem>>, vector<1x8x16x8xf32>,
    } else {
    }
    return
  }
  func.func @transform_0(%arg0: i32, %arg1: i32, %arg2: i32) -> (i32, i32, i32, i32, i32) {
    %0 = arith.addi %arg1, %arg2 : i32
    %c0_i32 = arith.constant 0 : i32
    %c0_i32_0 = arith.constant 0 : i32
    %c0_i32_1 = arith.constant 0 : i32
    %c0_i32_2 = arith.constant 0 : i32
    return %arg0, %c0_i32, %0, %c0_i32_0, %c0_i32_1 : i32, i32, i32, i32, i32
  }
  func.func @transform_1(%arg0: i32, %arg1: i32, %arg2: i32) -> (i32, i32, i32, i32, i32, i32) {
    %c0_i32 = arith.constant 0 : i32
    %c0_i32_0 = arith.constant 0 : i32
    %c0_i32_1 = arith.constant 0 : i32
    %c0_i32_2 = arith.constant 0 : i32
    %c0_i32_3 = arith.constant 0 : i32
    %c0_i32_4 = arith.constant 0 : i32
    return %arg2, %c0_i32, %c0_i32_0, %c0_i32_1, %c0_i32_2, %c0_i32_3 : i32, i32, i32, i32, i32, i32
  }
  func.func @transform_2(%arg0: i32, %arg1: i32, %arg2: i32) -> (i32, i32) {
    %c0_i32 = arith.constant 0 : i32
    %c0_i32_0 = arith.constant 0 : i32
    %c0_i32_1 = arith.constant 0 : i32
    return %c0_i32, %c0_i32_0 : i32, i32
  }
  func.func @transform_3(%arg0: i32, %arg1: i32, %arg2: i32) -> (i32, i32, i32) {
    %c0_i32 = arith.constant 0 : i32
    %c0_i32_0 = arith.constant 0 : i32
    %c0_i32_1 = arith.constant 0 : i32
    %c0_i32_2 = arith.constant 0 : i32
    return %c0_i32, %c0_i32_0, %c0_i32_1 : i32, i32, i32
  }
  func.func @transform_4(%arg0: i32, %arg1: i32, %arg2: i32) -> (i32, i32, i32, i32) {
    %c0_i32 = arith.constant 0 : i32
    %c0_i32_0 = arith.constant 0 : i32
    %c0_i32_1 = arith.constant 0 : i32
    return %arg0, %c0_i32, %arg1, %c0_i32_0 : i32, i32, i32, i32
  }
}

</mosaic_0001>

<llo_original>
// kernel: tpu_custom_call.1
$region0: #{tpu_custom_call.1}
  #allocation0 [shape = 'u32[]', space=smem, size = 0x4, offset = 0x4, fixed_abs, tag = 'smem constant byte address 0x4 - core index']
  #allocation1 [shape = 'u32[144,128]{1,0:T(1,128)}', space=vmem, size = 0x12000, scoped, tag = 'internal scratch']
  #allocation2 [shape = 'f32[8,16,8]{2,1,0:T(8,128)}', space=vmem, size = 0x10000, scoped, tag = 'scratch operand']
  %s0 = inlined_call_operand.vmem [shape: f32[2,4,2,8,32], index: 0, kind: input, shape index: {}]
  %s1 = inlined_call_operand.vmem [shape: f32[1,4,4,8,1,1], index: 1, kind: input, shape index: {}]
  %s2 = inlined_call_operand.vmem [shape: f32[16,16], index: 2, kind: input, shape index: {}]
  %s3 = inlined_call_operand.vmem [shape: f32[8,1,1], index: 3, kind: input, shape index: {}]
  %s4 = inlined_call_operand.vmem [shape: f32[2,8,16,8], index: 4, kind: output, shape index: {}]
  %s5 = sld [smem:[#allocation0]]
  $region57: #{tpu_custom_call.1} parent=0
    _
  %s7 = ssub.s32 1, %s5
  %s8 = scalar_select 0, %s7, %s5
  loop: start=0, step=1, limit=4
  $region2: #{tpu_custom_call.1} parent=0 // loop_pre_header
    _
  $region3: #{tpu_custom_call.1} parent=0 // loop_header
    %s10 = sphi 0, %s14
    %p11 = scmp.ge.s32.totalorder %s10, 4
    %s17 = sphi 0, %s36
    %s18 = sphi 0, %s32
    %s19 = sphi 0, %s28
    %s20 = sphi 0, %s17
    %s21 = sphi 0, %s18
    %s22 = sphi 0, %s19
    %s23 = sphi 0, %s20
    %s24 = sphi 0, %s21
    %s25 = sphi 0, %s22
    %s43 = sphi 0, %s45
    %s46 = sphi 0, %s43
    %s47 = sphi 0, %s46
    %s63 = sphi 0, %s47
    %s69 = sphi 0, %s71
    %s72 = sphi 0, %s69
    %s73 = sphi 0, %s72
    %s89 = sphi 0, %s73
    %s93 = sphi 0, %s93
    %s95 = sphi 0, %s93
    %s96 = sphi 0, %s95
    %s110 = sphi 0, %s96
    %s114 = sphi 0, %s114
    %s116 = sphi 0, %s114
    %s117 = sphi 0, %s116
    %s131 = sphi 0, %s117
    %s139 = sphi 0, %s141
    %s142 = sphi 0, %s139
    %s143 = sphi 0, %s142
    %s159 = sphi 0, %s143
  $region4: #{tpu_custom_call.1} parent=0 // loop_header_branch
    %13 = sbr.rel (%p11) target = $region8
  $region5: #{tpu_custom_call.1} parent=0 // loop_body
    %s15 = ssub.s32 %s10, 1
    %s16 = ssub.s32 %s10, 2
    %s26 = sadd.s32 1, %s19
    %p27 = scmp.ge.s32.totalorder %s26, 1
    %s28 = scalar_select %p27, 0, %s26
    %s29 = sadd.s32 1, %s18
    %s30 = scalar_select %p27, %s29, %s18
    %p31 = scmp.ge.s32.totalorder %s30, 1
    %s32 = scalar_select %p31, 0, %s30
    %s33 = sadd.s32 1, %s17
    %s34 = scalar_select %p31, %s33, %s17
    %p35 = scmp.ge.s32.totalorder %s34, 2
    %s36 = scalar_select %p35, 0, %s34
    %s37 = sadd.s32 %s18, %s19
    %s38 = sadd.s32 %s32, %s28
    %s39 = ssub.s32 %s17, %s36
    %s40 = ssub.s32 %s37, %s38
    %s41 = sor.u32 %s39, %s40
    %p42 = scmp.eq.s32.totalorder %s41, 0
    %s44 = sadd.s32 %s43, 1
    %s45 = scalar_select %p42, %s43, %s44
    %p48 = pneg %p42
    %p49 = scmp.eq.s32.totalorder %s10, 1
    %p50 = por %p48, %p49
    %p51 = scmp.ne.s32.totalorder %s43, %s46
    %p52 = scmp.eq.s32.totalorder %s10, 0
    %p53 = por %p51, %p52
    %p54 = scmp.ne.s32.totalorder %s43, %s46
    %p55 = scmp.eq.s32.totalorder %s15, 1
    %p56 = por %p54, %p55
    %p57 = scmp.ne.s32.totalorder %s46, %s47
    %p58 = scmp.eq.s32.totalorder %s15, 0
    %p59 = por %p57, %p58
    %p60 = scmp.ne.s32.totalorder %s46, %s47
    %p61 = scmp.eq.s32.totalorder %s16, 1
    %p62 = por %p60, %p61
    %p64 = scmp.ne.s32.totalorder %s47, %s63
    %p65 = scmp.eq.s32.totalorder %s16, 0
    %p66 = por %p64, %p65
    %s67 = ssub.s32 %s19, %s28
    %p68 = scmp.eq.s32.totalorder %s67, 0
    %s70 = sadd.s32 %s69, 1
    %s71 = scalar_select %p68, %s69, %s70
    %p74 = pneg %p68
    %p75 = scmp.eq.s32.totalorder %s10, 1
    %p76 = por %p74, %p75
    %p77 = scmp.ne.s32.totalorder %s69, %s72
    %p78 = scmp.eq.s32.totalorder %s10, 0
    %p79 = por %p77, %p78
    %p80 = scmp.ne.s32.totalorder %s69, %s72
    %p81 = scmp.eq.s32.totalorder %s15, 1
    %p82 = por %p80, %p81
    %p83 = scmp.ne.s32.totalorder %s72, %s73
    %p84 = scmp.eq.s32.totalorder %s15, 0
    %p85 = por %p83, %p84
    %p86 = scmp.ne.s32.totalorder %s72, %s73
    %p87 = scmp.eq.s32.totalorder %s16, 1
    %p88 = por %p86, %p87
    %p90 = scmp.ne.s32.totalorder %s73, %s89
    %p91 = scmp.eq.s32.totalorder %s16, 0
    %p92 = por %p90, %p91
    %s94 = sadd.s32 %s93, 1
    %p97 = scmp.eq.s32.totalorder %s10, 1
    %p98 = scmp.ne.s32.totalorder %s93, %s95
    %p99 = scmp.eq.s32.totalorder %s10, 0
    %p100 = por %p98, %p99
    %p101 = scmp.ne.s32.totalorder %s93, %s95
    %p102 = scmp.eq.s32.totalorder %s15, 1
    %p103 = por %p101, %p102
    %p104 = scmp.ne.s32.totalorder %s95, %s96
    %p105 = scmp.eq.s32.totalorder %s15, 0
    %p106 = por %p104, %p105
    %p107 = scmp.ne.s32.totalorder %s95, %s96
    %p108 = scmp.eq.s32.totalorder %s16, 1
    %p109 = por %p107, %p108
    %p111 = scmp.ne.s32.totalorder %s96, %s110
    %p112 = scmp.eq.s32.totalorder %s16, 0
    %p113 = por %p111, %p112
    %s115 = sadd.s32 %s114, 1
    %p118 = scmp.eq.s32.totalorder %s10, 1
    %p119 = scmp.ne.s32.totalorder %s114, %s116
    %p120 = scmp.eq.s32.totalorder %s10, 0
    %p121 = por %p119, %p120
    %p122 = scmp.ne.s32.totalorder %s114, %s116
    %p123 = scmp.eq.s32.totalorder %s15, 1
    %p124 = por %p122, %p123
    %p125 = scmp.ne.s32.totalorder %s116, %s117
    %p126 = scmp.eq.s32.totalorder %s15, 0
    %p127 = por %p125, %p126
    %p128 = scmp.ne.s32.totalorder %s116, %s117
    %p129 = scmp.eq.s32.totalorder %s16, 1
    %p130 = por %p128, %p129
    %p132 = scmp.ne.s32.totalorder %s117, %s131
    %p133 = scmp.eq.s32.totalorder %s16, 0
    %p134 = por %p132, %p133
    %s135 = ssub.s32 %s17, %s36
    %s136 = ssub.s32 %s18, %s32
    %s137 = sor.u32 %s135, %s136
    %p138 = scmp.eq.s32.totalorder %s137, 0
    %s140 = sadd.s32 %s139, 1
    %s141 = scalar_select %p138, %s139, %s140
    %p144 = pneg %p138
    %p145 = scmp.eq.s32.totalorder %s10, 1
    %p146 = por %p144, %p145
    %p147 = scmp.ne.s32.totalorder %s139, %s142
    %p148 = scmp.eq.s32.totalorder %s10, 0
    %p149 = por %p147, %p148
    %p150 = scmp.ne.s32.totalorder %s139, %s142
    %p151 = scmp.eq.s32.totalorder %s15, 1
    %p152 = por %p150, %p151
    %p153 = scmp.ne.s32.totalorder %s142, %s143
    %p154 = scmp.eq.s32.totalorder %s15, 0
    %p155 = por %p153, %p154
    %p156 = scmp.ne.s32.totalorder %s142, %s143
    %p157 = scmp.eq.s32.totalorder %s16, 1
    %p158 = por %p156, %p157
    %p160 = scmp.ne.s32.totalorder %s143, %s159
    %p161 = scmp.eq.s32.totalorder %s16, 0
    %p162 = por %p160, %p161
    %p163 = scmp.le.s32.totalorder 1, %s10
    %p164 = scmp.lt.s32.totalorder %s10, 3
    %p165 = pnand %p163, %p164
    %p166 = pneg %p165
    // Predicated region
    $region9: #{tpu_custom_call.1} parent=5 // pred_check
      _
    $region10: #{tpu_custom_call.1} parent=5 // pred_check_branch
      %168 = sbr.rel (%p165) target = $region12
    $region11: #{tpu_custom_call.1} parent=5 // pred_region
      %s169 = ssub.s32 %s10, 1
      // Predicated region
      $region13: #{tpu_custom_call.1} parent=11 // pred_check
        %p170 = pneg %p85
      $region14: #{tpu_custom_call.1} parent=11 // pred_check_branch
        %172 = sbr.rel (%p170) target = $region16
      $region15: #{tpu_custom_call.1} parent=11 // pred_region
        %p173 = scmp.lt.s32.totalorder %s22, 0
        %s174 = scalar_select %p173, %s22, 0
        %s175 = smul.addr %s174, 128
        %s176 = scalar_lea.vmem %s1, %s175
      $region16: #{tpu_custom_call.1} parent=11 // pred_fallthru
        _
      // Predicated region
      $region17: #{tpu_custom_call.1} parent=11 // pred_check
        %p177 = pneg %p106
      $region18: #{tpu_custom_call.1} parent=11 // pred_check_branch
        %179 = sbr.rel (%p177) target = $region20
      $region19: #{tpu_custom_call.1} parent=11 // pred_region
        _
      $region20: #{tpu_custom_call.1} parent=11 // pred_fallthru
        _
      // Predicated region
      $region21: #{tpu_custom_call.1} parent=11 // pred_check
        %p180 = pneg %p127
      $region22: #{tpu_custom_call.1} parent=11 // pred_check_branch
        %182 = sbr.rel (%p180) target = $region24
      $region23: #{tpu_custom_call.1} parent=11 // pred_region
        _
      $region24: #{tpu_custom_call.1} parent=11 // pred_fallthru
        _
    $region12: #{tpu_custom_call.1} parent=5 // pred_fallthru
      _
    %p183 = scmp.lt.s32.totalorder %s10, 2
    // Predicated region
    $region25: #{tpu_custom_call.1} parent=5 // pred_check
      %p184 = pneg %p183
    $region26: #{tpu_custom_call.1} parent=5 // pred_check_branch
      %186 = sbr.rel (%p184) target = $region28
    $region27: #{tpu_custom_call.1} parent=5 // pred_region
      // Predicated region
      $region29: #{tpu_custom_call.1} parent=27 // pred_check
        %p187 = pneg %p53
      $region30: #{tpu_custom_call.1} parent=27 // pred_check_branch
        %189 = sbr.rel (%p187) target = $region32
      $region31: #{tpu_custom_call.1} parent=27 // pred_region
        %s190 = sadd.s32 %s18, %s19
        %s191 = smul.u32 2, %s190
        %p192 = scmp.lt.s32.totalorder %s17, 1
        %s193 = scalar_select %p192, %s17, 1
        %p194 = scmp.lt.s32.totalorder %s191, 1
        %s195 = scalar_select %p194, %s191, 1
        %s196 = smul.addr %s193, 8
        %s197 = sadd.s32 %s195, %s196
        %s198 = smul.addr %s197, 8
        %s199 = scalar_lea.vmem %s0, %s198
        %s200 = sadd.s32 %s18, %s19
        %s201 = smul.u32 2, %s200
      $region32: #{tpu_custom_call.1} parent=27 // pred_fallthru
        _
    $region28: #{tpu_custom_call.1} parent=5 // pred_fallthru
      _
    %p202 = scmp.le.s32.totalorder 1, %s10
    %p203 = scmp.lt.s32.totalorder %s10, 3
    %p204 = pnand %p202, %p203
    %p205 = pneg %p204
    // Predicated region
    $region33: #{tpu_custom_call.1} parent=5 // pred_check
      _
    $region34: #{tpu_custom_call.1} parent=5 // pred_check_branch
      %207 = sbr.rel (%p204) target = $region36
    $region35: #{tpu_custom_call.1} parent=5 // pred_region
      %s208 = ssub.s32 %s10, 1
      %s209 = sadd.s32 %s21, %s22
      %s210 = smul.u32 2, %s209
      %p211 = scmp.lt.s32.totalorder %s20, 1
      %s212 = scalar_select %p211, %s20, 1
      %p213 = scmp.lt.s32.totalorder %s210, 1
      %s214 = scalar_select %p213, %s210, 1
      %s215 = smul.addr %s212, 8
      %s216 = sadd.s32 %s214, %s215
      %s217 = smul.addr %s216, 8
      %s218 = scalar_lea.vmem %s0, %s217
      %p219 = pneg %p59
      %p220 = pneg %p56
      %p221 = scmp.lt.s32.totalorder %s22, 0
      %s222 = scalar_select %p221, %s22, 0
      %s223 = smul.addr %s222, 128
      %s224 = scalar_lea.vmem %s1, %s223
      %p225 = pneg %p85
      %p226 = pneg %p82
      %p227 = pneg %p106
      %p228 = pneg %p103
      %p229 = pneg %p127
      %p230 = pneg %p124
      %p231 = pneg %p155
      %p232 = pneg %p152
      %s233 = smul.u32 2, %s21
      %p234 = scmp.lt.s32.totalorder %s20, 1
      %s235 = scalar_select %p234, %s20, 1
      %p236 = scmp.lt.s32.totalorder %s233, 1
      %s237 = scalar_select %p236, %s233, 1
      %s238 = smul.addr %s235, 16
      %s239 = sadd.s32 %s237, %s238
      %s240 = smul.addr %s239, 8
      %s241 = scalar_lea.vmem %s4, %s240
      %s242 = sadd.s32 %s21, %s22
      %s243 = smul.u32 2, %s242
      %p244 = scmp.lt.s32.totalorder %s20, 1
      %s245 = scalar_select %p244, %s20, 1
      %p246 = scmp.lt.s32.totalorder %s243, 1
      %s247 = scalar_select %p246, %s243, 1
      %s248 = smul.addr %s245, 8
      %s249 = sadd.s32 %s247, %s248
      %s250 = smul.addr %s249, 8
      %s251 = scalar_lea.vmem %s0, %s250
      %s252 = sadd.s32 %s21, %s22
      %s253 = smul.u32 2, %s252
      %p254 = scmp.lt.s32.totalorder %s22, 0
      %s255 = scalar_select %p254, %s22, 0
      %s256 = smul.addr %s255, 128
      %s257 = scalar_lea.vmem %s1, %s256
      %s258 = smul.u32 2, %s21
      %p259 = scmp.lt.s32.totalorder %s20, 1
      %s260 = scalar_select %p259, %s20, 1
      %p261 = scmp.lt.s32.totalorder %s258, 1
      %s262 = scalar_select %p261, %s258, 1
      %s263 = smul.addr %s260, 16
      %s264 = sadd.s32 %s262, %s263
      %s265 = smul.addr %s264, 8
      %s266 = scalar_lea.vmem %s4, %s265
      %s267 = smul.u32 2, %s21
      %p268 = scmp.eq.s32.totalorder %s22, 0
      // Predicated region
      $region37: #{tpu_custom_call.1} parent=35 // pred_check
        %p269 = pneg %p268
      $region38: #{tpu_custom_call.1} parent=35 // pred_check_branch
        %271 = sbr.rel (%p269) target = $region40
      $region39: #{tpu_custom_call.1} parent=35 // pred_region
        %vm272 = vcmask 64512
        %273 = vst.msk [vmem:[#allocation2] sm:$0xff] %vm272, 0.0
        %274 = vst.msk [vmem:[#allocation2 + $0x8] sm:$0xff] %vm272, 0.0
        %275 = vst.msk [vmem:[#allocation2 + $0x10] sm:$0xff] %vm272, 0.0
        %276 = vst.msk [vmem:[#allocation2 + $0x18] sm:$0xff] %vm272, 0.0
        %277 = vst.msk [vmem:[#allocation2 + $0x20] sm:$0xff] %vm272, 0.0
        %278 = vst.msk [vmem:[#allocation2 + $0x28] sm:$0xff] %vm272, 0.0
        %279 = vst.msk [vmem:[#allocation2 + $0x30] sm:$0xff] %vm272, 0.0
        %280 = vst.msk [vmem:[#allocation2 + $0x38] sm:$0xff] %vm272, 0.0
        %281 = vst.msk [vmem:[#allocation2 + $0x40] sm:$0xff] %vm272, 0.0
        %282 = vst.msk [vmem:[#allocation2 + $0x48] sm:$0xff] %vm272, 0.0
        %283 = vst.msk [vmem:[#allocation2 + $0x50] sm:$0xff] %vm272, 0.0
        %284 = vst.msk [vmem:[#allocation2 + $0x58] sm:$0xff] %vm272, 0.0
        %285 = vst.msk [vmem:[#allocation2 + $0x60] sm:$0xff] %vm272, 0.0
        %286 = vst.msk [vmem:[#allocation2 + $0x68] sm:$0xff] %vm272, 0.0
        %287 = vst.msk [vmem:[#allocation2 + $0x70] sm:$0xff] %vm272, 0.0
        %288 = vst.msk [vmem:[#allocation2 + $0x78] sm:$0xff] %vm272, 0.0
      $region40: #{tpu_custom_call.1} parent=35 // pred_fallthru
        _
      %v289 = vld [vmem:[%s251] sm:$0xff]
      %v290 = vld [vmem:[%s251 + $0x8] sm:$0xff]
      %v291 = vld [vmem:[%s251 + $0x10] sm:$0xff]
      %v292 = vld [vmem:[%s251 + $0x18] sm:$0xff]
      %v293 = vld [vmem:[%s251 + $0x20] sm:$0xff]
      %v294 = vld [vmem:[%s251 + $0x28] sm:$0xff]
      %v295 = vld [vmem:[%s251 + $0x30] sm:$0xff]
      %v296 = vld [vmem:[%s251 + $0x38] sm:$0xff]
      %v297 = vld [vmem:[%s2] sm:$0xff]
      %v298 = vld [vmem:[%s2 + $0x8] sm:$0xff]
      %vm299 = vcmask 130048
      %v301 = vsel %vm299, %v289, 0
      %v304 = vsel %vm299, %v290, 0
      %v307 = vsel %vm299, %v291, 0
      %v310 = vsel %vm299, %v292, 0
      %v313 = vsel %vm299, %v293, 0
      %v316 = vsel %vm299, %v294, 0
      %v319 = vsel %vm299, %v295, 0
      %v322 = vsel %vm299, %v296, 0
      %324 = vmatprep.subr.mxu0 0.0
      %325 = vmatpush1.msra.mxu0 0.0
      %326 = vmatprep.subr.mxu0 0.0
      %327 = vmatpush1.msra.mxu0 0.0
      %328 = vmatprep.subr.mxu0 0.0
      %329 = vmatpush1.msra.mxu0 0.0
      %330 = vmatprep.subr.mxu0 0.0
      %331 = vmatpush1.msra.mxu0 0.0
      %332 = vmatprep.subr.mxu0 0.0
      %333 = vmatpush1.msra.mxu0 0.0
      %334 = vmatprep.subr.mxu0 0.0
      %335 = vmatpush1.msra.mxu0 0.0
      %336 = vmatprep.subr.mxu0 0.0
      %337 = vmatpush1.msra.mxu0 0.0
      %338 = vmatprep.subr.mxu0 0.0
      %339 = vmatpush1.msra.mxu0 0.0
      %340 = vmatprep.subr.mxu0 0.0
      %341 = vmatpush1.msra.mxu0 0.0
      %342 = vmatprep.subr.mxu0 0.0
      %343 = vmatpush1.msra.mxu0 0.0
      %344 = vmatprep.subr.mxu0 0.0
      %345 = vmatpush1.msra.mxu0 0.0
      %346 = vmatprep.subr.mxu0 0.0
      %347 = vmatpush1.msra.mxu0 0.0
      %348 = vmatprep.subr.mxu0 0.0
      %349 = vmatpush1.msra.mxu0 0.0
      %350 = vmatprep.subr.mxu0 0.0
      %351 = vmatpush1.msra.mxu0 0.0
      %352 = vmatprep.subr.mxu0 0.0
      %v353 = vand.u32 %v298, 4294901760
      %354 = vmatpush1.msra.mxu0 %v353
      %355 = vmatprep.subr.mxu0 0.0
      %v356 = vand.u32 %v297, 4294901760
      %357 = vmatpush1.msra.mxu0 %v356
      %358 = vmatprep.subr.mxu0 0.0
      %359 = vmatpush2.msra.mxu0 0.0
      %360 = vmatprep.subr.mxu0 0.0
      %361 = vmatpush2.msra.mxu0 0.0
      %362 = vmatprep.subr.mxu0 0.0
      %363 = vmatpush2.msra.mxu0 0.0
      %364 = vmatprep.subr.mxu0 0.0
      %365 = vmatpush2.msra.mxu0 0.0
      %366 = vmatprep.subr.mxu0 0.0
      %367 = vmatpush2.msra.mxu0 0.0
      %368 = vmatprep.subr.mxu0 0.0
      %369 = vmatpush2.msra.mxu0 0.0
      %370 = vmatprep.subr.mxu0 0.0
      %371 = vmatpush2.msra.mxu0 0.0
      %372 = vmatprep.subr.mxu0 0.0
      %373 = vmatpush2.msra.mxu0 0.0
      %374 = vmatprep.subr.mxu0 0.0
      %375 = vmatpush2.msra.mxu0 0.0
      %376 = vmatprep.subr.mxu0 0.0
      %377 = vmatpush2.msra.mxu0 0.0
      %378 = vmatprep.subr.mxu0 0.0
      %379 = vmatpush2.msra.mxu0 0.0
      %380 = vmatprep.subr.mxu0 0.0
      %381 = vmatpush2.msra.mxu0 0.0
      %382 = vmatprep.subr.mxu0 0.0
      %383 = vmatpush2.msra.mxu0 0.0
      %384 = vmatprep.subr.mxu0 0.0
      %385 = vmatpush2.msra.mxu0 0.0
      %386 = vmatprep.subr.mxu0 0.0
      %387 = vmatpush2.msra.mxu0 0.0
      %388 = vmatprep.subr.mxu0 0.0
      %389 = vmatpush2.msra.mxu0 0.0
      %390 = vmatprep.mubr.f32.mxu0 0.0
      %v391 = vand.u32 %v301, 4294901760
      %v392 = vsub.f32 %v301, %v391
      %v393 = vand.u32 %v392, 4294901760
      %v394 = vsub.f32 %v392, %v393
      %v395 = vand.u32 %v394, 4294901760
      %396 = vmatmul.mubr.f32.gmra.mxu0 %v395
      %v397 = vpop.f32.mrf.mxu0
      %v398 = vadd.f32 0.0, %v397
      %v399 = vpop.f32.mrf.mxu0
      %400 = vmatprep.mubr.f32.mxu0 0.0
      %v401 = vand.u32 %v304, 4294901760
      %v402 = vsub.f32 %v304, %v401
      %v403 = vand.u32 %v402, 4294901760
      %v404 = vsub.f32 %v402, %v403
      %v405 = vand.u32 %v404, 4294901760
      %406 = vmatmul.mubr.f32.gmra.mxu0 %v405
      %v407 = vpop.f32.mrf.mxu0
      %v408 = vadd.f32 0.0, %v407
      %v409 = vpop.f32.mrf.mxu0
      %410 = vmatprep.mubr.f32.mxu0 0.0
      %v411 = vand.u32 %v307, 4294901760
      %v412 = vsub.f32 %v307, %v411
      %v413 = vand.u32 %v412, 4294901760
      %v414 = vsub.f32 %v412, %v413
      %v415 = vand.u32 %v414, 4294901760
      %416 = vmatmul.mubr.f32.gmra.mxu0 %v415
      %v417 = vpop.f32.mrf.mxu0
      %v418 = vadd.f32 0.0, %v417
      %v419 = vpop.f32.mrf.mxu0
      %420 = vmatprep.mubr.f32.mxu0 0.0
      %v421 = vand.u32 %v310, 4294901760
      %v422 = vsub.f32 %v310, %v421
      %v423 = vand.u32 %v422, 4294901760
      %v424 = vsub.f32 %v422, %v423
      %v425 = vand.u32 %v424, 4294901760
      %426 = vmatmul.mubr.f32.gmra.mxu0 %v425
      %v427 = vpop.f32.mrf.mxu0
      %v428 = vadd.f32 0.0, %v427
      %v429 = vpop.f32.mrf.mxu0
      %430 = vmatprep.mubr.f32.mxu0 0.0
      %v431 = vand.u32 %v313, 4294901760
      %v432 = vsub.f32 %v313, %v431
      %v433 = vand.u32 %v432, 4294901760
      %v434 = vsub.f32 %v432, %v433
      %v435 = vand.u32 %v434, 4294901760
      %436 = vmatmul.mubr.f32.gmra.mxu0 %v435
      %v437 = vpop.f32.mrf.mxu0
      %v438 = vadd.f32 0.0, %v437
      %v439 = vpop.f32.mrf.mxu0
      %440 = vmatprep.mubr.f32.mxu0 0.0
      %v441 = vand.u32 %v316, 4294901760
      %v442 = vsub.f32 %v316, %v441
      %v443 = vand.u32 %v442, 4294901760
      %v444 = vsub.f32 %v442, %v443
      %v445 = vand.u32 %v444, 4294901760
      %446 = vmatmul.mubr.f32.gmra.mxu0 %v445
      %v447 = vpop.f32.mrf.mxu0
      %v448 = vadd.f32 0.0, %v447
      %v449 = vpop.f32.mrf.mxu0
      %450 = vmatprep.mubr.f32.mxu0 0.0
      %v451 = vand.u32 %v319, 4294901760
      %v452 = vsub.f32 %v319, %v451
      %v453 = vand.u32 %v452, 4294901760
      %v454 = vsub.f32 %v452, %v453
      %v455 = vand.u32 %v454, 4294901760
      %456 = vmatmul.mubr.f32.gmra.mxu0 %v455
      %v457 = vpop.f32.mrf.mxu0
      %v458 = vadd.f32 0.0, %v457
      %v459 = vpop.f32.mrf.mxu0
      %460 = vmatprep.mubr.f32.mxu0 0.0
      %v461 = vand.u32 %v322, 4294901760
      %v462 = vsub.f32 %v322, %v461
      %v463 = vand.u32 %v462, 4294901760
      %v464 = vsub.f32 %v462, %v463
      %v465 = vand.u32 %v464, 4294901760
      %466 = vmatmul.mubr.f32.gmra.mxu0 %v465
      %v467 = vpop.f32.mrf.mxu0
      %v468 = vadd.f32 0.0, %v467
      %v469 = vpop.f32.mrf.mxu0
      %470 = vdwg.mxu0
      %471 = vmatprep.subr.mxu0 0.0
      %472 = vmatpush1.msra.mxu0 0.0
      %473 = vmatprep.subr.mxu0 0.0
      %474 = vmatpush1.msra.mxu0 0.0
      %475 = vmatprep.subr.mxu0 0.0
      %476 = vmatpush1.msra.mxu0 0.0
      %477 = vmatprep.subr.mxu0 0.0
      %478 = vmatpush1.msra.mxu0 0.0
      %479 = vmatprep.subr.mxu0 0.0
      %480 = vmatpush1.msra.mxu0 0.0
      %481 = vmatprep.subr.mxu0 0.0
      %482 = vmatpush1.msra.mxu0 0.0
      %483 = vmatprep.subr.mxu0 0.0
      %484 = vmatpush1.msra.mxu0 0.0
      %485 = vmatprep.subr.mxu0 0.0
      %486 = vmatpush1.msra.mxu0 0.0
      %487 = vmatprep.subr.mxu0 0.0
      %488 = vmatpush1.msra.mxu0 0.0
      %489 = vmatprep.subr.mxu0 0.0
      %490 = vmatpush1.msra.mxu0 0.0
      %491 = vmatprep.subr.mxu0 0.0
      %492 = vmatpush1.msra.mxu0 0.0
      %493 = vmatprep.subr.mxu0 0.0
      %494 = vmatpush1.msra.mxu0 0.0
      %495 = vmatprep.subr.mxu0 0.0
      %496 = vmatpush1.msra.mxu0 0.0
      %497 = vmatprep.subr.mxu0 0.0
      %498 = vmatpush1.msra.mxu0 0.0
      %499 = vmatprep.subr.mxu0 0.0
      %v500 = vand.u32 %v298, 4294901760
      %v501 = vsub.f32 %v298, %v500
      %v502 = vand.u32 %v501, 4294901760
      %v503 = vsub.f32 %v501, %v502
      %v504 = vand.u32 %v503, 4294901760
      %505 = vmatpush1.msra.mxu0 %v504
      %506 = vmatprep.subr.mxu0 0.0
      %v507 = vand.u32 %v297, 4294901760
      %v508 = vsub.f32 %v297, %v507
      %v509 = vand.u32 %v508, 4294901760
      %v510 = vsub.f32 %v508, %v509
      %v511 = vand.u32 %v510, 4294901760
      %512 = vmatpush1.msra.mxu0 %v511
      %513 = vmatprep.subr.mxu0 0.0
      %514 = vmatpush2.msra.mxu0 0.0
      %515 = vmatprep.subr.mxu0 0.0
      %516 = vmatpush2.msra.mxu0 0.0
      %517 = vmatprep.subr.mxu0 0.0
      %518 = vmatpush2.msra.mxu0 0.0
      %519 = vmatprep.subr.mxu0 0.0
      %520 = vmatpush2.msra.mxu0 0.0
      %521 = vmatprep.subr.mxu0 0.0
      %522 = vmatpush2.msra.mxu0 0.0
      %523 = vmatprep.subr.mxu0 0.0
      %524 = vmatpush2.msra.mxu0 0.0
      %525 = vmatprep.subr.mxu0 0.0
      %526 = vmatpush2.msra.mxu0 0.0
      %527 = vmatprep.subr.mxu0 0.0
      %528 = vmatpush2.msra.mxu0 0.0
      %529 = vmatprep.subr.mxu0 0.0
      %530 = vmatpush2.msra.mxu0 0.0
      %531 = vmatprep.subr.mxu0 0.0
      %532 = vmatpush2.msra.mxu0 0.0
      %533 = vmatprep.subr.mxu0 0.0
      %534 = vmatpush2.msra.mxu0 0.0
      %535 = vmatprep.subr.mxu0 0.0
      %536 = vmatpush2.msra.mxu0 0.0
      %537 = vmatprep.subr.mxu0 0.0
      %538 = vmatpush2.msra.mxu0 0.0
      %539 = vmatprep.subr.mxu0 0.0
      %540 = vmatpush2.msra.mxu0 0.0
      %541 = vmatprep.subr.mxu0 0.0
      %542 = vmatpush2.msra.mxu0 0.0
      %543 = vmatprep.subr.mxu0 0.0
      %544 = vmatpush2.msra.mxu0 0.0
      %545 = vmatprep.mubr.f32.mxu0 0.0
      %v546 = vand.u32 %v301, 4294901760
      %547 = vmatmul.mubr.f32.gmra.mxu0 %v546
      %v548 = vpop.f32.mrf.mxu0
      %v549 = vadd.f32 %v398, %v548
      %v550 = vpop.f32.mrf.mxu0
      %551 = vmatprep.mubr.f32.mxu0 0.0
      %v552 = vand.u32 %v304, 4294901760
      %553 = vmatmul.mubr.f32.gmra.mxu0 %v552
      %v554 = vpop.f32.mrf.mxu0
      %v555 = vadd.f32 %v408, %v554
      %v556 = vpop.f32.mrf.mxu0
      %557 = vmatprep.mubr.f32.mxu0 0.0
      %v558 = vand.u32 %v307, 4294901760
      %559 = vmatmul.mubr.f32.gmra.mxu0 %v558
      %v560 = vpop.f32.mrf.mxu0
      %v561 = vadd.f32 %v418, %v560
      %v562 = vpop.f32.mrf.mxu0
      %563 = vmatprep.mubr.f32.mxu0 0.0
      %v564 = vand.u32 %v310, 4294901760
      %565 = vmatmul.mubr.f32.gmra.mxu0 %v564
      %v566 = vpop.f32.mrf.mxu0
      %v567 = vadd.f32 %v428, %v566
      %v568 = vpop.f32.mrf.mxu0
      %569 = vmatprep.mubr.f32.mxu0 0.0
      %v570 = vand.u32 %v313, 4294901760
      %571 = vmatmul.mubr.f32.gmra.mxu0 %v570
      %v572 = vpop.f32.mrf.mxu0
      %v573 = vadd.f32 %v438, %v572
      %v574 = vpop.f32.mrf.mxu0
      %575 = vmatprep.mubr.f32.mxu0 0.0
      %v576 = vand.u32 %v316, 4294901760
      %577 = vmatmul.mubr.f32.gmra.mxu0 %v576
      %v578 = vpop.f32.mrf.mxu0
      %v579 = vadd.f32 %v448, %v578
      %v580 = vpop.f32.mrf.mxu0
      %581 = vmatprep.mubr.f32.mxu0 0.0
      %v582 = vand.u32 %v319, 4294901760
      %583 = vmatmul.mubr.f32.gmra.mxu0 %v582
      %v584 = vpop.f32.mrf.mxu0
      %v585 = vadd.f32 %v458, %v584
      %v586 = vpop.f32.mrf.mxu0
      %587 = vmatprep.mubr.f32.mxu0 0.0
      %v588 = vand.u32 %v322, 4294901760
      %589 = vmatmul.mubr.f32.gmra.mxu0 %v588
      %v590 = vpop.f32.mrf.mxu0
      %v591 = vadd.f32 %v468, %v590
      %v592 = vpop.f32.mrf.mxu0
      %593 = vdwg.mxu0
      %594 = vmatprep.subr.mxu0 0.0
      %595 = vmatpush1.msra.mxu0 0.0
      %596 = vmatprep.subr.mxu0 0.0
      %597 = vmatpush1.msra.mxu0 0.0
      %598 = vmatprep.subr.mxu0 0.0
      %599 = vmatpush1.msra.mxu0 0.0
      %600 = vmatprep.subr.mxu0 0.0
      %601 = vmatpush1.msra.mxu0 0.0
      %602 = vmatprep.subr.mxu0 0.0
      %603 = vmatpush1.msra.mxu0 0.0
      %604 = vmatprep.subr.mxu0 0.0
      %605 = vmatpush1.msra.mxu0 0.0
      %606 = vmatprep.subr.mxu0 0.0
      %607 = vmatpush1.msra.mxu0 0.0
      %608 = vmatprep.subr.mxu0 0.0
      %609 = vmatpush1.msra.mxu0 0.0
      %610 = vmatprep.subr.mxu0 0.0
      %611 = vmatpush1.msra.mxu0 0.0
      %612 = vmatprep.subr.mxu0 0.0
      %613 = vmatpush1.msra.mxu0 0.0
      %614 = vmatprep.subr.mxu0 0.0
      %615 = vmatpush1.msra.mxu0 0.0
      %616 = vmatprep.subr.mxu0 0.0
      %617 = vmatpush1.msra.mxu0 0.0
      %618 = vmatprep.subr.mxu0 0.0
      %619 = vmatpush1.msra.mxu0 0.0
      %620 = vmatprep.subr.mxu0 0.0
      %621 = vmatpush1.msra.mxu0 0.0
      %622 = vmatprep.subr.mxu0 0.0
      %v623 = vand.u32 %v298, 4294901760
      %v624 = vsub.f32 %v298, %v623
      %625 = vmatpush1.msra.mxu0 %v624
      %626 = vmatprep.subr.mxu0 0.0
      %v627 = vand.u32 %v297, 4294901760
      %v628 = vsub.f32 %v297, %v627
      %629 = vmatpush1.msra.mxu0 %v628
      %630 = vmatprep.subr.mxu0 0.0
      %631 = vmatpush2.msra.mxu0 0.0
      %632 = vmatprep.subr.mxu0 0.0
      %633 = vmatpush2.msra.mxu0 0.0
      %634 = vmatprep.subr.mxu0 0.0
      %635 = vmatpush2.msra.mxu0 0.0
      %636 = vmatprep.subr.mxu0 0.0
      %637 = vmatpush2.msra.mxu0 0.0
      %638 = vmatprep.subr.mxu0 0.0
      %639 = vmatpush2.msra.mxu0 0.0
      %640 = vmatprep.subr.mxu0 0.0
      %641 = vmatpush2.msra.mxu0 0.0
      %642 = vmatprep.subr.mxu0 0.0
      %643 = vmatpush2.msra.mxu0 0.0
      %644 = vmatprep.subr.mxu0 0.0
      %645 = vmatpush2.msra.mxu0 0.0
      %646 = vmatprep.subr.mxu0 0.0
      %647 = vmatpush2.msra.mxu0 0.0
      %648 = vmatprep.subr.mxu0 0.0
      %649 = vmatpush2.msra.mxu0 0.0
      %650 = vmatprep.subr.mxu0 0.0
      %651 = vmatpush2.msra.mxu0 0.0
      %652 = vmatprep.subr.mxu0 0.0
      %653 = vmatpush2.msra.mxu0 0.0
      %654 = vmatprep.subr.mxu0 0.0
      %655 = vmatpush2.msra.mxu0 0.0
      %656 = vmatprep.subr.mxu0 0.0
      %657 = vmatpush2.msra.mxu0 0.0
      %658 = vmatprep.subr.mxu0 0.0
      %659 = vmatpush2.msra.mxu0 0.0
      %660 = vmatprep.subr.mxu0 0.0
      %661 = vmatpush2.msra.mxu0 0.0
      %662 = vmatprep.mubr.f32.mxu0 0.0
      %v663 = vand.u32 %v301, 4294901760
      %v664 = vsub.f32 %v301, %v663
      %665 = vmatmul.mubr.f32.gmra.mxu0 %v664
      %v666 = vpop.f32.mrf.mxu0
      %v667 = vadd.f32 %v549, %v666
      %v668 = vpop.f32.mrf.mxu0
      %669 = vmatprep.mubr.f32.mxu0 0.0
      %v670 = vand.u32 %v304, 4294901760
      %v671 = vsub.f32 %v304, %v670
      %672 = vmatmul.mubr.f32.gmra.mxu0 %v671
      %v673 = vpop.f32.mrf.mxu0
      %v674 = vadd.f32 %v555, %v673
      %v675 = vpop.f32.mrf.mxu0
      %676 = vmatprep.mubr.f32.mxu0 0.0
      %v677 = vand.u32 %v307, 4294901760
      %v678 = vsub.f32 %v307, %v677
      %679 = vmatmul.mubr.f32.gmra.mxu0 %v678
      %v680 = vpop.f32.mrf.mxu0
      %v681 = vadd.f32 %v561, %v680
      %v682 = vpop.f32.mrf.mxu0
      %683 = vmatprep.mubr.f32.mxu0 0.0
      %v684 = vand.u32 %v310, 4294901760
      %v685 = vsub.f32 %v310, %v684
      %686 = vmatmul.mubr.f32.gmra.mxu0 %v685
      %v687 = vpop.f32.mrf.mxu0
      %v688 = vadd.f32 %v567, %v687
      %v689 = vpop.f32.mrf.mxu0
      %690 = vmatprep.mubr.f32.mxu0 0.0
      %v691 = vand.u32 %v313, 4294901760
      %v692 = vsub.f32 %v313, %v691
      %693 = vmatmul.mubr.f32.gmra.mxu0 %v692
      %v694 = vpop.f32.mrf.mxu0
      %v695 = vadd.f32 %v573, %v694
      %v696 = vpop.f32.mrf.mxu0
      %697 = vmatprep.mubr.f32.mxu0 0.0
      %v698 = vand.u32 %v316, 4294901760
      %v699 = vsub.f32 %v316, %v698
      %700 = vmatmul.mubr.f32.gmra.mxu0 %v699
      %v701 = vpop.f32.mrf.mxu0
      %v702 = vadd.f32 %v579, %v701
      %v703 = vpop.f32.mrf.mxu0
      %704 = vmatprep.mubr.f32.mxu0 0.0
      %v705 = vand.u32 %v319, 4294901760
      %v706 = vsub.f32 %v319, %v705
      %707 = vmatmul.mubr.f32.gmra.mxu0 %v706
      %v708 = vpop.f32.mrf.mxu0
      %v709 = vadd.f32 %v585, %v708
      %v710 = vpop.f32.mrf.mxu0
      %711 = vmatprep.mubr.f32.mxu0 0.0
      %v712 = vand.u32 %v322, 4294901760
      %v713 = vsub.f32 %v322, %v712
      %714 = vmatmul.mubr.f32.gmra.mxu0 %v713
      %v715 = vpop.f32.mrf.mxu0
      %v716 = vadd.f32 %v591, %v715
      %v717 = vpop.f32.mrf.mxu0
      %718 = vdwg.mxu0
      %719 = vmatprep.subr.mxu0 0.0
      %720 = vmatpush1.msra.mxu0 0.0
      %721 = vmatprep.subr.mxu0 0.0
      %722 = vmatpush1.msra.mxu0 0.0
      %723 = vmatprep.subr.mxu0 0.0
      %724 = vmatpush1.msra.mxu0 0.0
      %725 = vmatprep.subr.mxu0 0.0
      %726 = vmatpush1.msra.mxu0 0.0
      %727 = vmatprep.subr.mxu0 0.0
      %728 = vmatpush1.msra.mxu0 0.0
      %729 = vmatprep.subr.mxu0 0.0
      %730 = vmatpush1.msra.mxu0 0.0
      %731 = vmatprep.subr.mxu0 0.0
      %732 = vmatpush1.msra.mxu0 0.0
      %733 = vmatprep.subr.mxu0 0.0
      %734 = vmatpush1.msra.mxu0 0.0
      %735 = vmatprep.subr.mxu0 0.0
      %736 = vmatpush1.msra.mxu0 0.0
      %737 = vmatprep.subr.mxu0 0.0
      %738 = vmatpush1.msra.mxu0 0.0
      %739 = vmatprep.subr.mxu0 0.0
      %740 = vmatpush1.msra.mxu0 0.0
      %741 = vmatprep.subr.mxu0 0.0
      %742 = vmatpush1.msra.mxu0 0.0
      %743 = vmatprep.subr.mxu0 0.0
      %744 = vmatpush1.msra.mxu0 0.0
      %745 = vmatprep.subr.mxu0 0.0
      %746 = vmatpush1.msra.mxu0 0.0
      %747 = vmatprep.subr.mxu0 0.0
      %v748 = vand.u32 %v298, 4294901760
      %749 = vmatpush1.msra.mxu0 %v748
      %750 = vmatprep.subr.mxu0 0.0
      %v751 = vand.u32 %v297, 4294901760
      %752 = vmatpush1.msra.mxu0 %v751
      %753 = vmatprep.subr.mxu0 0.0
      %754 = vmatpush2.msra.mxu0 0.0
      %755 = vmatprep.subr.mxu0 0.0
      %756 = vmatpush2.msra.mxu0 0.0
      %757 = vmatprep.subr.mxu0 0.0
      %758 = vmatpush2.msra.mxu0 0.0
      %759 = vmatprep.subr.mxu0 0.0
      %760 = vmatpush2.msra.mxu0 0.0
      %761 = vmatprep.subr.mxu0 0.0
      %762 = vmatpush2.msra.mxu0 0.0
      %763 = vmatprep.subr.mxu0 0.0
      %764 = vmatpush2.msra.mxu0 0.0
      %765 = vmatprep.subr.mxu0 0.0
      %766 = vmatpush2.msra.mxu0 0.0
      %767 = vmatprep.subr.mxu0 0.0
      %768 = vmatpush2.msra.mxu0 0.0
      %769 = vmatprep.subr.mxu0 0.0
      %770 = vmatpush2.msra.mxu0 0.0
      %771 = vmatprep.subr.mxu0 0.0
      %772 = vmatpush2.msra.mxu0 0.0
      %773 = vmatprep.subr.mxu0 0.0
      %774 = vmatpush2.msra.mxu0 0.0
      %775 = vmatprep.subr.mxu0 0.0
      %776 = vmatpush2.msra.mxu0 0.0
      %777 = vmatprep.subr.mxu0 0.0
      %778 = vmatpush2.msra.mxu0 0.0
      %779 = vmatprep.subr.mxu0 0.0
      %780 = vmatpush2.msra.mxu0 0.0
      %781 = vmatprep.subr.mxu0 0.0
      %782 = vmatpush2.msra.mxu0 0.0
      %783 = vmatprep.subr.mxu0 0.0
      %784 = vmatpush2.msra.mxu0 0.0
      %785 = vmatprep.mubr.f32.mxu0 0.0
      %v786 = vand.u32 %v301, 4294901760
      %v787 = vsub.f32 %v301, %v786
      %v788 = vand.u32 %v787, 4294901760
      %789 = vmatmul.mubr.f32.gmra.mxu0 %v788
      %v790 = vpop.f32.mrf.mxu0
      %v791 = vadd.f32 %v667, %v790
      %v792 = vpop.f32.mrf.mxu0
      %793 = vmatprep.mubr.f32.mxu0 0.0
      %v794 = vand.u32 %v304, 4294901760
      %v795 = vsub.f32 %v304, %v794
      %v796 = vand.u32 %v795, 4294901760
      %797 = vmatmul.mubr.f32.gmra.mxu0 %v796
      %v798 = vpop.f32.mrf.mxu0
      %v799 = vadd.f32 %v674, %v798
      %v800 = vpop.f32.mrf.mxu0
      %801 = vmatprep.mubr.f32.mxu0 0.0
      %v802 = vand.u32 %v307, 4294901760
      %v803 = vsub.f32 %v307, %v802
      %v804 = vand.u32 %v803, 4294901760
      %805 = vmatmul.mubr.f32.gmra.mxu0 %v804
      %v806 = vpop.f32.mrf.mxu0
      %v807 = vadd.f32 %v681, %v806
      %v808 = vpop.f32.mrf.mxu0
      %809 = vmatprep.mubr.f32.mxu0 0.0
      %v810 = vand.u32 %v310, 4294901760
      %v811 = vsub.f32 %v310, %v810
      %v812 = vand.u32 %v811, 4294901760
      %813 = vmatmul.mubr.f32.gmra.mxu0 %v812
      %v814 = vpop.f32.mrf.mxu0
      %v815 = vadd.f32 %v688, %v814
      %v816 = vpop.f32.mrf.mxu0
      %817 = vmatprep.mubr.f32.mxu0 0.0
      %v818 = vand.u32 %v313, 4294901760
      %v819 = vsub.f32 %v313, %v818
      %v820 = vand.u32 %v819, 4294901760
      %821 = vmatmul.mubr.f32.gmra.mxu0 %v820
      %v822 = vpop.f32.mrf.mxu0
      %v823 = vadd.f32 %v695, %v822
      %v824 = vpop.f32.mrf.mxu0
      %825 = vmatprep.mubr.f32.mxu0 0.0
      %v826 = vand.u32 %v316, 4294901760
      %v827 = vsub.f32 %v316, %v826
      %v828 = vand.u32 %v827, 4294901760
      %829 = vmatmul.mubr.f32.gmra.mxu0 %v828
      %v830 = vpop.f32.mrf.mxu0
      %v831 = vadd.f32 %v702, %v830
      %v832 = vpop.f32.mrf.mxu0
      %833 = vmatprep.mubr.f32.mxu0 0.0
      %v834 = vand.u32 %v319, 4294901760
      %v835 = vsub.f32 %v319, %v834
      %v836 = vand.u32 %v835, 4294901760
      %837 = vmatmul.mubr.f32.gmra.mxu0 %v836
      %v838 = vpop.f32.mrf.mxu0
      %v839 = vadd.f32 %v709, %v838
      %v840 = vpop.f32.mrf.mxu0
      %841 = vmatprep.mubr.f32.mxu0 0.0
      %v842 = vand.u32 %v322, 4294901760
      %v843 = vsub.f32 %v322, %v842
      %v844 = vand.u32 %v843, 4294901760
      %845 = vmatmul.mubr.f32.gmra.mxu0 %v844
      %v846 = vpop.f32.mrf.mxu0
      %v847 = vadd.f32 %v716, %v846
      %v848 = vpop.f32.mrf.mxu0
      %849 = vdwg.mxu0
      %850 = vmatprep.subr.mxu0 0.0
      %851 = vmatpush1.msra.mxu0 0.0
      %852 = vmatprep.subr.mxu0 0.0
      %853 = vmatpush1.msra.mxu0 0.0
      %854 = vmatprep.subr.mxu0 0.0
      %855 = vmatpush1.msra.mxu0 0.0
      %856 = vmatprep.subr.mxu0 0.0
      %857 = vmatpush1.msra.mxu0 0.0
      %858 = vmatprep.subr.mxu0 0.0
      %859 = vmatpush1.msra.mxu0 0.0
      %860 = vmatprep.subr.mxu0 0.0
      %861 = vmatpush1.msra.mxu0 0.0
      %862 = vmatprep.subr.mxu0 0.0
      %863 = vmatpush1.msra.mxu0 0.0
      %864 = vmatprep.subr.mxu0 0.0
      %865 = vmatpush1.msra.mxu0 0.0
      %866 = vmatprep.subr.mxu0 0.0
      %867 = vmatpush1.msra.mxu0 0.0
      %868 = vmatprep.subr.mxu0 0.0
      %869 = vmatpush1.msra.mxu0 0.0
      %870 = vmatprep.subr.mxu0 0.0
      %871 = vmatpush1.msra.mxu0 0.0
      %872 = vmatprep.subr.mxu0 0.0
      %873 = vmatpush1.msra.mxu0 0.0
      %874 = vmatprep.subr.mxu0 0.0
      %875 = vmatpush1.msra.mxu0 0.0
      %876 = vmatprep.subr.mxu0 0.0
      %877 = vmatpush1.msra.mxu0 0.0
      %878 = vmatprep.subr.mxu0 0.0
      %v879 = vand.u32 %v298, 4294901760
      %v880 = vsub.f32 %v298, %v879
      %v881 = vand.u32 %v880, 4294901760
      %882 = vmatpush1.msra.mxu0 %v881
      %883 = vmatprep.subr.mxu0 0.0
      %v884 = vand.u32 %v297, 4294901760
      %v885 = vsub.f32 %v297, %v884
      %v886 = vand.u32 %v885, 4294901760
      %887 = vmatpush1.msra.mxu0 %v886
      %888 = vmatprep.subr.mxu0 0.0
      %889 = vmatpush2.msra.mxu0 0.0
      %890 = vmatprep.subr.mxu0 0.0
      %891 = vmatpush2.msra.mxu0 0.0
      %892 = vmatprep.subr.mxu0 0.0
      %893 = vmatpush2.msra.mxu0 0.0
      %894 = vmatprep.subr.mxu0 0.0
      %895 = vmatpush2.msra.mxu0 0.0
      %896 = vmatprep.subr.mxu0 0.0
      %897 = vmatpush2.msra.mxu0 0.0
      %898 = vmatprep.subr.mxu0 0.0
      %899 = vmatpush2.msra.mxu0 0.0
      %900 = vmatprep.subr.mxu0 0.0
      %901 = vmatpush2.msra.mxu0 0.0
      %902 = vmatprep.subr.mxu0 0.0
      %903 = vmatpush2.msra.mxu0 0.0
      %904 = vmatprep.subr.mxu0 0.0
      %905 = vmatpush2.msra.mxu0 0.0
      %906 = vmatprep.subr.mxu0 0.0
      %907 = vmatpush2.msra.mxu0 0.0
      %908 = vmatprep.subr.mxu0 0.0
      %909 = vmatpush2.msra.mxu0 0.0
      %910 = vmatprep.subr.mxu0 0.0
      %911 = vmatpush2.msra.mxu0 0.0
      %912 = vmatprep.subr.mxu0 0.0
      %913 = vmatpush2.msra.mxu0 0.0
      %914 = vmatprep.subr.mxu0 0.0
      %915 = vmatpush2.msra.mxu0 0.0
      %916 = vmatprep.subr.mxu0 0.0
      %917 = vmatpush2.msra.mxu0 0.0
      %918 = vmatprep.subr.mxu0 0.0
      %919 = vmatpush2.msra.mxu0 0.0
      %920 = vmatprep.mubr.f32.mxu0 0.0
      %v921 = vand.u32 %v301, 4294901760
      %922 = vmatmul.mubr.f32.gmra.mxu0 %v921
      %v923 = vpop.f32.mrf.mxu0
      %v924 = vadd.f32 %v791, %v923
      %v925 = vpop.f32.mrf.mxu0
      %926 = vmatprep.mubr.f32.mxu0 0.0
      %v927 = vand.u32 %v304, 4294901760
      %928 = vmatmul.mubr.f32.gmra.mxu0 %v927
      %v929 = vpop.f32.mrf.mxu0
      %v930 = vadd.f32 %v799, %v929
      %v931 = vpop.f32.mrf.mxu0
      %932 = vmatprep.mubr.f32.mxu0 0.0
      %v933 = vand.u32 %v307, 4294901760
      %934 = vmatmul.mubr.f32.gmra.mxu0 %v933
      %v935 = vpop.f32.mrf.mxu0
      %v936 = vadd.f32 %v807, %v935
      %v937 = vpop.f32.mrf.mxu0
      %938 = vmatprep.mubr.f32.mxu0 0.0
      %v939 = vand.u32 %v310, 4294901760
      %940 = vmatmul.mubr.f32.gmra.mxu0 %v939
      %v941 = vpop.f32.mrf.mxu0
      %v942 = vadd.f32 %v815, %v941
      %v943 = vpop.f32.mrf.mxu0
      %944 = vmatprep.mubr.f32.mxu0 0.0
      %v945 = vand.u32 %v313, 4294901760
      %946 = vmatmul.mubr.f32.gmra.mxu0 %v945
      %v947 = vpop.f32.mrf.mxu0
      %v948 = vadd.f32 %v823, %v947
      %v949 = vpop.f32.mrf.mxu0
      %950 = vmatprep.mubr.f32.mxu0 0.0
      %v951 = vand.u32 %v316, 4294901760
      %952 = vmatmul.mubr.f32.gmra.mxu0 %v951
      %v953 = vpop.f32.mrf.mxu0
      %v954 = vadd.f32 %v831, %v953
      %v955 = vpop.f32.mrf.mxu0
      %956 = vmatprep.mubr.f32.mxu0 0.0
      %v957 = vand.u32 %v319, 4294901760
      %958 = vmatmul.mubr.f32.gmra.mxu0 %v957
      %v959 = vpop.f32.mrf.mxu0
      %v960 = vadd.f32 %v839, %v959
      %v961 = vpop.f32.mrf.mxu0
      %962 = vmatprep.mubr.f32.mxu0 0.0
      %v963 = vand.u32 %v322, 4294901760
      %964 = vmatmul.mubr.f32.gmra.mxu0 %v963
      %v965 = vpop.f32.mrf.mxu0
      %v966 = vadd.f32 %v847, %v965
      %v967 = vpop.f32.mrf.mxu0
      %968 = vdwg.mxu0
      %969 = vmatprep.subr.mxu0 0.0
      %970 = vmatpush1.msra.mxu0 0.0
      %971 = vmatprep.subr.mxu0 0.0
      %972 = vmatpush1.msra.mxu0 0.0
      %973 = vmatprep.subr.mxu0 0.0
      %974 = vmatpush1.msra.mxu0 0.0
      %975 = vmatprep.subr.mxu0 0.0
      %976 = vmatpush1.msra.mxu0 0.0
      %977 = vmatprep.subr.mxu0 0.0
      %978 = vmatpush1.msra.mxu0 0.0
      %979 = vmatprep.subr.mxu0 0.0
      %980 = vmatpush1.msra.mxu0 0.0
      %981 = vmatprep.subr.mxu0 0.0
      %982 = vmatpush1.msra.mxu0 0.0
      %983 = vmatprep.subr.mxu0 0.0
      %984 = vmatpush1.msra.mxu0 0.0
      %985 = vmatprep.subr.mxu0 0.0
      %986 = vmatpush1.msra.mxu0 0.0
      %987 = vmatprep.subr.mxu0 0.0
      %988 = vmatpush1.msra.mxu0 0.0
      %989 = vmatprep.subr.mxu0 0.0
      %990 = vmatpush1.msra.mxu0 0.0
      %991 = vmatprep.subr.mxu0 0.0
      %992 = vmatpush1.msra.mxu0 0.0
      %993 = vmatprep.subr.mxu0 0.0
      %994 = vmatpush1.msra.mxu0 0.0
      %995 = vmatprep.subr.mxu0 0.0
      %996 = vmatpush1.msra.mxu0 0.0
      %997 = vmatprep.subr.mxu0 0.0
      %v998 = vand.u32 %v298, 4294901760
      %999 = vmatpush1.msra.mxu0 %v998
      %1000 = vmatprep.subr.mxu0 0.0
      %v1001 = vand.u32 %v297, 4294901760
      %1002 = vmatpush1.msra.mxu0 %v1001
      %1003 = vmatprep.subr.mxu0 0.0
      %1004 = vmatpush2.msra.mxu0 0.0
      %1005 = vmatprep.subr.mxu0 0.0
      %1006 = vmatpush2.msra.mxu0 0.0
      %1007 = vmatprep.subr.mxu0 0.0
      %1008 = vmatpush2.msra.mxu0 0.0
      %1009 = vmatprep.subr.mxu0 0.0
      %1010 = vmatpush2.msra.mxu0 0.0
      %1011 = vmatprep.subr.mxu0 0.0
      %1012 = vmatpush2.msra.mxu0 0.0
      %1013 = vmatprep.subr.mxu0 0.0
      %1014 = vmatpush2.msra.mxu0 0.0
      %1015 = vmatprep.subr.mxu0 0.0
      %1016 = vmatpush2.msra.mxu0 0.0
      %1017 = vmatprep.subr.mxu0 0.0
      %1018 = vmatpush2.msra.mxu0 0.0
      %1019 = vmatprep.subr.mxu0 0.0
      %1020 = vmatpush2.msra.mxu0 0.0
      %1021 = vmatprep.subr.mxu0 0.0
      %1022 = vmatpush2.msra.mxu0 0.0
      %1023 = vmatprep.subr.mxu0 0.0
      %1024 = vmatpush2.msra.mxu0 0.0
      %1025 = vmatprep.subr.mxu0 0.0
      %1026 = vmatpush2.msra.mxu0 0.0
      %1027 = vmatprep.subr.mxu0 0.0
      %1028 = vmatpush2.msra.mxu0 0.0
      %1029 = vmatprep.subr.mxu0 0.0
      %1030 = vmatpush2.msra.mxu0 0.0
      %1031 = vmatprep.subr.mxu0 0.0
      %1032 = vmatpush2.msra.mxu0 0.0
      %1033 = vmatprep.subr.mxu0 0.0
      %1034 = vmatpush2.msra.mxu0 0.0
      %1035 = vmatprep.mubr.f32.mxu0 0.0
      %v1036 = vand.u32 %v301, 4294901760
      %1037 = vmatmul.mubr.f32.gmra.mxu0 %v1036
      %v1038 = vpop.f32.mrf.mxu0
      %v1039 = vadd.f32 %v924, %v1038
      %v1040 = vpop.f32.mrf.mxu0
      %1041 = vmatprep.mubr.f32.mxu0 0.0
      %v1042 = vand.u32 %v304, 4294901760
      %1043 = vmatmul.mubr.f32.gmra.mxu0 %v1042
      %v1044 = vpop.f32.mrf.mxu0
      %v1045 = vadd.f32 %v930, %v1044
      %v1046 = vpop.f32.mrf.mxu0
      %1047 = vmatprep.mubr.f32.mxu0 0.0
      %v1048 = vand.u32 %v307, 4294901760
      %1049 = vmatmul.mubr.f32.gmra.mxu0 %v1048
      %v1050 = vpop.f32.mrf.mxu0
      %v1051 = vadd.f32 %v936, %v1050
      %v1052 = vpop.f32.mrf.mxu0
      %1053 = vmatprep.mubr.f32.mxu0 0.0
      %v1054 = vand.u32 %v310, 4294901760
      %1055 = vmatmul.mubr.f32.gmra.mxu0 %v1054
      %v1056 = vpop.f32.mrf.mxu0
      %v1057 = vadd.f32 %v942, %v1056
      %v1058 = vpop.f32.mrf.mxu0
      %1059 = vmatprep.mubr.f32.mxu0 0.0
      %v1060 = vand.u32 %v313, 4294901760
      %1061 = vmatmul.mubr.f32.gmra.mxu0 %v1060
      %v1062 = vpop.f32.mrf.mxu0
      %v1063 = vadd.f32 %v948, %v1062
      %v1064 = vpop.f32.mrf.mxu0
      %1065 = vmatprep.mubr.f32.mxu0 0.0
      %v1066 = vand.u32 %v316, 4294901760
      %1067 = vmatmul.mubr.f32.gmra.mxu0 %v1066
      %v1068 = vpop.f32.mrf.mxu0
      %v1069 = vadd.f32 %v954, %v1068
      %v1070 = vpop.f32.mrf.mxu0
      %1071 = vmatprep.mubr.f32.mxu0 0.0
      %v1072 = vand.u32 %v319, 4294901760
      %1073 = vmatmul.mubr.f32.gmra.mxu0 %v1072
      %v1074 = vpop.f32.mrf.mxu0
      %v1075 = vadd.f32 %v960, %v1074
      %v1076 = vpop.f32.mrf.mxu0
      %1077 = vmatprep.mubr.f32.mxu0 0.0
      %v1078 = vand.u32 %v322, 4294901760
      %1079 = vmatmul.mubr.f32.gmra.mxu0 %v1078
      %v1080 = vpop.f32.mrf.mxu0
      %v1081 = vadd.f32 %v966, %v1080
      %v1082 = vpop.f32.mrf.mxu0
      %1083 = vdwg.mxu0
      %v1084 = vld [vmem:[%s257] sm:$0x1]
      %v1085 = vld [vmem:[%s257 + $0x1] sm:$0x1]
      %v1086 = vld [vmem:[%s257 + $0x2] sm:$0x1]
      %v1087 = vld [vmem:[%s257 + $0x3] sm:$0x1]
      %v1088 = vld [vmem:[%s257 + $0x4] sm:$0x1]
      %v1089 = vld [vmem:[%s257 + $0x5] sm:$0x1]
      %v1090 = vld [vmem:[%s257 + $0x6] sm:$0x1]
      %v1091 = vld [vmem:[%s257 + $0x7] sm:$0x1]
      %v1100 = vlaneseq
      %v1101 = vshrl.u32 %v1100, 7
      %v1102 = vsub.s32 0, %v1101
      %v1103 = vrot.slane %v1084, %v1102
      %v1104 = vlaneseq
      %v1105 = vshrl.u32 %v1104, 7
      %v1106 = vsub.s32 0, %v1105
      %v1107 = vrot.slane %v1085, %v1106
      %v1108 = vlaneseq
      %v1109 = vshrl.u32 %v1108, 7
      %v1110 = vsub.s32 0, %v1109
      %v1111 = vrot.slane %v1086, %v1110
      %v1112 = vlaneseq
      %v1113 = vshrl.u32 %v1112, 7
      %v1114 = vsub.s32 0, %v1113
      %v1115 = vrot.slane %v1087, %v1114
      %v1116 = vlaneseq
      %v1117 = vshrl.u32 %v1116, 7
      %v1118 = vsub.s32 0, %v1117
      %v1119 = vrot.slane %v1088, %v1118
      %v1120 = vlaneseq
      %v1121 = vshrl.u32 %v1120, 7
      %v1122 = vsub.s32 0, %v1121
      %v1123 = vrot.slane %v1089, %v1122
      %v1124 = vlaneseq
      %v1125 = vshrl.u32 %v1124, 7
      %v1126 = vsub.s32 0, %v1125
      %v1127 = vrot.slane %v1090, %v1126
      %v1128 = vlaneseq
      %v1129 = vshrl.u32 %v1128, 7
      %v1130 = vsub.s32 0, %v1129
      %v1131 = vrot.slane %v1091, %v1130
      %1132 = vset.pattern.permute.xlu0 0
      %1133 = vperm.xlu0 %1132, %v1103
      %v1134 = vpop.permute.xlu0 %1133
      %1136 = vset.pattern.permute.xlu0 0
      %1137 = vperm.xlu0 %1136, %v1107
      %v1138 = vpop.permute.xlu0 %1137
      %1140 = vset.pattern.permute.xlu0 0
      %1141 = vperm.xlu0 %1140, %v1111
      %v1142 = vpop.permute.xlu0 %1141
      %1144 = vset.pattern.permute.xlu0 0
      %1145 = vperm.xlu0 %1144, %v1115
      %v1146 = vpop.permute.xlu0 %1145
      %1148 = vset.pattern.permute.xlu0 0
      %1149 = vperm.xlu0 %1148, %v1119
      %v1150 = vpop.permute.xlu0 %1149
      %1152 = vset.pattern.permute.xlu0 0
      %1153 = vperm.xlu0 %1152, %v1123
      %v1154 = vpop.permute.xlu0 %1153
      %1156 = vset.pattern.permute.xlu0 0
      %1157 = vperm.xlu0 %1156, %v1127
      %v1158 = vpop.permute.xlu0 %1157
      %1160 = vset.pattern.permute.xlu0 0
      %1161 = vperm.xlu0 %1160, %v1131
      %v1162 = vpop.permute.xlu0 %1161
      %v1164 = vmul.f32 %v1134, %v1039
      %v1165 = vmul.f32 %v1134, %v1045
      %v1166 = vmul.f32 %v1138, %v1039
      %v1167 = vmul.f32 %v1138, %v1045
      %v1168 = vmul.f32 %v1142, %v1039
      %v1169 = vmul.f32 %v1142, %v1045
      %v1170 = vmul.f32 %v1146, %v1039
      %v1171 = vmul.f32 %v1146, %v1045
      %v1172 = vmul.f32 %v1150, %v1039
      %v1173 = vmul.f32 %v1150, %v1045
      %v1174 = vmul.f32 %v1154, %v1039
      %v1175 = vmul.f32 %v1154, %v1045
      %v1176 = vmul.f32 %v1158, %v1039
      %v1177 = vmul.f32 %v1158, %v1045
      %v1178 = vmul.f32 %v1162, %v1039
      %v1179 = vmul.f32 %v1162, %v1045
      %v1180 = vadd.f32 %v1164, 0.0
      %v1181 = vadd.f32 %v1165, 0.0
      %v1182 = vadd.f32 %v1166, 0.0
      %v1183 = vadd.f32 %v1167, 0.0
      %v1184 = vadd.f32 %v1168, 0.0
      %v1185 = vadd.f32 %v1169, 0.0
      %v1186 = vadd.f32 %v1170, 0.0
      %v1187 = vadd.f32 %v1171, 0.0
      %v1188 = vadd.f32 %v1172, 0.0
      %v1189 = vadd.f32 %v1173, 0.0
      %v1190 = vadd.f32 %v1174, 0.0
      %v1191 = vadd.f32 %v1175, 0.0
      %v1192 = vadd.f32 %v1176, 0.0
      %v1193 = vadd.f32 %v1177, 0.0
      %v1194 = vadd.f32 %v1178, 0.0
      %v1195 = vadd.f32 %v1179, 0.0
      %s1196 = scalar_lea.vmem %s257, 8
      %v1197 = vld [vmem:[%s1196] sm:$0x1]
      %v1198 = vld [vmem:[%s1196 + $0x1] sm:$0x1]
      %v1199 = vld [vmem:[%s1196 + $0x2] sm:$0x1]
      %v1200 = vld [vmem:[%s1196 + $0x3] sm:$0x1]
      %v1201 = vld [vmem:[%s1196 + $0x4] sm:$0x1]
      %v1202 = vld [vmem:[%s1196 + $0x5] sm:$0x1]
      %v1203 = vld [vmem:[%s1196 + $0x6] sm:$0x1]
      %v1204 = vld [vmem:[%s1196 + $0x7] sm:$0x1]
      %v1213 = vlaneseq
      %v1214 = vshrl.u32 %v1213, 7
      %v1215 = vsub.s32 0, %v1214
      %v1216 = vrot.slane %v1197, %v1215
      %v1217 = vlaneseq
      %v1218 = vshrl.u32 %v1217, 7
      %v1219 = vsub.s32 0, %v1218
      %v1220 = vrot.slane %v1198, %v1219
      %v1221 = vlaneseq
      %v1222 = vshrl.u32 %v1221, 7
      %v1223 = vsub.s32 0, %v1222
      %v1224 = vrot.slane %v1199, %v1223
      %v1225 = vlaneseq
      %v1226 = vshrl.u32 %v1225, 7
      %v1227 = vsub.s32 0, %v1226
      %v1228 = vrot.slane %v1200, %v1227
      %v1229 = vlaneseq
      %v1230 = vshrl.u32 %v1229, 7
      %v1231 = vsub.s32 0, %v1230
      %v1232 = vrot.slane %v1201, %v1231
      %v1233 = vlaneseq
      %v1234 = vshrl.u32 %v1233, 7
      %v1235 = vsub.s32 0, %v1234
      %v1236 = vrot.slane %v1202, %v1235
      %v1237 = vlaneseq
      %v1238 = vshrl.u32 %v1237, 7
      %v1239 = vsub.s32 0, %v1238
      %v1240 = vrot.slane %v1203, %v1239
      %v1241 = vlaneseq
      %v1242 = vshrl.u32 %v1241, 7
      %v1243 = vsub.s32 0, %v1242
      %v1244 = vrot.slane %v1204, %v1243
      %1245 = vset.pattern.permute.xlu0 0
      %1246 = vperm.xlu0 %1245, %v1216
      %v1247 = vpop.permute.xlu0 %1246
      %1249 = vset.pattern.permute.xlu0 0
      %1250 = vperm.xlu0 %1249, %v1220
      %v1251 = vpop.permute.xlu0 %1250
      %1253 = vset.pattern.permute.xlu0 0
      %1254 = vperm.xlu0 %1253, %v1224
      %v1255 = vpop.permute.xlu0 %1254
      %1257 = vset.pattern.permute.xlu0 0
      %1258 = vperm.xlu0 %1257, %v1228
      %v1259 = vpop.permute.xlu0 %1258
      %1261 = vset.pattern.permute.xlu0 0
      %1262 = vperm.xlu0 %1261, %v1232
      %v1263 = vpop.permute.xlu0 %1262
      %1265 = vset.pattern.permute.xlu0 0
      %1266 = vperm.xlu0 %1265, %v1236
      %v1267 = vpop.permute.xlu0 %1266
      %1269 = vset.pattern.permute.xlu0 0
      %1270 = vperm.xlu0 %1269, %v1240
      %v1271 = vpop.permute.xlu0 %1270
      %1273 = vset.pattern.permute.xlu0 0
      %1274 = vperm.xlu0 %1273, %v1244
      %v1275 = vpop.permute.xlu0 %1274
      %v1277 = vmul.f32 %v1247, %v1051
      %v1278 = vmul.f32 %v1247, %v1057
      %v1279 = vmul.f32 %v1251, %v1051
      %v1280 = vmul.f32 %v1251, %v1057
      %v1281 = vmul.f32 %v1255, %v1051
      %v1282 = vmul.f32 %v1255, %v1057
      %v1283 = vmul.f32 %v1259, %v1051
      %v1284 = vmul.f32 %v1259, %v1057
      %v1285 = vmul.f32 %v1263, %v1051
      %v1286 = vmul.f32 %v1263, %v1057
      %v1287 = vmul.f32 %v1267, %v1051
      %v1288 = vmul.f32 %v1267, %v1057
      %v1289 = vmul.f32 %v1271, %v1051
      %v1290 = vmul.f32 %v1271, %v1057
      %v1291 = vmul.f32 %v1275, %v1051
      %v1292 = vmul.f32 %v1275, %v1057
      %v1293 = vadd.f32 %v1180, %v1277
      %v1294 = vadd.f32 %v1181, %v1278
      %v1295 = vadd.f32 %v1182, %v1279
      %v1296 = vadd.f32 %v1183, %v1280
      %v1297 = vadd.f32 %v1184, %v1281
      %v1298 = vadd.f32 %v1185, %v1282
      %v1299 = vadd.f32 %v1186, %v1283
      %v1300 = vadd.f32 %v1187, %v1284
      %v1301 = vadd.f32 %v1188, %v1285
      %v1302 = vadd.f32 %v1189, %v1286
      %v1303 = vadd.f32 %v1190, %v1287
      %v1304 = vadd.f32 %v1191, %v1288
      %v1305 = vadd.f32 %v1192, %v1289
      %v1306 = vadd.f32 %v1193, %v1290
      %v1307 = vadd.f32 %v1194, %v1291
      %v1308 = vadd.f32 %v1195, %v1292
      %s1309 = scalar_lea.vmem %s257, 16
      %v1310 = vld [vmem:[%s1309] sm:$0x1]
      %v1311 = vld [vmem:[%s1309 + $0x1] sm:$0x1]
      %v1312 = vld [vmem:[%s1309 + $0x2] sm:$0x1]
      %v1313 = vld [vmem:[%s1309 + $0x3] sm:$0x1]
      %v1314 = vld [vmem:[%s1309 + $0x4] sm:$0x1]
      %v1315 = vld [vmem:[%s1309 + $0x5] sm:$0x1]
      %v1316 = vld [vmem:[%s1309 + $0x6] sm:$0x1]
      %v1317 = vld [vmem:[%s1309 + $0x7] sm:$0x1]
      %v1326 = vlaneseq
      %v1327 = vshrl.u32 %v1326, 7
      %v1328 = vsub.s32 0, %v1327
      %v1329 = vrot.slane %v1310, %v1328
      %v1330 = vlaneseq
      %v1331 = vshrl.u32 %v1330, 7
      %v1332 = vsub.s32 0, %v1331
      %v1333 = vrot.slane %v1311, %v1332
      %v1334 = vlaneseq
      %v1335 = vshrl.u32 %v1334, 7
      %v1336 = vsub.s32 0, %v1335
      %v1337 = vrot.slane %v1312, %v1336
      %v1338 = vlaneseq
      %v1339 = vshrl.u32 %v1338, 7
      %v1340 = vsub.s32 0, %v1339
      %v1341 = vrot.slane %v1313, %v1340
      %v1342 = vlaneseq
      %v1343 = vshrl.u32 %v1342, 7
      %v1344 = vsub.s32 0, %v1343
      %v1345 = vrot.slane %v1314, %v1344
      %v1346 = vlaneseq
      %v1347 = vshrl.u32 %v1346, 7
      %v1348 = vsub.s32 0, %v1347
      %v1349 = vrot.slane %v1315, %v1348
      %v1350 = vlaneseq
      %v1351 = vshrl.u32 %v1350, 7
      %v1352 = vsub.s32 0, %v1351
      %v1353 = vrot.slane %v1316, %v1352
      %v1354 = vlaneseq
      %v1355 = vshrl.u32 %v1354, 7
      %v1356 = vsub.s32 0, %v1355
      %v1357 = vrot.slane %v1317, %v1356
      %1358 = vset.pattern.permute.xlu0 0
      %1359 = vperm.xlu0 %1358, %v1329
      %v1360 = vpop.permute.xlu0 %1359
      %1362 = vset.pattern.permute.xlu0 0
      %1363 = vperm.xlu0 %1362, %v1333
      %v1364 = vpop.permute.xlu0 %1363
      %1366 = vset.pattern.permute.xlu0 0
      %1367 = vperm.xlu0 %1366, %v1337
      %v1368 = vpop.permute.xlu0 %1367
      %1370 = vset.pattern.permute.xlu0 0
      %1371 = vperm.xlu0 %1370, %v1341
      %v1372 = vpop.permute.xlu0 %1371
      %1374 = vset.pattern.permute.xlu0 0
      %1375 = vperm.xlu0 %1374, %v1345
      %v1376 = vpop.permute.xlu0 %1375
      %1378 = vset.pattern.permute.xlu0 0
      %1379 = vperm.xlu0 %1378, %v1349
      %v1380 = vpop.permute.xlu0 %1379
      %1382 = vset.pattern.permute.xlu0 0
      %1383 = vperm.xlu0 %1382, %v1353
      %v1384 = vpop.permute.xlu0 %1383
      %1386 = vset.pattern.permute.xlu0 0
      %1387 = vperm.xlu0 %1386, %v1357
      %v1388 = vpop.permute.xlu0 %1387
      %v1390 = vmul.f32 %v1360, %v1063
      %v1391 = vmul.f32 %v1360, %v1069
      %v1392 = vmul.f32 %v1364, %v1063
      %v1393 = vmul.f32 %v1364, %v1069
      %v1394 = vmul.f32 %v1368, %v1063
      %v1395 = vmul.f32 %v1368, %v1069
      %v1396 = vmul.f32 %v1372, %v1063
      %v1397 = vmul.f32 %v1372, %v1069
      %v1398 = vmul.f32 %v1376, %v1063
      %v1399 = vmul.f32 %v1376, %v1069
      %v1400 = vmul.f32 %v1380, %v1063
      %v1401 = vmul.f32 %v1380, %v1069
      %v1402 = vmul.f32 %v1384, %v1063
      %v1403 = vmul.f32 %v1384, %v1069
      %v1404 = vmul.f32 %v1388, %v1063
      %v1405 = vmul.f32 %v1388, %v1069
      %v1406 = vadd.f32 %v1293, %v1390
      %v1407 = vadd.f32 %v1294, %v1391
      %v1408 = vadd.f32 %v1295, %v1392
      %v1409 = vadd.f32 %v1296, %v1393
      %v1410 = vadd.f32 %v1297, %v1394
      %v1411 = vadd.f32 %v1298, %v1395
      %v1412 = vadd.f32 %v1299, %v1396
      %v1413 = vadd.f32 %v1300, %v1397
      %v1414 = vadd.f32 %v1301, %v1398
      %v1415 = vadd.f32 %v1302, %v1399
      %v1416 = vadd.f32 %v1303, %v1400
      %v1417 = vadd.f32 %v1304, %v1401
      %v1418 = vadd.f32 %v1305, %v1402
      %v1419 = vadd.f32 %v1306, %v1403
      %v1420 = vadd.f32 %v1307, %v1404
      %v1421 = vadd.f32 %v1308, %v1405
      %s1422 = scalar_lea.vmem %s257, 24
      %v1423 = vld [vmem:[%s1422] sm:$0x1]
      %v1424 = vld [vmem:[%s1422 + $0x1] sm:$0x1]
      %v1425 = vld [vmem:[%s1422 + $0x2] sm:$0x1]
      %v1426 = vld [vmem:[%s1422 + $0x3] sm:$0x1]
      %v1427 = vld [vmem:[%s1422 + $0x4] sm:$0x1]
      %v1428 = vld [vmem:[%s1422 + $0x5] sm:$0x1]
      %v1429 = vld [vmem:[%s1422 + $0x6] sm:$0x1]
      %v1430 = vld [vmem:[%s1422 + $0x7] sm:$0x1]
      %v1439 = vlaneseq
      %v1440 = vshrl.u32 %v1439, 7
      %v1441 = vsub.s32 0, %v1440
      %v1442 = vrot.slane %v1423, %v1441
      %v1443 = vlaneseq
      %v1444 = vshrl.u32 %v1443, 7
      %v1445 = vsub.s32 0, %v1444
      %v1446 = vrot.slane %v1424, %v1445
      %v1447 = vlaneseq
      %v1448 = vshrl.u32 %v1447, 7
      %v1449 = vsub.s32 0, %v1448
      %v1450 = vrot.slane %v1425, %v1449
      %v1451 = vlaneseq
      %v1452 = vshrl.u32 %v1451, 7
      %v1453 = vsub.s32 0, %v1452
      %v1454 = vrot.slane %v1426, %v1453
      %v1455 = vlaneseq
      %v1456 = vshrl.u32 %v1455, 7
      %v1457 = vsub.s32 0, %v1456
      %v1458 = vrot.slane %v1427, %v1457
      %v1459 = vlaneseq
      %v1460 = vshrl.u32 %v1459, 7
      %v1461 = vsub.s32 0, %v1460
      %v1462 = vrot.slane %v1428, %v1461
      %v1463 = vlaneseq
      %v1464 = vshrl.u32 %v1463, 7
      %v1465 = vsub.s32 0, %v1464
      %v1466 = vrot.slane %v1429, %v1465
      %v1467 = vlaneseq
      %v1468 = vshrl.u32 %v1467, 7
      %v1469 = vsub.s32 0, %v1468
      %v1470 = vrot.slane %v1430, %v1469
      %1471 = vset.pattern.permute.xlu0 0
      %1472 = vperm.xlu0 %1471, %v1442
      %v1473 = vpop.permute.xlu0 %1472
      %1475 = vset.pattern.permute.xlu0 0
      %1476 = vperm.xlu0 %1475, %v1446
      %v1477 = vpop.permute.xlu0 %1476
      %1479 = vset.pattern.permute.xlu0 0
      %1480 = vperm.xlu0 %1479, %v1450
      %v1481 = vpop.permute.xlu0 %1480
      %1483 = vset.pattern.permute.xlu0 0
      %1484 = vperm.xlu0 %1483, %v1454
      %v1485 = vpop.permute.xlu0 %1484
      %1487 = vset.pattern.permute.xlu0 0
      %1488 = vperm.xlu0 %1487, %v1458
      %v1489 = vpop.permute.xlu0 %1488
      %1491 = vset.pattern.permute.xlu0 0
      %1492 = vperm.xlu0 %1491, %v1462
      %v1493 = vpop.permute.xlu0 %1492
      %1495 = vset.pattern.permute.xlu0 0
      %1496 = vperm.xlu0 %1495, %v1466
      %v1497 = vpop.permute.xlu0 %1496
      %1499 = vset.pattern.permute.xlu0 0
      %1500 = vperm.xlu0 %1499, %v1470
      %v1501 = vpop.permute.xlu0 %1500
      %v1503 = vmul.f32 %v1473, %v1075
      %v1504 = vmul.f32 %v1473, %v1081
      %v1505 = vmul.f32 %v1477, %v1075
      %v1506 = vmul.f32 %v1477, %v1081
      %v1507 = vmul.f32 %v1481, %v1075
      %v1508 = vmul.f32 %v1481, %v1081
      %v1509 = vmul.f32 %v1485, %v1075
      %v1510 = vmul.f32 %v1485, %v1081
      %v1511 = vmul.f32 %v1489, %v1075
      %v1512 = vmul.f32 %v1489, %v1081
      %v1513 = vmul.f32 %v1493, %v1075
      %v1514 = vmul.f32 %v1493, %v1081
      %v1515 = vmul.f32 %v1497, %v1075
      %v1516 = vmul.f32 %v1497, %v1081
      %v1517 = vmul.f32 %v1501, %v1075
      %v1518 = vmul.f32 %v1501, %v1081
      %v1519 = vadd.f32 %v1406, %v1503
      %v1520 = vadd.f32 %v1407, %v1504
      %v1521 = vadd.f32 %v1408, %v1505
      %v1522 = vadd.f32 %v1409, %v1506
      %v1523 = vadd.f32 %v1410, %v1507
      %v1524 = vadd.f32 %v1411, %v1508
      %v1525 = vadd.f32 %v1412, %v1509
      %v1526 = vadd.f32 %v1413, %v1510
      %v1527 = vadd.f32 %v1414, %v1511
      %v1528 = vadd.f32 %v1415, %v1512
      %v1529 = vadd.f32 %v1416, %v1513
      %v1530 = vadd.f32 %v1417, %v1514
      %v1531 = vadd.f32 %v1418, %v1515
      %v1532 = vadd.f32 %v1419, %v1516
      %v1533 = vadd.f32 %v1420, %v1517
      %v1534 = vadd.f32 %v1421, %v1518
      %v1535 = vld [vmem:[#allocation2] sm:$0xff]
      %v1536 = vld [vmem:[#allocation2 + $0x8] sm:$0xff]
      %v1537 = vld [vmem:[#allocation2 + $0x10] sm:$0xff]
      %v1538 = vld [vmem:[#allocation2 + $0x18] sm:$0xff]
      %v1539 = vld [vmem:[#allocation2 + $0x20] sm:$0xff]
      %v1540 = vld [vmem:[#allocation2 + $0x28] sm:$0xff]
      %v1541 = vld [vmem:[#allocation2 + $0x30] sm:$0xff]
      %v1542 = vld [vmem:[#allocation2 + $0x38] sm:$0xff]
      %v1543 = vld [vmem:[#allocation2 + $0x40] sm:$0xff]
      %v1544 = vld [vmem:[#allocation2 + $0x48] sm:$0xff]
      %v1545 = vld [vmem:[#allocation2 + $0x50] sm:$0xff]
      %v1546 = vld [vmem:[#allocation2 + $0x58] sm:$0xff]
      %v1547 = vld [vmem:[#allocation2 + $0x60] sm:$0xff]
      %v1548 = vld [vmem:[#allocation2 + $0x68] sm:$0xff]
      %v1549 = vld [vmem:[#allocation2 + $0x70] sm:$0xff]
      %v1550 = vld [vmem:[#allocation2 + $0x78] sm:$0xff]
      %v1551 = vadd.f32 %v1535, %v1519
      %v1552 = vadd.f32 %v1536, %v1520
      %v1553 = vadd.f32 %v1537, %v1521
      %v1554 = vadd.f32 %v1538, %v1522
      %v1555 = vadd.f32 %v1539, %v1523
      %v1556 = vadd.f32 %v1540, %v1524
      %v1557 = vadd.f32 %v1541, %v1525
      %v1558 = vadd.f32 %v1542, %v1526
      %v1559 = vadd.f32 %v1543, %v1527
      %v1560 = vadd.f32 %v1544, %v1528
      %v1561 = vadd.f32 %v1545, %v1529
      %v1562 = vadd.f32 %v1546, %v1530
      %v1563 = vadd.f32 %v1547, %v1531
      %v1564 = vadd.f32 %v1548, %v1532
      %v1565 = vadd.f32 %v1549, %v1533
      %v1566 = vadd.f32 %v1550, %v1534
      %vm1567 = vcmask 64512
      %1568 = vst.msk [vmem:[#allocation2] sm:$0xff] %vm1567, %v1551
      %1569 = vst.msk [vmem:[#allocation2 + $0x8] sm:$0xff] %vm1567, %v1552
      %1570 = vst.msk [vmem:[#allocation2 + $0x10] sm:$0xff] %vm1567, %v1553
      %1571 = vst.msk [vmem:[#allocation2 + $0x18] sm:$0xff] %vm1567, %v1554
      %1572 = vst.msk [vmem:[#allocation2 + $0x20] sm:$0xff] %vm1567, %v1555
      %1573 = vst.msk [vmem:[#allocation2 + $0x28] sm:$0xff] %vm1567, %v1556
      %1574 = vst.msk [vmem:[#allocation2 + $0x30] sm:$0xff] %vm1567, %v1557
      %1575 = vst.msk [vmem:[#allocation2 + $0x38] sm:$0xff] %vm1567, %v1558
      %1576 = vst.msk [vmem:[#allocation2 + $0x40] sm:$0xff] %vm1567, %v1559
      %1577 = vst.msk [vmem:[#allocation2 + $0x48] sm:$0xff] %vm1567, %v1560
      %1578 = vst.msk [vmem:[#allocation2 + $0x50] sm:$0xff] %vm1567, %v1561
      %1579 = vst.msk [vmem:[#allocation2 + $0x58] sm:$0xff] %vm1567, %v1562
      %1580 = vst.msk [vmem:[#allocation2 + $0x60] sm:$0xff] %vm1567, %v1563
      %1581 = vst.msk [vmem:[#allocation2 + $0x68] sm:$0xff] %vm1567, %v1564
      %1582 = vst.msk [vmem:[#allocation2 + $0x70] sm:$0xff] %vm1567, %v1565
      %1583 = vst.msk [vmem:[#allocation2 + $0x78] sm:$0xff] %vm1567, %v1566
      %s1584 = scalar_lea.vmem %s257, 32
      %v1585 = vld [vmem:[%s1584] sm:$0x1]
      %v1586 = vld [vmem:[%s1584 + $0x1] sm:$0x1]
      %v1587 = vld [vmem:[%s1584 + $0x2] sm:$0x1]
      %v1588 = vld [vmem:[%s1584 + $0x3] sm:$0x1]
      %v1589 = vld [vmem:[%s1584 + $0x4] sm:$0x1]
      %v1590 = vld [vmem:[%s1584 + $0x5] sm:$0x1]
      %v1591 = vld [vmem:[%s1584 + $0x6] sm:$0x1]
      %v1592 = vld [vmem:[%s1584 + $0x7] sm:$0x1]
      %v1601 = vlaneseq
      %v1602 = vshrl.u32 %v1601, 7
      %v1603 = vsub.s32 0, %v1602
      %v1604 = vrot.slane %v1585, %v1603
      %v1605 = vlaneseq
      %v1606 = vshrl.u32 %v1605, 7
      %v1607 = vsub.s32 0, %v1606
      %v1608 = vrot.slane %v1586, %v1607
      %v1609 = vlaneseq
      %v1610 = vshrl.u32 %v1609, 7
      %v1611 = vsub.s32 0, %v1610
      %v1612 = vrot.slane %v1587, %v1611
      %v1613 = vlaneseq
      %v1614 = vshrl.u32 %v1613, 7
      %v1615 = vsub.s32 0, %v1614
      %v1616 = vrot.slane %v1588, %v1615
      %v1617 = vlaneseq
      %v1618 = vshrl.u32 %v1617, 7
      %v1619 = vsub.s32 0, %v1618
      %v1620 = vrot.slane %v1589, %v1619
      %v1621 = vlaneseq
      %v1622 = vshrl.u32 %v1621, 7
      %v1623 = vsub.s32 0, %v1622
      %v1624 = vrot.slane %v1590, %v1623
      %v1625 = vlaneseq
      %v1626 = vshrl.u32 %v1625, 7
      %v1627 = vsub.s32 0, %v1626
      %v1628 = vrot.slane %v1591, %v1627
      %v1629 = vlaneseq
      %v1630 = vshrl.u32 %v1629, 7
      %v1631 = vsub.s32 0, %v1630
      %v1632 = vrot.slane %v1592, %v1631
      %1633 = vset.pattern.permute.xlu0 0
      %1634 = vperm.xlu0 %1633, %v1604
      %v1635 = vpop.permute.xlu0 %1634
      %1637 = vset.pattern.permute.xlu0 0
      %1638 = vperm.xlu0 %1637, %v1608
      %v1639 = vpop.permute.xlu0 %1638
      %1641 = vset.pattern.permute.xlu0 0
      %1642 = vperm.xlu0 %1641, %v1612
      %v1643 = vpop.permute.xlu0 %1642
      %1645 = vset.pattern.permute.xlu0 0
      %1646 = vperm.xlu0 %1645, %v1616
      %v1647 = vpop.permute.xlu0 %1646
      %1649 = vset.pattern.permute.xlu0 0
      %1650 = vperm.xlu0 %1649, %v1620
      %v1651 = vpop.permute.xlu0 %1650
      %1653 = vset.pattern.permute.xlu0 0
      %1654 = vperm.xlu0 %1653, %v1624
      %v1655 = vpop.permute.xlu0 %1654
      %1657 = vset.pattern.permute.xlu0 0
      %1658 = vperm.xlu0 %1657, %v1628
      %v1659 = vpop.permute.xlu0 %1658
      %1661 = vset.pattern.permute.xlu0 0
      %1662 = vperm.xlu0 %1661, %v1632
      %v1663 = vpop.permute.xlu0 %1662
      %v1665 = vmul.f32 %v1635, %v1039
      %v1666 = vmul.f32 %v1635, %v1045
      %v1667 = vmul.f32 %v1639, %v1039
      %v1668 = vmul.f32 %v1639, %v1045
      %v1669 = vmul.f32 %v1643, %v1039
      %v1670 = vmul.f32 %v1643, %v1045
      %v1671 = vmul.f32 %v1647, %v1039
      %v1672 = vmul.f32 %v1647, %v1045
      %v1673 = vmul.f32 %v1651, %v1039
      %v1674 = vmul.f32 %v1651, %v1045
      %v1675 = vmul.f32 %v1655, %v1039
      %v1676 = vmul.f32 %v1655, %v1045
      %v1677 = vmul.f32 %v1659, %v1039
      %v1678 = vmul.f32 %v1659, %v1045
      %v1679 = vmul.f32 %v1663, %v1039
      %v1680 = vmul.f32 %v1663, %v1045
      %v1681 = vadd.f32 %v1665, 0.0
      %v1682 = vadd.f32 %v1666, 0.0
      %v1683 = vadd.f32 %v1667, 0.0
      %v1684 = vadd.f32 %v1668, 0.0
      %v1685 = vadd.f32 %v1669, 0.0
      %v1686 = vadd.f32 %v1670, 0.0
      %v1687 = vadd.f32 %v1671, 0.0
      %v1688 = vadd.f32 %v1672, 0.0
      %v1689 = vadd.f32 %v1673, 0.0
      %v1690 = vadd.f32 %v1674, 0.0
      %v1691 = vadd.f32 %v1675, 0.0
      %v1692 = vadd.f32 %v1676, 0.0
      %v1693 = vadd.f32 %v1677, 0.0
      %v1694 = vadd.f32 %v1678, 0.0
      %v1695 = vadd.f32 %v1679, 0.0
      %v1696 = vadd.f32 %v1680, 0.0
      %s1697 = scalar_lea.vmem %s257, 40
      %v1698 = vld [vmem:[%s1697] sm:$0x1]
      %v1699 = vld [vmem:[%s1697 + $0x1] sm:$0x1]
      %v1700 = vld [vmem:[%s1697 + $0x2] sm:$0x1]
      %v1701 = vld [vmem:[%s1697 + $0x3] sm:$0x1]
      %v1702 = vld [vmem:[%s1697 + $0x4] sm:$0x1]
      %v1703 = vld [vmem:[%s1697 + $0x5] sm:$0x1]
      %v1704 = vld [vmem:[%s1697 + $0x6] sm:$0x1]
      %v1705 = vld [vmem:[%s1697 + $0x7] sm:$0x1]
      %v1714 = vlaneseq
      %v1715 = vshrl.u32 %v1714, 7
      %v1716 = vsub.s32 0, %v1715
      %v1717 = vrot.slane %v1698, %v1716
      %v1718 = vlaneseq
      %v1719 = vshrl.u32 %v1718, 7
      %v1720 = vsub.s32 0, %v1719
      %v1721 = vrot.slane %v1699, %v1720
      %v1722 = vlaneseq
      %v1723 = vshrl.u32 %v1722, 7
      %v1724 = vsub.s32 0, %v1723
      %v1725 = vrot.slane %v1700, %v1724
      %v1726 = vlaneseq
      %v1727 = vshrl.u32 %v1726, 7
      %v1728 = vsub.s32 0, %v1727
      %v1729 = vrot.slane %v1701, %v1728
      %v1730 = vlaneseq
      %v1731 = vshrl.u32 %v1730, 7
      %v1732 = vsub.s32 0, %v1731
      %v1733 = vrot.slane %v1702, %v1732
      %v1734 = vlaneseq
      %v1735 = vshrl.u32 %v1734, 7
      %v1736 = vsub.s32 0, %v1735
      %v1737 = vrot.slane %v1703, %v1736
      %v1738 = vlaneseq
      %v1739 = vshrl.u32 %v1738, 7
      %v1740 = vsub.s32 0, %v1739
      %v1741 = vrot.slane %v1704, %v1740
      %v1742 = vlaneseq
      %v1743 = vshrl.u32 %v1742, 7
      %v1744 = vsub.s32 0, %v1743
      %v1745 = vrot.slane %v1705, %v1744
      %1746 = vset.pattern.permute.xlu0 0
      %1747 = vperm.xlu0 %1746, %v1717
      %v1748 = vpop.permute.xlu0 %1747
      %1750 = vset.pattern.permute.xlu0 0
      %1751 = vperm.xlu0 %1750, %v1721
      %v1752 = vpop.permute.xlu0 %1751
      %1754 = vset.pattern.permute.xlu0 0
      %1755 = vperm.xlu0 %1754, %v1725
      %v1756 = vpop.permute.xlu0 %1755
      %1758 = vset.pattern.permute.xlu0 0
      %1759 = vperm.xlu0 %1758, %v1729
      %v1760 = vpop.permute.xlu0 %1759
      %1762 = vset.pattern.permute.xlu0 0
      %1763 = vperm.xlu0 %1762, %v1733
      %v1764 = vpop.permute.xlu0 %1763
      %1766 = vset.pattern.permute.xlu0 0
      %1767 = vperm.xlu0 %1766, %v1737
      %v1768 = vpop.permute.xlu0 %1767
      %1770 = vset.pattern.permute.xlu0 0
      %1771 = vperm.xlu0 %1770, %v1741
      %v1772 = vpop.permute.xlu0 %1771
      %1774 = vset.pattern.permute.xlu0 0
      %1775 = vperm.xlu0 %1774, %v1745
      %v1776 = vpop.permute.xlu0 %1775
      %v1778 = vmul.f32 %v1748, %v1051
      %v1779 = vmul.f32 %v1748, %v1057
      %v1780 = vmul.f32 %v1752, %v1051
      %v1781 = vmul.f32 %v1752, %v1057
      %v1782 = vmul.f32 %v1756, %v1051
      %v1783 = vmul.f32 %v1756, %v1057
      %v1784 = vmul.f32 %v1760, %v1051
      %v1785 = vmul.f32 %v1760, %v1057
      %v1786 = vmul.f32 %v1764, %v1051
      %v1787 = vmul.f32 %v1764, %v1057
      %v1788 = vmul.f32 %v1768, %v1051
      %v1789 = vmul.f32 %v1768, %v1057
      %v1790 = vmul.f32 %v1772, %v1051
      %v1791 = vmul.f32 %v1772, %v1057
      %v1792 = vmul.f32 %v1776, %v1051
      %v1793 = vmul.f32 %v1776, %v1057
      %v1794 = vadd.f32 %v1681, %v1778
      %v1795 = vadd.f32 %v1682, %v1779
      %v1796 = vadd.f32 %v1683, %v1780
      %v1797 = vadd.f32 %v1684, %v1781
      %v1798 = vadd.f32 %v1685, %v1782
      %v1799 = vadd.f32 %v1686, %v1783
      %v1800 = vadd.f32 %v1687, %v1784
      %v1801 = vadd.f32 %v1688, %v1785
      %v1802 = vadd.f32 %v1689, %v1786
      %v1803 = vadd.f32 %v1690, %v1787
      %v1804 = vadd.f32 %v1691, %v1788
      %v1805 = vadd.f32 %v1692, %v1789
      %v1806 = vadd.f32 %v1693, %v1790
      %v1807 = vadd.f32 %v1694, %v1791
      %v1808 = vadd.f32 %v1695, %v1792
      %v1809 = vadd.f32 %v1696, %v1793
      %s1810 = scalar_lea.vmem %s257, 48
      %v1811 = vld [vmem:[%s1810] sm:$0x1]
      %v1812 = vld [vmem:[%s1810 + $0x1] sm:$0x1]
      %v1813 = vld [vmem:[%s1810 + $0x2] sm:$0x1]
      %v1814 = vld [vmem:[%s1810 + $0x3] sm:$0x1]
      %v1815 = vld [vmem:[%s1810 + $0x4] sm:$0x1]
      %v1816 = vld [vmem:[%s1810 + $0x5] sm:$0x1]
      %v1817 = vld [vmem:[%s1810 + $0x6] sm:$0x1]
      %v1818 = vld [vmem:[%s1810 + $0x7] sm:$0x1]
      %v1827 = vlaneseq
      %v1828 = vshrl.u32 %v1827, 7
      %v1829 = vsub.s32 0, %v1828
      %v1830 = vrot.slane %v1811, %v1829
      %v1831 = vlaneseq
      %v1832 = vshrl.u32 %v1831, 7
      %v1833 = vsub.s32 0, %v1832
      %v1834 = vrot.slane %v1812, %v1833
      %v1835 = vlaneseq
      %v1836 = vshrl.u32 %v1835, 7
      %v1837 = vsub.s32 0, %v1836
      %v1838 = vrot.slane %v1813, %v1837
      %v1839 = vlaneseq
      %v1840 = vshrl.u32 %v1839, 7
      %v1841 = vsub.s32 0, %v1840
      %v1842 = vrot.slane %v1814, %v1841
      %v1843 = vlaneseq
      %v1844 = vshrl.u32 %v1843, 7
      %v1845 = vsub.s32 0, %v1844
      %v1846 = vrot.slane %v1815, %v1845
      %v1847 = vlaneseq
      %v1848 = vshrl.u32 %v1847, 7
      %v1849 = vsub.s32 0, %v1848
      %v1850 = vrot.slane %v1816, %v1849
      %v1851 = vlaneseq
      %v1852 = vshrl.u32 %v1851, 7
      %v1853 = vsub.s32 0, %v1852
      %v1854 = vrot.slane %v1817, %v1853
      %v1855 = vlaneseq
      %v1856 = vshrl.u32 %v1855, 7
      %v1857 = vsub.s32 0, %v1856
      %v1858 = vrot.slane %v1818, %v1857
      %1859 = vset.pattern.permute.xlu0 0
      %1860 = vperm.xlu0 %1859, %v1830
      %v1861 = vpop.permute.xlu0 %1860
      %1863 = vset.pattern.permute.xlu0 0
      %1864 = vperm.xlu0 %1863, %v1834
      %v1865 = vpop.permute.xlu0 %1864
      %1867 = vset.pattern.permute.xlu0 0
      %1868 = vperm.xlu0 %1867, %v1838
      %v1869 = vpop.permute.xlu0 %1868
      %1871 = vset.pattern.permute.xlu0 0
      %1872 = vperm.xlu0 %1871, %v1842
      %v1873 = vpop.permute.xlu0 %1872
      %1875 = vset.pattern.permute.xlu0 0
      %1876 = vperm.xlu0 %1875, %v1846
      %v1877 = vpop.permute.xlu0 %1876
      %1879 = vset.pattern.permute.xlu0 0
      %1880 = vperm.xlu0 %1879, %v1850
      %v1881 = vpop.permute.xlu0 %1880
      %1883 = vset.pattern.permute.xlu0 0
      %1884 = vperm.xlu0 %1883, %v1854
      %v1885 = vpop.permute.xlu0 %1884
      %1887 = vset.pattern.permute.xlu0 0
      %1888 = vperm.xlu0 %1887, %v1858
      %v1889 = vpop.permute.xlu0 %1888
      %v1891 = vmul.f32 %v1861, %v1063
      %v1892 = vmul.f32 %v1861, %v1069
      %v1893 = vmul.f32 %v1865, %v1063
      %v1894 = vmul.f32 %v1865, %v1069
      %v1895 = vmul.f32 %v1869, %v1063
      %v1896 = vmul.f32 %v1869, %v1069
      %v1897 = vmul.f32 %v1873, %v1063
      %v1898 = vmul.f32 %v1873, %v1069
      %v1899 = vmul.f32 %v1877, %v1063
      %v1900 = vmul.f32 %v1877, %v1069
      %v1901 = vmul.f32 %v1881, %v1063
      %v1902 = vmul.f32 %v1881, %v1069
      %v1903 = vmul.f32 %v1885, %v1063
      %v1904 = vmul.f32 %v1885, %v1069
      %v1905 = vmul.f32 %v1889, %v1063
      %v1906 = vmul.f32 %v1889, %v1069
      %v1907 = vadd.f32 %v1794, %v1891
      %v1908 = vadd.f32 %v1795, %v1892
      %v1909 = vadd.f32 %v1796, %v1893
      %v1910 = vadd.f32 %v1797, %v1894
      %v1911 = vadd.f32 %v1798, %v1895
      %v1912 = vadd.f32 %v1799, %v1896
      %v1913 = vadd.f32 %v1800, %v1897
      %v1914 = vadd.f32 %v1801, %v1898
      %v1915 = vadd.f32 %v1802, %v1899
      %v1916 = vadd.f32 %v1803, %v1900
      %v1917 = vadd.f32 %v1804, %v1901
      %v1918 = vadd.f32 %v1805, %v1902
      %v1919 = vadd.f32 %v1806, %v1903
      %v1920 = vadd.f32 %v1807, %v1904
      %v1921 = vadd.f32 %v1808, %v1905
      %v1922 = vadd.f32 %v1809, %v1906
      %s1923 = scalar_lea.vmem %s257, 56
      %v1924 = vld [vmem:[%s1923] sm:$0x1]
      %v1925 = vld [vmem:[%s1923 + $0x1] sm:$0x1]
      %v1926 = vld [vmem:[%s1923 + $0x2] sm:$0x1]
      %v1927 = vld [vmem:[%s1923 + $0x3] sm:$0x1]
      %v1928 = vld [vmem:[%s1923 + $0x4] sm:$0x1]
      %v1929 = vld [vmem:[%s1923 + $0x5] sm:$0x1]
      %v1930 = vld [vmem:[%s1923 + $0x6] sm:$0x1]
      %v1931 = vld [vmem:[%s1923 + $0x7] sm:$0x1]
      %v1940 = vlaneseq
      %v1941 = vshrl.u32 %v1940, 7
      %v1942 = vsub.s32 0, %v1941
      %v1943 = vrot.slane %v1924, %v1942
      %v1944 = vlaneseq
      %v1945 = vshrl.u32 %v1944, 7
      %v1946 = vsub.s32 0, %v1945
      %v1947 = vrot.slane %v1925, %v1946
      %v1948 = vlaneseq
      %v1949 = vshrl.u32 %v1948, 7
      %v1950 = vsub.s32 0, %v1949
      %v1951 = vrot.slane %v1926, %v1950
      %v1952 = vlaneseq
      %v1953 = vshrl.u32 %v1952, 7
      %v1954 = vsub.s32 0, %v1953
      %v1955 = vrot.slane %v1927, %v1954
      %v1956 = vlaneseq
      %v1957 = vshrl.u32 %v1956, 7
      %v1958 = vsub.s32 0, %v1957
      %v1959 = vrot.slane %v1928, %v1958
      %v1960 = vlaneseq
      %v1961 = vshrl.u32 %v1960, 7
      %v1962 = vsub.s32 0, %v1961
      %v1963 = vrot.slane %v1929, %v1962
      %v1964 = vlaneseq
      %v1965 = vshrl.u32 %v1964, 7
      %v1966 = vsub.s32 0, %v1965
      %v1967 = vrot.slane %v1930, %v1966
      %v1968 = vlaneseq
      %v1969 = vshrl.u32 %v1968, 7
      %v1970 = vsub.s32 0, %v1969
      %v1971 = vrot.slane %v1931, %v1970
      %1972 = vset.pattern.permute.xlu0 0
      %1973 = vperm.xlu0 %1972, %v1943
      %v1974 = vpop.permute.xlu0 %1973
      %1976 = vset.pattern.permute.xlu0 0
      %1977 = vperm.xlu0 %1976, %v1947
      %v1978 = vpop.permute.xlu0 %1977
      %1980 = vset.pattern.permute.xlu0 0
      %1981 = vperm.xlu0 %1980, %v1951
      %v1982 = vpop.permute.xlu0 %1981
      %1984 = vset.pattern.permute.xlu0 0
      %1985 = vperm.xlu0 %1984, %v1955
      %v1986 = vpop.permute.xlu0 %1985
      %1988 = vset.pattern.permute.xlu0 0
      %1989 = vperm.xlu0 %1988, %v1959
      %v1990 = vpop.permute.xlu0 %1989
      %1992 = vset.pattern.permute.xlu0 0
      %1993 = vperm.xlu0 %1992, %v1963
      %v1994 = vpop.permute.xlu0 %1993
      %1996 = vset.pattern.permute.xlu0 0
      %1997 = vperm.xlu0 %1996, %v1967
      %v1998 = vpop.permute.xlu0 %1997
      %2000 = vset.pattern.permute.xlu0 0
      %2001 = vperm.xlu0 %2000, %v1971
      %v2002 = vpop.permute.xlu0 %2001
      %v2004 = vmul.f32 %v1974, %v1075
      %v2005 = vmul.f32 %v1974, %v1081
      %v2006 = vmul.f32 %v1978, %v1075
      %v2007 = vmul.f32 %v1978, %v1081
      %v2008 = vmul.f32 %v1982, %v1075
      %v2009 = vmul.f32 %v1982, %v1081
      %v2010 = vmul.f32 %v1986, %v1075
      %v2011 = vmul.f32 %v1986, %v1081
      %v2012 = vmul.f32 %v1990, %v1075
      %v2013 = vmul.f32 %v1990, %v1081
      %v2014 = vmul.f32 %v1994, %v1075
      %v2015 = vmul.f32 %v1994, %v1081
      %v2016 = vmul.f32 %v1998, %v1075
      %v2017 = vmul.f32 %v1998, %v1081
      %v2018 = vmul.f32 %v2002, %v1075
      %v2019 = vmul.f32 %v2002, %v1081
      %v2020 = vadd.f32 %v1907, %v2004
      %v2021 = vadd.f32 %v1908, %v2005
      %v2022 = vadd.f32 %v1909, %v2006
      %v2023 = vadd.f32 %v1910, %v2007
      %v2024 = vadd.f32 %v1911, %v2008
      %v2025 = vadd.f32 %v1912, %v2009
      %v2026 = vadd.f32 %v1913, %v2010
      %v2027 = vadd.f32 %v1914, %v2011
      %v2028 = vadd.f32 %v1915, %v2012
      %v2029 = vadd.f32 %v1916, %v2013
      %v2030 = vadd.f32 %v1917, %v2014
      %v2031 = vadd.f32 %v1918, %v2015
      %v2032 = vadd.f32 %v1919, %v2016
      %v2033 = vadd.f32 %v1920, %v2017
      %v2034 = vadd.f32 %v1921, %v2018
      %v2035 = vadd.f32 %v1922, %v2019
      %v2036 = vld [vmem:[#allocation2] sm:$0xff]
      %v2037 = vld [vmem:[#allocation2 + $0x8] sm:$0xff]
      %v2038 = vld [vmem:[#allocation2 + $0x10] sm:$0xff]
      %v2039 = vld [vmem:[#allocation2 + $0x18] sm:$0xff]
      %v2040 = vld [vmem:[#allocation2 + $0x20] sm:$0xff]
      %v2041 = vld [vmem:[#allocation2 + $0x28] sm:$0xff]
      %v2042 = vld [vmem:[#allocation2 + $0x30] sm:$0xff]
      %v2043 = vld [vmem:[#allocation2 + $0x38] sm:$0xff]
      %v2044 = vld [vmem:[#allocation2 + $0x40] sm:$0xff]
      %v2045 = vld [vmem:[#allocation2 + $0x48] sm:$0xff]
      %v2046 = vld [vmem:[#allocation2 + $0x50] sm:$0xff]
      %v2047 = vld [vmem:[#allocation2 + $0x58] sm:$0xff]
      %v2048 = vld [vmem:[#allocation2 + $0x60] sm:$0xff]
      %v2049 = vld [vmem:[#allocation2 + $0x68] sm:$0xff]
      %v2050 = vld [vmem:[#allocation2 + $0x70] sm:$0xff]
      %v2051 = vld [vmem:[#allocation2 + $0x78] sm:$0xff]
      %2068 = vrot.lane.b32.xlu0 %v2020, 120
      %v2069 = vpop.permute.xlu0 %2068
      %2070 = vrot.lane.b32.xlu0 %v2021, 120
      %v2071 = vpop.permute.xlu0 %2070
      %2072 = vrot.lane.b32.xlu0 %v2022, 120
      %v2073 = vpop.permute.xlu0 %2072
      %2074 = vrot.lane.b32.xlu0 %v2023, 120
      %v2075 = vpop.permute.xlu0 %2074
      %2076 = vrot.lane.b32.xlu0 %v2024, 120
      %v2077 = vpop.permute.xlu0 %2076
      %2078 = vrot.lane.b32.xlu0 %v2025, 120
      %v2079 = vpop.permute.xlu0 %2078
      %2080 = vrot.lane.b32.xlu0 %v2026, 120
      %v2081 = vpop.permute.xlu0 %2080
      %2082 = vrot.lane.b32.xlu0 %v2027, 120
      %v2083 = vpop.permute.xlu0 %2082
      %2084 = vrot.lane.b32.xlu0 %v2028, 120
      %v2085 = vpop.permute.xlu0 %2084
      %2086 = vrot.lane.b32.xlu0 %v2029, 120
      %v2087 = vpop.permute.xlu0 %2086
      %2088 = vrot.lane.b32.xlu0 %v2030, 120
      %v2089 = vpop.permute.xlu0 %2088
      %2090 = vrot.lane.b32.xlu0 %v2031, 120
      %v2091 = vpop.permute.xlu0 %2090
      %2092 = vrot.lane.b32.xlu0 %v2032, 120
      %v2093 = vpop.permute.xlu0 %2092
      %2094 = vrot.lane.b32.xlu0 %v2033, 120
      %v2095 = vpop.permute.xlu0 %2094
      %2096 = vrot.lane.b32.xlu0 %v2034, 120
      %v2097 = vpop.permute.xlu0 %2096
      %2098 = vrot.lane.b32.xlu0 %v2035, 120
      %v2099 = vpop.permute.xlu0 %2098
      %v2116 = vadd.f32 %v2036, %v2069
      %v2117 = vadd.f32 %v2037, %v2071
      %v2118 = vadd.f32 %v2038, %v2073
      %v2119 = vadd.f32 %v2039, %v2075
      %v2120 = vadd.f32 %v2040, %v2077
      %v2121 = vadd.f32 %v2041, %v2079
      %v2122 = vadd.f32 %v2042, %v2081
      %v2123 = vadd.f32 %v2043, %v2083
      %v2124 = vadd.f32 %v2044, %v2085
      %v2125 = vadd.f32 %v2045, %v2087
      %v2126 = vadd.f32 %v2046, %v2089
      %v2127 = vadd.f32 %v2047, %v2091
      %v2128 = vadd.f32 %v2048, %v2093
      %v2129 = vadd.f32 %v2049, %v2095
      %v2130 = vadd.f32 %v2050, %v2097
      %v2131 = vadd.f32 %v2051, %v2099
      %2132 = vst.msk [vmem:[#allocation2] sm:$0xff] %vm1567, %v2116
      %2133 = vst.msk [vmem:[#allocation2 + $0x8] sm:$0xff] %vm1567, %v2117
      %2134 = vst.msk [vmem:[#allocation2 + $0x10] sm:$0xff] %vm1567, %v2118
      %2135 = vst.msk [vmem:[#allocation2 + $0x18] sm:$0xff] %vm1567, %v2119
      %2136 = vst.msk [vmem:[#allocation2 + $0x20] sm:$0xff] %vm1567, %v2120
      %2137 = vst.msk [vmem:[#allocation2 + $0x28] sm:$0xff] %vm1567, %v2121
      %2138 = vst.msk [vmem:[#allocation2 + $0x30] sm:$0xff] %vm1567, %v2122
      %2139 = vst.msk [vmem:[#allocation2 + $0x38] sm:$0xff] %vm1567, %v2123
      %2140 = vst.msk [vmem:[#allocation2 + $0x40] sm:$0xff] %vm1567, %v2124
      %2141 = vst.msk [vmem:[#allocation2 + $0x48] sm:$0xff] %vm1567, %v2125
      %2142 = vst.msk [vmem:[#allocation2 + $0x50] sm:$0xff] %vm1567, %v2126
      %2143 = vst.msk [vmem:[#allocation2 + $0x58] sm:$0xff] %vm1567, %v2127
      %2144 = vst.msk [vmem:[#allocation2 + $0x60] sm:$0xff] %vm1567, %v2128
      %2145 = vst.msk [vmem:[#allocation2 + $0x68] sm:$0xff] %vm1567, %v2129
      %2146 = vst.msk [vmem:[#allocation2 + $0x70] sm:$0xff] %vm1567, %v2130
      %2147 = vst.msk [vmem:[#allocation2 + $0x78] sm:$0xff] %vm1567, %v2131
      %v2148 = vld [vmem:[%s251] sm:$0xff]
      %v2149 = vld [vmem:[%s251 + $0x8] sm:$0xff]
      %v2150 = vld [vmem:[%s251 + $0x10] sm:$0xff]
      %v2151 = vld [vmem:[%s251 + $0x18] sm:$0xff]
      %v2152 = vld [vmem:[%s251 + $0x20] sm:$0xff]
      %v2153 = vld [vmem:[%s251 + $0x28] sm:$0xff]
      %v2154 = vld [vmem:[%s251 + $0x30] sm:$0xff]
      %v2155 = vld [vmem:[%s251 + $0x38] sm:$0xff]
      %v2156 = vld [vmem:[%s2] sm:$0xff]
      %v2157 = vld [vmem:[%s2 + $0x8] sm:$0xff]
      %2166 = vrot.lane.b32.xlu0 %v2148, 112
      %v2167 = vpop.permute.xlu0 %2166
      %2168 = vrot.lane.b32.xlu0 %v2149, 112
      %v2169 = vpop.permute.xlu0 %2168
      %2170 = vrot.lane.b32.xlu0 %v2150, 112
      %v2171 = vpop.permute.xlu0 %2170
      %2172 = vrot.lane.b32.xlu0 %v2151, 112
      %v2173 = vpop.permute.xlu0 %2172
      %2174 = vrot.lane.b32.xlu0 %v2152, 112
      %v2175 = vpop.permute.xlu0 %2174
      %2176 = vrot.lane.b32.xlu0 %v2153, 112
      %v2177 = vpop.permute.xlu0 %2176
      %2178 = vrot.lane.b32.xlu0 %v2154, 112
      %v2179 = vpop.permute.xlu0 %2178
      %2180 = vrot.lane.b32.xlu0 %v2155, 112
      %v2181 = vpop.permute.xlu0 %2180
      %v2182 = vsel %vm299, %v2167, 0
      %v2184 = vsel %vm299, %v2169, 0
      %v2186 = vsel %vm299, %v2171, 0
      %v2188 = vsel %vm299, %v2173, 0
      %v2190 = vsel %vm299, %v2175, 0
      %v2192 = vsel %vm299, %v2177, 0
      %v2194 = vsel %vm299, %v2179, 0
      %v2196 = vsel %vm299, %v2181, 0
      %2198 = vmatprep.subr.mxu0 0.0
      %2199 = vmatpush1.msra.mxu0 0.0
      %2200 = vmatprep.subr.mxu0 0.0
      %2201 = vmatpush1.msra.mxu0 0.0
      %2202 = vmatprep.subr.mxu0 0.0
      %2203 = vmatpush1.msra.mxu0 0.0
      %2204 = vmatprep.subr.mxu0 0.0
      %2205 = vmatpush1.msra.mxu0 0.0
      %2206 = vmatprep.subr.mxu0 0.0
      %2207 = vmatpush1.msra.mxu0 0.0
      %2208 = vmatprep.subr.mxu0 0.0
      %2209 = vmatpush1.msra.mxu0 0.0
      %2210 = vmatprep.subr.mxu0 0.0
      %2211 = vmatpush1.msra.mxu0 0.0
      %2212 = vmatprep.subr.mxu0 0.0
      %2213 = vmatpush1.msra.mxu0 0.0
      %2214 = vmatprep.subr.mxu0 0.0
      %2215 = vmatpush1.msra.mxu0 0.0
      %2216 = vmatprep.subr.mxu0 0.0
      %2217 = vmatpush1.msra.mxu0 0.0
      %2218 = vmatprep.subr.mxu0 0.0
      %2219 = vmatpush1.msra.mxu0 0.0
      %2220 = vmatprep.subr.mxu0 0.0
      %2221 = vmatpush1.msra.mxu0 0.0
      %2222 = vmatprep.subr.mxu0 0.0
      %2223 = vmatpush1.msra.mxu0 0.0
      %2224 = vmatprep.subr.mxu0 0.0
      %2225 = vmatpush1.msra.mxu0 0.0
      %2226 = vmatprep.subr.mxu0 0.0
      %v2227 = vand.u32 %v2157, 4294901760
      %2228 = vmatpush1.msra.mxu0 %v2227
      %2229 = vmatprep.subr.mxu0 0.0
      %v2230 = vand.u32 %v2156, 4294901760
      %2231 = vmatpush1.msra.mxu0 %v2230
      %2232 = vmatprep.subr.mxu0 0.0
      %2233 = vmatpush2.msra.mxu0 0.0
      %2234 = vmatprep.subr.mxu0 0.0
      %2235 = vmatpush2.msra.mxu0 0.0
      %2236 = vmatprep.subr.mxu0 0.0
      %2237 = vmatpush2.msra.mxu0 0.0
      %2238 = vmatprep.subr.mxu0 0.0
      %2239 = vmatpush2.msra.mxu0 0.0
      %2240 = vmatprep.subr.mxu0 0.0
      %2241 = vmatpush2.msra.mxu0 0.0
      %2242 = vmatprep.subr.mxu0 0.0
      %2243 = vmatpush2.msra.mxu0 0.0
      %2244 = vmatprep.subr.mxu0 0.0
      %2245 = vmatpush2.msra.mxu0 0.0
      %2246 = vmatprep.subr.mxu0 0.0
      %2247 = vmatpush2.msra.mxu0 0.0
      %2248 = vmatprep.subr.mxu0 0.0
      %2249 = vmatpush2.msra.mxu0 0.0
      %2250 = vmatprep.subr.mxu0 0.0
      %2251 = vmatpush2.msra.mxu0 0.0
      %2252 = vmatprep.subr.mxu0 0.0
      %2253 = vmatpush2.msra.mxu0 0.0
      %2254 = vmatprep.subr.mxu0 0.0
      %2255 = vmatpush2.msra.mxu0 0.0
      %2256 = vmatprep.subr.mxu0 0.0
      %2257 = vmatpush2.msra.mxu0 0.0
      %2258 = vmatprep.subr.mxu0 0.0
      %2259 = vmatpush2.msra.mxu0 0.0
      %2260 = vmatprep.subr.mxu0 0.0
      %2261 = vmatpush2.msra.mxu0 0.0
      %2262 = vmatprep.subr.mxu0 0.0
      %2263 = vmatpush2.msra.mxu0 0.0
      %2264 = vmatprep.mubr.f32.mxu0 0.0
      %v2265 = vand.u32 %v2182, 4294901760
      %v2266 = vsub.f32 %v2182, %v2265
      %v2267 = vand.u32 %v2266, 4294901760
      %v2268 = vsub.f32 %v2266, %v2267
      %v2269 = vand.u32 %v2268, 4294901760
      %2270 = vmatmul.mubr.f32.gmra.mxu0 %v2269
      %v2271 = vpop.f32.mrf.mxu0
      %v2272 = vadd.f32 0.0, %v2271
      %v2273 = vpop.f32.mrf.mxu0
      %2274 = vmatprep.mubr.f32.mxu0 0.0
      %v2275 = vand.u32 %v2184, 4294901760
      %v2276 = vsub.f32 %v2184, %v2275
      %v2277 = vand.u32 %v2276, 4294901760
      %v2278 = vsub.f32 %v2276, %v2277
      %v2279 = vand.u32 %v2278, 4294901760
      %2280 = vmatmul.mubr.f32.gmra.mxu0 %v2279
      %v2281 = vpop.f32.mrf.mxu0
      %v2282 = vadd.f32 0.0, %v2281
      %v2283 = vpop.f32.mrf.mxu0
      %2284 = vmatprep.mubr.f32.mxu0 0.0
      %v2285 = vand.u32 %v2186, 4294901760
      %v2286 = vsub.f32 %v2186, %v2285
      %v2287 = vand.u32 %v2286, 4294901760
      %v2288 = vsub.f32 %v2286, %v2287
      %v2289 = vand.u32 %v2288, 4294901760
      %2290 = vmatmul.mubr.f32.gmra.mxu0 %v2289
      %v2291 = vpop.f32.mrf.mxu0
      %v2292 = vadd.f32 0.0, %v2291
      %v2293 = vpop.f32.mrf.mxu0
      %2294 = vmatprep.mubr.f32.mxu0 0.0
      %v2295 = vand.u32 %v2188, 4294901760
      %v2296 = vsub.f32 %v2188, %v2295
      %v2297 = vand.u32 %v2296, 4294901760
      %v2298 = vsub.f32 %v2296, %v2297
      %v2299 = vand.u32 %v2298, 4294901760
      %2300 = vmatmul.mubr.f32.gmra.mxu0 %v2299
      %v2301 = vpop.f32.mrf.mxu0
      %v2302 = vadd.f32 0.0, %v2301
      %v2303 = vpop.f32.mrf.mxu0
      %2304 = vmatprep.mubr.f32.mxu0 0.0
      %v2305 = vand.u32 %v2190, 4294901760
      %v2306 = vsub.f32 %v2190, %v2305
      %v2307 = vand.u32 %v2306, 4294901760
      %v2308 = vsub.f32 %v2306, %v2307
      %v2309 = vand.u32 %v2308, 4294901760
      %2310 = vmatmul.mubr.f32.gmra.mxu0 %v2309
      %v2311 = vpop.f32.mrf.mxu0
      %v2312 = vadd.f32 0.0, %v2311
      %v2313 = vpop.f32.mrf.mxu0
      %2314 = vmatprep.mubr.f32.mxu0 0.0
      %v2315 = vand.u32 %v2192, 4294901760
      %v2316 = vsub.f32 %v2192, %v2315
      %v2317 = vand.u32 %v2316, 4294901760
      %v2318 = vsub.f32 %v2316, %v2317
      %v2319 = vand.u32 %v2318, 4294901760
      %2320 = vmatmul.mubr.f32.gmra.mxu0 %v2319
      %v2321 = vpop.f32.mrf.mxu0
      %v2322 = vadd.f32 0.0, %v2321
      %v2323 = vpop.f32.mrf.mxu0
      %2324 = vmatprep.mubr.f32.mxu0 0.0
      %v2325 = vand.u32 %v2194, 4294901760
      %v2326 = vsub.f32 %v2194, %v2325
      %v2327 = vand.u32 %v2326, 4294901760
      %v2328 = vsub.f32 %v2326, %v2327
      %v2329 = vand.u32 %v2328, 4294901760
      %2330 = vmatmul.mubr.f32.gmra.mxu0 %v2329
      %v2331 = vpop.f32.mrf.mxu0
      %v2332 = vadd.f32 0.0, %v2331
      %v2333 = vpop.f32.mrf.mxu0
      %2334 = vmatprep.mubr.f32.mxu0 0.0
      %v2335 = vand.u32 %v2196, 4294901760
      %v2336 = vsub.f32 %v2196, %v2335
      %v2337 = vand.u32 %v2336, 4294901760
      %v2338 = vsub.f32 %v2336, %v2337
      %v2339 = vand.u32 %v2338, 4294901760
      %2340 = vmatmul.mubr.f32.gmra.mxu0 %v2339
      %v2341 = vpop.f32.mrf.mxu0
      %v2342 = vadd.f32 0.0, %v2341
      %v2343 = vpop.f32.mrf.mxu0
      %2344 = vdwg.mxu0
      %2345 = vmatprep.subr.mxu0 0.0
      %2346 = vmatpush1.msra.mxu0 0.0
      %2347 = vmatprep.subr.mxu0 0.0
      %2348 = vmatpush1.msra.mxu0 0.0
      %2349 = vmatprep.subr.mxu0 0.0
      %2350 = vmatpush1.msra.mxu0 0.0
      %2351 = vmatprep.subr.mxu0 0.0
      %2352 = vmatpush1.msra.mxu0 0.0
      %2353 = vmatprep.subr.mxu0 0.0
      %2354 = vmatpush1.msra.mxu0 0.0
      %2355 = vmatprep.subr.mxu0 0.0
      %2356 = vmatpush1.msra.mxu0 0.0
      %2357 = vmatprep.subr.mxu0 0.0
      %2358 = vmatpush1.msra.mxu0 0.0
      %2359 = vmatprep.subr.mxu0 0.0
      %2360 = vmatpush1.msra.mxu0 0.0
      %2361 = vmatprep.subr.mxu0 0.0
      %2362 = vmatpush1.msra.mxu0 0.0
      %2363 = vmatprep.subr.mxu0 0.0
      %2364 = vmatpush1.msra.mxu0 0.0
      %2365 = vmatprep.subr.mxu0 0.0
      %2366 = vmatpush1.msra.mxu0 0.0
      %2367 = vmatprep.subr.mxu0 0.0
      %2368 = vmatpush1.msra.mxu0 0.0
      %2369 = vmatprep.subr.mxu0 0.0
      %2370 = vmatpush1.msra.mxu0 0.0
      %2371 = vmatprep.subr.mxu0 0.0
      %2372 = vmatpush1.msra.mxu0 0.0
      %2373 = vmatprep.subr.mxu0 0.0
      %v2374 = vand.u32 %v2157, 4294901760
      %v2375 = vsub.f32 %v2157, %v2374
      %v2376 = vand.u32 %v2375, 4294901760
      %v2377 = vsub.f32 %v2375, %v2376
      %v2378 = vand.u32 %v2377, 4294901760
      %2379 = vmatpush1.msra.mxu0 %v2378
      %2380 = vmatprep.subr.mxu0 0.0
      %v2381 = vand.u32 %v2156, 4294901760
      %v2382 = vsub.f32 %v2156, %v2381
      %v2383 = vand.u32 %v2382, 4294901760
      %v2384 = vsub.f32 %v2382, %v2383
      %v2385 = vand.u32 %v2384, 4294901760
      %2386 = vmatpush1.msra.mxu0 %v2385
      %2387 = vmatprep.subr.mxu0 0.0
      %2388 = vmatpush2.msra.mxu0 0.0
      %2389 = vmatprep.subr.mxu0 0.0
      %2390 = vmatpush2.msra.mxu0 0.0
      %2391 = vmatprep.subr.mxu0 0.0
      %2392 = vmatpush2.msra.mxu0 0.0
      %2393 = vmatprep.subr.mxu0 0.0
      %2394 = vmatpush2.msra.mxu0 0.0
      %2395 = vmatprep.subr.mxu0 0.0
      %2396 = vmatpush2.msra.mxu0 0.0
      %2397 = vmatprep.subr.mxu0 0.0
      %2398 = vmatpush2.msra.mxu0 0.0
      %2399 = vmatprep.subr.mxu0 0.0
      %2400 = vmatpush2.msra.mxu0 0.0
      %2401 = vmatprep.subr.mxu0 0.0
      %2402 = vmatpush2.msra.mxu0 0.0
      %2403 = vmatprep.subr.mxu0 0.0
      %2404 = vmatpush2.msra.mxu0 0.0
      %2405 = vmatprep.subr.mxu0 0.0
      %2406 = vmatpush2.msra.mxu0 0.0
      %2407 = vmatprep.subr.mxu0 0.0
      %2408 = vmatpush2.msra.mxu0 0.0
      %2409 = vmatprep.subr.mxu0 0.0
      %2410 = vmatpush2.msra.mxu0 0.0
      %2411 = vmatprep.subr.mxu0 0.0
      %2412 = vmatpush2.msra.mxu0 0.0
      %2413 = vmatprep.subr.mxu0 0.0
      %2414 = vmatpush2.msra.mxu0 0.0
      %2415 = vmatprep.subr.mxu0 0.0
      %2416 = vmatpush2.msra.mxu0 0.0
      %2417 = vmatprep.subr.mxu0 0.0
      %2418 = vmatpush2.msra.mxu0 0.0
      %2419 = vmatprep.mubr.f32.mxu0 0.0
      %v2420 = vand.u32 %v2182, 4294901760
      %2421 = vmatmul.mubr.f32.gmra.mxu0 %v2420
      %v2422 = vpop.f32.mrf.mxu0
      %v2423 = vadd.f32 %v2272, %v2422
      %v2424 = vpop.f32.mrf.mxu0
      %2425 = vmatprep.mubr.f32.mxu0 0.0
      %v2426 = vand.u32 %v2184, 4294901760
      %2427 = vmatmul.mubr.f32.gmra.mxu0 %v2426
      %v2428 = vpop.f32.mrf.mxu0
      %v2429 = vadd.f32 %v2282, %v2428
      %v2430 = vpop.f32.mrf.mxu0
      %2431 = vmatprep.mubr.f32.mxu0 0.0
      %v2432 = vand.u32 %v2186, 4294901760
      %2433 = vmatmul.mubr.f32.gmra.mxu0 %v2432
      %v2434 = vpop.f32.mrf.mxu0
      %v2435 = vadd.f32 %v2292, %v2434
      %v2436 = vpop.f32.mrf.mxu0
      %2437 = vmatprep.mubr.f32.mxu0 0.0
      %v2438 = vand.u32 %v2188, 4294901760
      %2439 = vmatmul.mubr.f32.gmra.mxu0 %v2438
      %v2440 = vpop.f32.mrf.mxu0
      %v2441 = vadd.f32 %v2302, %v2440
      %v2442 = vpop.f32.mrf.mxu0
      %2443 = vmatprep.mubr.f32.mxu0 0.0
      %v2444 = vand.u32 %v2190, 4294901760
      %2445 = vmatmul.mubr.f32.gmra.mxu0 %v2444
      %v2446 = vpop.f32.mrf.mxu0
      %v2447 = vadd.f32 %v2312, %v2446
      %v2448 = vpop.f32.mrf.mxu0
      %2449 = vmatprep.mubr.f32.mxu0 0.0
      %v2450 = vand.u32 %v2192, 4294901760
      %2451 = vmatmul.mubr.f32.gmra.mxu0 %v2450
      %v2452 = vpop.f32.mrf.mxu0
      %v2453 = vadd.f32 %v2322, %v2452
      %v2454 = vpop.f32.mrf.mxu0
      %2455 = vmatprep.mubr.f32.mxu0 0.0
      %v2456 = vand.u32 %v2194, 4294901760
      %2457 = vmatmul.mubr.f32.gmra.mxu0 %v2456
      %v2458 = vpop.f32.mrf.mxu0
      %v2459 = vadd.f32 %v2332, %v2458
      %v2460 = vpop.f32.mrf.mxu0
      %2461 = vmatprep.mubr.f32.mxu0 0.0
      %v2462 = vand.u32 %v2196, 4294901760
      %2463 = vmatmul.mubr.f32.gmra.mxu0 %v2462
      %v2464 = vpop.f32.mrf.mxu0
      %v2465 = vadd.f32 %v2342, %v2464
      %v2466 = vpop.f32.mrf.mxu0
      %2467 = vdwg.mxu0
      %2468 = vmatprep.subr.mxu0 0.0
      %2469 = vmatpush1.msra.mxu0 0.0
      %2470 = vmatprep.subr.mxu0 0.0
      %2471 = vmatpush1.msra.mxu0 0.0
      %2472 = vmatprep.subr.mxu0 0.0
      %2473 = vmatpush1.msra.mxu0 0.0
      %2474 = vmatprep.subr.mxu0 0.0
      %2475 = vmatpush1.msra.mxu0 0.0
      %2476 = vmatprep.subr.mxu0 0.0
      %2477 = vmatpush1.msra.mxu0 0.0
      %2478 = vmatprep.subr.mxu0 0.0
      %2479 = vmatpush1.msra.mxu0 0.0
      %2480 = vmatprep.subr.mxu0 0.0
      %2481 = vmatpush1.msra.mxu0 0.0
      %2482 = vmatprep.subr.mxu0 0.0
      %2483 = vmatpush1.msra.mxu0 0.0
      %2484 = vmatprep.subr.mxu0 0.0
      %2485 = vmatpush1.msra.mxu0 0.0
      %2486 = vmatprep.subr.mxu0 0.0
      %2487 = vmatpush1.msra.mxu0 0.0
      %2488 = vmatprep.subr.mxu0 0.0
      %2489 = vmatpush1.msra.mxu0 0.0
      %2490 = vmatprep.subr.mxu0 0.0
      %2491 = vmatpush1.msra.mxu0 0.0
      %2492 = vmatprep.subr.mxu0 0.0
      %2493 = vmatpush1.msra.mxu0 0.0
      %2494 = vmatprep.subr.mxu0 0.0
      %2495 = vmatpush1.msra.mxu0 0.0
      %2496 = vmatprep.subr.mxu0 0.0
      %v2497 = vand.u32 %v2157, 4294901760
      %v2498 = vsub.f32 %v2157, %v2497
      %2499 = vmatpush1.msra.mxu0 %v2498
      %2500 = vmatprep.subr.mxu0 0.0
      %v2501 = vand.u32 %v2156, 4294901760
      %v2502 = vsub.f32 %v2156, %v2501
      %2503 = vmatpush1.msra.mxu0 %v2502
      %2504 = vmatprep.subr.mxu0 0.0
      %2505 = vmatpush2.msra.mxu0 0.0
      %2506 = vmatprep.subr.mxu0 0.0
      %2507 = vmatpush2.msra.mxu0 0.0
      %2508 = vmatprep.subr.mxu0 0.0
      %2509 = vmatpush2.msra.mxu0 0.0
      %2510 = vmatprep.subr.mxu0 0.0
      %2511 = vmatpush2.msra.mxu0 0.0
      %2512 = vmatprep.subr.mxu0 0.0
      %2513 = vmatpush2.msra.mxu0 0.0
      %2514 = vmatprep.subr.mxu0 0.0
      %2515 = vmatpush2.msra.mxu0 0.0
      %2516 = vmatprep.subr.mxu0 0.0
      %2517 = vmatpush2.msra.mxu0 0.0
      %2518 = vmatprep.subr.mxu0 0.0
      %2519 = vmatpush2.msra.mxu0 0.0
      %2520 = vmatprep.subr.mxu0 0.0
      %2521 = vmatpush2.msra.mxu0 0.0
      %2522 = vmatprep.subr.mxu0 0.0
      %2523 = vmatpush2.msra.mxu0 0.0
      %2524 = vmatprep.subr.mxu0 0.0
      %2525 = vmatpush2.msra.mxu0 0.0
      %2526 = vmatprep.subr.mxu0 0.0
      %2527 = vmatpush2.msra.mxu0 0.0
      %2528 = vmatprep.subr.mxu0 0.0
      %2529 = vmatpush2.msra.mxu0 0.0
      %2530 = vmatprep.subr.mxu0 0.0
      %2531 = vmatpush2.msra.mxu0 0.0
      %2532 = vmatprep.subr.mxu0 0.0
      %2533 = vmatpush2.msra.mxu0 0.0
      %2534 = vmatprep.subr.mxu0 0.0
      %2535 = vmatpush2.msra.mxu0 0.0
      %2536 = vmatprep.mubr.f32.mxu0 0.0
      %v2537 = vand.u32 %v2182, 4294901760
      %v2538 = vsub.f32 %v2182, %v2537
      %2539 = vmatmul.mubr.f32.gmra.mxu0 %v2538
      %v2540 = vpop.f32.mrf.mxu0
      %v2541 = vadd.f32 %v2423, %v2540
      %v2542 = vpop.f32.mrf.mxu0
      %2543 = vmatprep.mubr.f32.mxu0 0.0
      %v2544 = vand.u32 %v2184, 4294901760
      %v2545 = vsub.f32 %v2184, %v2544
      %2546 = vmatmul.mubr.f32.gmra.mxu0 %v2545
      %v2547 = vpop.f32.mrf.mxu0
      %v2548 = vadd.f32 %v2429, %v2547
      %v2549 = vpop.f32.mrf.mxu0
      %2550 = vmatprep.mubr.f32.mxu0 0.0
      %v2551 = vand.u32 %v2186, 4294901760
      %v2552 = vsub.f32 %v2186, %v2551
      %2553 = vmatmul.mubr.f32.gmra.mxu0 %v2552
      %v2554 = vpop.f32.mrf.mxu0
      %v2555 = vadd.f32 %v2435, %v2554
      %v2556 = vpop.f32.mrf.mxu0
      %2557 = vmatprep.mubr.f32.mxu0 0.0
      %v2558 = vand.u32 %v2188, 4294901760
      %v2559 = vsub.f32 %v2188, %v2558
      %2560 = vmatmul.mubr.f32.gmra.mxu0 %v2559
      %v2561 = vpop.f32.mrf.mxu0
      %v2562 = vadd.f32 %v2441, %v2561
      %v2563 = vpop.f32.mrf.mxu0
      %2564 = vmatprep.mubr.f32.mxu0 0.0
      %v2565 = vand.u32 %v2190, 4294901760
      %v2566 = vsub.f32 %v2190, %v2565
      %2567 = vmatmul.mubr.f32.gmra.mxu0 %v2566
      %v2568 = vpop.f32.mrf.mxu0
      %v2569 = vadd.f32 %v2447, %v2568
      %v2570 = vpop.f32.mrf.mxu0
      %2571 = vmatprep.mubr.f32.mxu0 0.0
      %v2572 = vand.u32 %v2192, 4294901760
      %v2573 = vsub.f32 %v2192, %v2572
      %2574 = vmatmul.mubr.f32.gmra.mxu0 %v2573
      %v2575 = vpop.f32.mrf.mxu0
      %v2576 = vadd.f32 %v2453, %v2575
      %v2577 = vpop.f32.mrf.mxu0
      %2578 = vmatprep.mubr.f32.mxu0 0.0
      %v2579 = vand.u32 %v2194, 4294901760
      %v2580 = vsub.f32 %v2194, %v2579
      %2581 = vmatmul.mubr.f32.gmra.mxu0 %v2580
      %v2582 = vpop.f32.mrf.mxu0
      %v2583 = vadd.f32 %v2459, %v2582
      %v2584 = vpop.f32.mrf.mxu0
      %2585 = vmatprep.mubr.f32.mxu0 0.0
      %v2586 = vand.u32 %v2196, 4294901760
      %v2587 = vsub.f32 %v2196, %v2586
      %2588 = vmatmul.mubr.f32.gmra.mxu0 %v2587
      %v2589 = vpop.f32.mrf.mxu0
      %v2590 = vadd.f32 %v2465, %v2589
      %v2591 = vpop.f32.mrf.mxu0
      %2592 = vdwg.mxu0
      %2593 = vmatprep.subr.mxu0 0.0
      %2594 = vmatpush1.msra.mxu0 0.0
      %2595 = vmatprep.subr.mxu0 0.0
      %2596 = vmatpush1.msra.mxu0 0.0
      %2597 = vmatprep.subr.mxu0 0.0
      %2598 = vmatpush1.msra.mxu0 0.0
      %2599 = vmatprep.subr.mxu0 0.0
      %2600 = vmatpush1.msra.mxu0 0.0
      %2601 = vmatprep.subr.mxu0 0.0
      %2602 = vmatpush1.msra.mxu0 0.0
      %2603 = vmatprep.subr.mxu0 0.0
      %2604 = vmatpush1.msra.mxu0 0.0
      %2605 = vmatprep.subr.mxu0 0.0
      %2606 = vmatpush1.msra.mxu0 0.0
      %2607 = vmatprep.subr.mxu0 0.0
      %2608 = vmatpush1.msra.mxu0 0.0
      %2609 = vmatprep.subr.mxu0 0.0
      %2610 = vmatpush1.msra.mxu0 0.0
      %2611 = vmatprep.subr.mxu0 0.0
      %2612 = vmatpush1.msra.mxu0 0.0
      %2613 = vmatprep.subr.mxu0 0.0
      %2614 = vmatpush1.msra.mxu0 0.0
      %2615 = vmatprep.subr.mxu0 0.0
      %2616 = vmatpush1.msra.mxu0 0.0
      %2617 = vmatprep.subr.mxu0 0.0
      %2618 = vmatpush1.msra.mxu0 0.0
      %2619 = vmatprep.subr.mxu0 0.0
      %2620 = vmatpush1.msra.mxu0 0.0
      %2621 = vmatprep.subr.mxu0 0.0
      %v2622 = vand.u32 %v2157, 4294901760
      %2623 = vmatpush1.msra.mxu0 %v2622
      %2624 = vmatprep.subr.mxu0 0.0
      %v2625 = vand.u32 %v2156, 4294901760
      %2626 = vmatpush1.msra.mxu0 %v2625
      %2627 = vmatprep.subr.mxu0 0.0
      %2628 = vmatpush2.msra.mxu0 0.0
      %2629 = vmatprep.subr.mxu0 0.0
      %2630 = vmatpush2.msra.mxu0 0.0
      %2631 = vmatprep.subr.mxu0 0.0
      %2632 = vmatpush2.msra.mxu0 0.0
      %2633 = vmatprep.subr.mxu0 0.0
      %2634 = vmatpush2.msra.mxu0 0.0
      %2635 = vmatprep.subr.mxu0 0.0
      %2636 = vmatpush2.msra.mxu0 0.0
      %2637 = vmatprep.subr.mxu0 0.0
      %2638 = vmatpush2.msra.mxu0 0.0
      %2639 = vmatprep.subr.mxu0 0.0
      %2640 = vmatpush2.msra.mxu0 0.0
      %2641 = vmatprep.subr.mxu0 0.0
      %2642 = vmatpush2.msra.mxu0 0.0
      %2643 = vmatprep.subr.mxu0 0.0
      %2644 = vmatpush2.msra.mxu0 0.0
      %2645 = vmatprep.subr.mxu0 0.0
      %2646 = vmatpush2.msra.mxu0 0.0
      %2647 = vmatprep.subr.mxu0 0.0
      %2648 = vmatpush2.msra.mxu0 0.0
      %2649 = vmatprep.subr.mxu0 0.0
      %2650 = vmatpush2.msra.mxu0 0.0
      %2651 = vmatprep.subr.mxu0 0.0
      %2652 = vmatpush2.msra.mxu0 0.0
      %2653 = vmatprep.subr.mxu0 0.0
      %2654 = vmatpush2.msra.mxu0 0.0
      %2655 = vmatprep.subr.mxu0 0.0
      %2656 = vmatpush2.msra.mxu0 0.0
      %2657 = vmatprep.subr.mxu0 0.0
      %2658 = vmatpush2.msra.mxu0 0.0
      %2659 = vmatprep.mubr.f32.mxu0 0.0
      %v2660 = vand.u32 %v2182, 4294901760
      %v2661 = vsub.f32 %v2182, %v2660
      %v2662 = vand.u32 %v2661, 4294901760
      %2663 = vmatmul.mubr.f32.gmra.mxu0 %v2662
      %v2664 = vpop.f32.mrf.mxu0
      %v2665 = vadd.f32 %v2541, %v2664
      %v2666 = vpop.f32.mrf.mxu0
      %2667 = vmatprep.mubr.f32.mxu0 0.0
      %v2668 = vand.u32 %v2184, 4294901760
      %v2669 = vsub.f32 %v2184, %v2668
      %v2670 = vand.u32 %v2669, 4294901760
      %2671 = vmatmul.mubr.f32.gmra.mxu0 %v2670
      %v2672 = vpop.f32.mrf.mxu0
      %v2673 = vadd.f32 %v2548, %v2672
      %v2674 = vpop.f32.mrf.mxu0
      %2675 = vmatprep.mubr.f32.mxu0 0.0
      %v2676 = vand.u32 %v2186, 4294901760
      %v2677 = vsub.f32 %v2186, %v2676
      %v2678 = vand.u32 %v2677, 4294901760
      %2679 = vmatmul.mubr.f32.gmra.mxu0 %v2678
      %v2680 = vpop.f32.mrf.mxu0
      %v2681 = vadd.f32 %v2555, %v2680
      %v2682 = vpop.f32.mrf.mxu0
      %2683 = vmatprep.mubr.f32.mxu0 0.0
      %v2684 = vand.u32 %v2188, 4294901760
      %v2685 = vsub.f32 %v2188, %v2684
      %v2686 = vand.u32 %v2685, 4294901760
      %2687 = vmatmul.mubr.f32.gmra.mxu0 %v2686
      %v2688 = vpop.f32.mrf.mxu0
      %v2689 = vadd.f32 %v2562, %v2688
      %v2690 = vpop.f32.mrf.mxu0
      %2691 = vmatprep.mubr.f32.mxu0 0.0
      %v2692 = vand.u32 %v2190, 4294901760
      %v2693 = vsub.f32 %v2190, %v2692
      %v2694 = vand.u32 %v2693, 4294901760
      %2695 = vmatmul.mubr.f32.gmra.mxu0 %v2694
      %v2696 = vpop.f32.mrf.mxu0
      %v2697 = vadd.f32 %v2569, %v2696
      %v2698 = vpop.f32.mrf.mxu0
      %2699 = vmatprep.mubr.f32.mxu0 0.0
      %v2700 = vand.u32 %v2192, 4294901760
      %v2701 = vsub.f32 %v2192, %v2700
      %v2702 = vand.u32 %v2701, 4294901760
      %2703 = vmatmul.mubr.f32.gmra.mxu0 %v2702
      %v2704 = vpop.f32.mrf.mxu0
      %v2705 = vadd.f32 %v2576, %v2704
      %v2706 = vpop.f32.mrf.mxu0
      %2707 = vmatprep.mubr.f32.mxu0 0.0
      %v2708 = vand.u32 %v2194, 4294901760
      %v2709 = vsub.f32 %v2194, %v2708
      %v2710 = vand.u32 %v2709, 4294901760
      %2711 = vmatmul.mubr.f32.gmra.mxu0 %v2710
      %v2712 = vpop.f32.mrf.mxu0
      %v2713 = vadd.f32 %v2583, %v2712
      %v2714 = vpop.f32.mrf.mxu0
      %2715 = vmatprep.mubr.f32.mxu0 0.0
      %v2716 = vand.u32 %v2196, 4294901760
      %v2717 = vsub.f32 %v2196, %v2716
      %v2718 = vand.u32 %v2717, 4294901760
      %2719 = vmatmul.mubr.f32.gmra.mxu0 %v2718
      %v2720 = vpop.f32.mrf.mxu0
      %v2721 = vadd.f32 %v2590, %v2720
      %v2722 = vpop.f32.mrf.mxu0
      %2723 = vdwg.mxu0
      %2724 = vmatprep.subr.mxu0 0.0
      %2725 = vmatpush1.msra.mxu0 0.0
      %2726 = vmatprep.subr.mxu0 0.0
      %2727 = vmatpush1.msra.mxu0 0.0
      %2728 = vmatprep.subr.mxu0 0.0
      %2729 = vmatpush1.msra.mxu0 0.0
      %2730 = vmatprep.subr.mxu0 0.0
      %2731 = vmatpush1.msra.mxu0 0.0
      %2732 = vmatprep.subr.mxu0 0.0
      %2733 = vmatpush1.msra.mxu0 0.0
      %2734 = vmatprep.subr.mxu0 0.0
      %2735 = vmatpush1.msra.mxu0 0.0
      %2736 = vmatprep.subr.mxu0 0.0
      %2737 = vmatpush1.msra.mxu0 0.0
      %2738 = vmatprep.subr.mxu0 0.0
      %2739 = vmatpush1.msra.mxu0 0.0
      %2740 = vmatprep.subr.mxu0 0.0
      %2741 = vmatpush1.msra.mxu0 0.0
      %2742 = vmatprep.subr.mxu0 0.0
      %2743 = vmatpush1.msra.mxu0 0.0
      %2744 = vmatprep.subr.mxu0 0.0
      %2745 = vmatpush1.msra.mxu0 0.0
      %2746 = vmatprep.subr.mxu0 0.0
      %2747 = vmatpush1.msra.mxu0 0.0
      %2748 = vmatprep.subr.mxu0 0.0
      %2749 = vmatpush1.msra.mxu0 0.0
      %2750 = vmatprep.subr.mxu0 0.0
      %2751 = vmatpush1.msra.mxu0 0.0
      %2752 = vmatprep.subr.mxu0 0.0
      %v2753 = vand.u32 %v2157, 4294901760
      %v2754 = vsub.f32 %v2157, %v2753
      %v2755 = vand.u32 %v2754, 4294901760
      %2756 = vmatpush1.msra.mxu0 %v2755
      %2757 = vmatprep.subr.mxu0 0.0
      %v2758 = vand.u32 %v2156, 4294901760
      %v2759 = vsub.f32 %v2156, %v2758
      %v2760 = vand.u32 %v2759, 4294901760
      %2761 = vmatpush1.msra.mxu0 %v2760
      %2762 = vmatprep.subr.mxu0 0.0
      %2763 = vmatpush2.msra.mxu0 0.0
      %2764 = vmatprep.subr.mxu0 0.0
      %2765 = vmatpush2.msra.mxu0 0.0
      %2766 = vmatprep.subr.mxu0 0.0
      %2767 = vmatpush2.msra.mxu0 0.0
      %2768 = vmatprep.subr.mxu0 0.0
      %2769 = vmatpush2.msra.mxu0 0.0
      %2770 = vmatprep.subr.mxu0 0.0
      %2771 = vmatpush2.msra.mxu0 0.0
      %2772 = vmatprep.subr.mxu0 0.0
      %2773 = vmatpush2.msra.mxu0 0.0
      %2774 = vmatprep.subr.mxu0 0.0
      %2775 = vmatpush2.msra.mxu0 0.0
      %2776 = vmatprep.subr.mxu0 0.0
      %2777 = vmatpush2.msra.mxu0 0.0
      %2778 = vmatprep.subr.mxu0 0.0
      %2779 = vmatpush2.msra.mxu0 0.0
      %2780 = vmatprep.subr.mxu0 0.0
      %2781 = vmatpush2.msra.mxu0 0.0
      %2782 = vmatprep.subr.mxu0 0.0
      %2783 = vmatpush2.msra.mxu0 0.0
      %2784 = vmatprep.subr.mxu0 0.0
      %2785 = vmatpush2.msra.mxu0 0.0
      %2786 = vmatprep.subr.mxu0 0.0
      %2787 = vmatpush2.msra.mxu0 0.0
      %2788 = vmatprep.subr.mxu0 0.0
      %2789 = vmatpush2.msra.mxu0 0.0
      %2790 = vmatprep.subr.mxu0 0.0
      %2791 = vmatpush2.msra.mxu0 0.0
      %2792 = vmatprep.subr.mxu0 0.0
      %2793 = vmatpush2.msra.mxu0 0.0
      %2794 = vmatprep.mubr.f32.mxu0 0.0
      %v2795 = vand.u32 %v2182, 4294901760
      %2796 = vmatmul.mubr.f32.gmra.mxu0 %v2795
      %v2797 = vpop.f32.mrf.mxu0
      %v2798 = vadd.f32 %v2665, %v2797
      %v2799 = vpop.f32.mrf.mxu0
      %2800 = vmatprep.mubr.f32.mxu0 0.0
      %v2801 = vand.u32 %v2184, 4294901760
      %2802 = vmatmul.mubr.f32.gmra.mxu0 %v2801
      %v2803 = vpop.f32.mrf.mxu0
      %v2804 = vadd.f32 %v2673, %v2803
      %v2805 = vpop.f32.mrf.mxu0
      %2806 = vmatprep.mubr.f32.mxu0 0.0
      %v2807 = vand.u32 %v2186, 4294901760
      %2808 = vmatmul.mubr.f32.gmra.mxu0 %v2807
      %v2809 = vpop.f32.mrf.mxu0
      %v2810 = vadd.f32 %v2681, %v2809
      %v2811 = vpop.f32.mrf.mxu0
      %2812 = vmatprep.mubr.f32.mxu0 0.0
      %v2813 = vand.u32 %v2188, 4294901760
      %2814 = vmatmul.mubr.f32.gmra.mxu0 %v2813
      %v2815 = vpop.f32.mrf.mxu0
      %v2816 = vadd.f32 %v2689, %v2815
      %v2817 = vpop.f32.mrf.mxu0
      %2818 = vmatprep.mubr.f32.mxu0 0.0
      %v2819 = vand.u32 %v2190, 4294901760
      %2820 = vmatmul.mubr.f32.gmra.mxu0 %v2819
      %v2821 = vpop.f32.mrf.mxu0
      %v2822 = vadd.f32 %v2697, %v2821
      %v2823 = vpop.f32.mrf.mxu0
      %2824 = vmatprep.mubr.f32.mxu0 0.0
      %v2825 = vand.u32 %v2192, 4294901760
      %2826 = vmatmul.mubr.f32.gmra.mxu0 %v2825
      %v2827 = vpop.f32.mrf.mxu0
      %v2828 = vadd.f32 %v2705, %v2827
      %v2829 = vpop.f32.mrf.mxu0
      %2830 = vmatprep.mubr.f32.mxu0 0.0
      %v2831 = vand.u32 %v2194, 4294901760
      %2832 = vmatmul.mubr.f32.gmra.mxu0 %v2831
      %v2833 = vpop.f32.mrf.mxu0
      %v2834 = vadd.f32 %v2713, %v2833
      %v2835 = vpop.f32.mrf.mxu0
      %2836 = vmatprep.mubr.f32.mxu0 0.0
      %v2837 = vand.u32 %v2196, 4294901760
      %2838 = vmatmul.mubr.f32.gmra.mxu0 %v2837
      %v2839 = vpop.f32.mrf.mxu0
      %v2840 = vadd.f32 %v2721, %v2839
      %v2841 = vpop.f32.mrf.mxu0
      %2842 = vdwg.mxu0
      %2843 = vmatprep.subr.mxu0 0.0
      %2844 = vmatpush1.msra.mxu0 0.0
      %2845 = vmatprep.subr.mxu0 0.0
      %2846 = vmatpush1.msra.mxu0 0.0
      %2847 = vmatprep.subr.mxu0 0.0
      %2848 = vmatpush1.msra.mxu0 0.0
      %2849 = vmatprep.subr.mxu0 0.0
      %2850 = vmatpush1.msra.mxu0 0.0
      %2851 = vmatprep.subr.mxu0 0.0
      %2852 = vmatpush1.msra.mxu0 0.0
      %2853 = vmatprep.subr.mxu0 0.0
      %2854 = vmatpush1.msra.mxu0 0.0
      %2855 = vmatprep.subr.mxu0 0.0
      %2856 = vmatpush1.msra.mxu0 0.0
      %2857 = vmatprep.subr.mxu0 0.0
      %2858 = vmatpush1.msra.mxu0 0.0
      %2859 = vmatprep.subr.mxu0 0.0
      %2860 = vmatpush1.msra.mxu0 0.0
      %2861 = vmatprep.subr.mxu0 0.0
      %2862 = vmatpush1.msra.mxu0 0.0
      %2863 = vmatprep.subr.mxu0 0.0
      %2864 = vmatpush1.msra.mxu0 0.0
      %2865 = vmatprep.subr.mxu0 0.0
      %2866 = vmatpush1.msra.mxu0 0.0
      %2867 = vmatprep.subr.mxu0 0.0
      %2868 = vmatpush1.msra.mxu0 0.0
      %2869 = vmatprep.subr.mxu0 0.0
      %2870 = vmatpush1.msra.mxu0 0.0
      %2871 = vmatprep.subr.mxu0 0.0
      %v2872 = vand.u32 %v2157, 4294901760
      %2873 = vmatpush1.msra.mxu0 %v2872
      %2874 = vmatprep.subr.mxu0 0.0
      %v2875 = vand.u32 %v2156, 4294901760
      %2876 = vmatpush1.msra.mxu0 %v2875
      %2877 = vmatprep.subr.mxu0 0.0
      %2878 = vmatpush2.msra.mxu0 0.0
      %2879 = vmatprep.subr.mxu0 0.0
      %2880 = vmatpush2.msra.mxu0 0.0
      %2881 = vmatprep.subr.mxu0 0.0
      %2882 = vmatpush2.msra.mxu0 0.0
      %2883 = vmatprep.subr.mxu0 0.0
      %2884 = vmatpush2.msra.mxu0 0.0
      %2885 = vmatprep.subr.mxu0 0.0
      %2886 = vmatpush2.msra.mxu0 0.0
      %2887 = vmatprep.subr.mxu0 0.0
      %2888 = vmatpush2.msra.mxu0 0.0
      %2889 = vmatprep.subr.mxu0 0.0
      %2890 = vmatpush2.msra.mxu0 0.0
      %2891 = vmatprep.subr.mxu0 0.0
      %2892 = vmatpush2.msra.mxu0 0.0
      %2893 = vmatprep.subr.mxu0 0.0
      %2894 = vmatpush2.msra.mxu0 0.0
      %2895 = vmatprep.subr.mxu0 0.0
      %2896 = vmatpush2.msra.mxu0 0.0
      %2897 = vmatprep.subr.mxu0 0.0
      %2898 = vmatpush2.msra.mxu0 0.0
      %2899 = vmatprep.subr.mxu0 0.0
      %2900 = vmatpush2.msra.mxu0 0.0
      %2901 = vmatprep.subr.mxu0 0.0
      %2902 = vmatpush2.msra.mxu0 0.0
      %2903 = vmatprep.subr.mxu0 0.0
      %2904 = vmatpush2.msra.mxu0 0.0
      %2905 = vmatprep.subr.mxu0 0.0
      %2906 = vmatpush2.msra.mxu0 0.0
      %2907 = vmatprep.subr.mxu0 0.0
      %2908 = vmatpush2.msra.mxu0 0.0
      %2909 = vmatprep.mubr.f32.mxu0 0.0
      %v2910 = vand.u32 %v2182, 4294901760
      %2911 = vmatmul.mubr.f32.gmra.mxu0 %v2910
      %v2912 = vpop.f32.mrf.mxu0
      %v2913 = vadd.f32 %v2798, %v2912
      %v2914 = vpop.f32.mrf.mxu0
      %2915 = vmatprep.mubr.f32.mxu0 0.0
      %v2916 = vand.u32 %v2184, 4294901760
      %2917 = vmatmul.mubr.f32.gmra.mxu0 %v2916
      %v2918 = vpop.f32.mrf.mxu0
      %v2919 = vadd.f32 %v2804, %v2918
      %v2920 = vpop.f32.mrf.mxu0
      %2921 = vmatprep.mubr.f32.mxu0 0.0
      %v2922 = vand.u32 %v2186, 4294901760
      %2923 = vmatmul.mubr.f32.gmra.mxu0 %v2922
      %v2924 = vpop.f32.mrf.mxu0
      %v2925 = vadd.f32 %v2810, %v2924
      %v2926 = vpop.f32.mrf.mxu0
      %2927 = vmatprep.mubr.f32.mxu0 0.0
      %v2928 = vand.u32 %v2188, 4294901760
      %2929 = vmatmul.mubr.f32.gmra.mxu0 %v2928
      %v2930 = vpop.f32.mrf.mxu0
      %v2931 = vadd.f32 %v2816, %v2930
      %v2932 = vpop.f32.mrf.mxu0
      %2933 = vmatprep.mubr.f32.mxu0 0.0
      %v2934 = vand.u32 %v2190, 4294901760
      %2935 = vmatmul.mubr.f32.gmra.mxu0 %v2934
      %v2936 = vpop.f32.mrf.mxu0
      %v2937 = vadd.f32 %v2822, %v2936
      %v2938 = vpop.f32.mrf.mxu0
      %2939 = vmatprep.mubr.f32.mxu0 0.0
      %v2940 = vand.u32 %v2192, 4294901760
      %2941 = vmatmul.mubr.f32.gmra.mxu0 %v2940
      %v2942 = vpop.f32.mrf.mxu0
      %v2943 = vadd.f32 %v2828, %v2942
      %v2944 = vpop.f32.mrf.mxu0
      %2945 = vmatprep.mubr.f32.mxu0 0.0
      %v2946 = vand.u32 %v2194, 4294901760
      %2947 = vmatmul.mubr.f32.gmra.mxu0 %v2946
      %v2948 = vpop.f32.mrf.mxu0
      %v2949 = vadd.f32 %v2834, %v2948
      %v2950 = vpop.f32.mrf.mxu0
      %2951 = vmatprep.mubr.f32.mxu0 0.0
      %v2952 = vand.u32 %v2196, 4294901760
      %2953 = vmatmul.mubr.f32.gmra.mxu0 %v2952
      %v2954 = vpop.f32.mrf.mxu0
      %v2955 = vadd.f32 %v2840, %v2954
      %v2956 = vpop.f32.mrf.mxu0
      %2957 = vdwg.mxu0
      %s2958 = scalar_lea.vmem %s257, 64
      %v2959 = vld [vmem:[%s2958] sm:$0x1]
      %v2960 = vld [vmem:[%s2958 + $0x1] sm:$0x1]
      %v2961 = vld [vmem:[%s2958 + $0x2] sm:$0x1]
      %v2962 = vld [vmem:[%s2958 + $0x3] sm:$0x1]
      %v2963 = vld [vmem:[%s2958 + $0x4] sm:$0x1]
      %v2964 = vld [vmem:[%s2958 + $0x5] sm:$0x1]
      %v2965 = vld [vmem:[%s2958 + $0x6] sm:$0x1]
      %v2966 = vld [vmem:[%s2958 + $0x7] sm:$0x1]
      %v2975 = vlaneseq
      %v2976 = vshrl.u32 %v2975, 7
      %v2977 = vsub.s32 0, %v2976
      %v2978 = vrot.slane %v2959, %v2977
      %v2979 = vlaneseq
      %v2980 = vshrl.u32 %v2979, 7
      %v2981 = vsub.s32 0, %v2980
      %v2982 = vrot.slane %v2960, %v2981
      %v2983 = vlaneseq
      %v2984 = vshrl.u32 %v2983, 7
      %v2985 = vsub.s32 0, %v2984
      %v2986 = vrot.slane %v2961, %v2985
      %v2987 = vlaneseq
      %v2988 = vshrl.u32 %v2987, 7
      %v2989 = vsub.s32 0, %v2988
      %v2990 = vrot.slane %v2962, %v2989
      %v2991 = vlaneseq
      %v2992 = vshrl.u32 %v2991, 7
      %v2993 = vsub.s32 0, %v2992
      %v2994 = vrot.slane %v2963, %v2993
      %v2995 = vlaneseq
      %v2996 = vshrl.u32 %v2995, 7
      %v2997 = vsub.s32 0, %v2996
      %v2998 = vrot.slane %v2964, %v2997
      %v2999 = vlaneseq
      %v3000 = vshrl.u32 %v2999, 7
      %v3001 = vsub.s32 0, %v3000
      %v3002 = vrot.slane %v2965, %v3001
      %v3003 = vlaneseq
      %v3004 = vshrl.u32 %v3003, 7
      %v3005 = vsub.s32 0, %v3004
      %v3006 = vrot.slane %v2966, %v3005
      %3007 = vset.pattern.permute.xlu0 0
      %3008 = vperm.xlu0 %3007, %v2978
      %v3009 = vpop.permute.xlu0 %3008
      %3011 = vset.pattern.permute.xlu0 0
      %3012 = vperm.xlu0 %3011, %v2982
      %v3013 = vpop.permute.xlu0 %3012
      %3015 = vset.pattern.permute.xlu0 0
      %3016 = vperm.xlu0 %3015, %v2986
      %v3017 = vpop.permute.xlu0 %3016
      %3019 = vset.pattern.permute.xlu0 0
      %3020 = vperm.xlu0 %3019, %v2990
      %v3021 = vpop.permute.xlu0 %3020
      %3023 = vset.pattern.permute.xlu0 0
      %3024 = vperm.xlu0 %3023, %v2994
      %v3025 = vpop.permute.xlu0 %3024
      %3027 = vset.pattern.permute.xlu0 0
      %3028 = vperm.xlu0 %3027, %v2998
      %v3029 = vpop.permute.xlu0 %3028
      %3031 = vset.pattern.permute.xlu0 0
      %3032 = vperm.xlu0 %3031, %v3002
      %v3033 = vpop.permute.xlu0 %3032
      %3035 = vset.pattern.permute.xlu0 0
      %3036 = vperm.xlu0 %3035, %v3006
      %v3037 = vpop.permute.xlu0 %3036
      %v3039 = vmul.f32 %v3009, %v2913
      %v3040 = vmul.f32 %v3009, %v2919
      %v3041 = vmul.f32 %v3013, %v2913
      %v3042 = vmul.f32 %v3013, %v2919
      %v3043 = vmul.f32 %v3017, %v2913
      %v3044 = vmul.f32 %v3017, %v2919
      %v3045 = vmul.f32 %v3021, %v2913
      %v3046 = vmul.f32 %v3021, %v2919
      %v3047 = vmul.f32 %v3025, %v2913
      %v3048 = vmul.f32 %v3025, %v2919
      %v3049 = vmul.f32 %v3029, %v2913
      %v3050 = vmul.f32 %v3029, %v2919
      %v3051 = vmul.f32 %v3033, %v2913
      %v3052 = vmul.f32 %v3033, %v2919
      %v3053 = vmul.f32 %v3037, %v2913
      %v3054 = vmul.f32 %v3037, %v2919
      %v3055 = vadd.f32 %v3039, 0.0
      %v3056 = vadd.f32 %v3040, 0.0
      %v3057 = vadd.f32 %v3041, 0.0
      %v3058 = vadd.f32 %v3042, 0.0
      %v3059 = vadd.f32 %v3043, 0.0
      %v3060 = vadd.f32 %v3044, 0.0
      %v3061 = vadd.f32 %v3045, 0.0
      %v3062 = vadd.f32 %v3046, 0.0
      %v3063 = vadd.f32 %v3047, 0.0
      %v3064 = vadd.f32 %v3048, 0.0
      %v3065 = vadd.f32 %v3049, 0.0
      %v3066 = vadd.f32 %v3050, 0.0
      %v3067 = vadd.f32 %v3051, 0.0
      %v3068 = vadd.f32 %v3052, 0.0
      %v3069 = vadd.f32 %v3053, 0.0
      %v3070 = vadd.f32 %v3054, 0.0
      %s3071 = scalar_lea.vmem %s257, 72
      %v3072 = vld [vmem:[%s3071] sm:$0x1]
      %v3073 = vld [vmem:[%s3071 + $0x1] sm:$0x1]
      %v3074 = vld [vmem:[%s3071 + $0x2] sm:$0x1]
      %v3075 = vld [vmem:[%s3071 + $0x3] sm:$0x1]
      %v3076 = vld [vmem:[%s3071 + $0x4] sm:$0x1]
      %v3077 = vld [vmem:[%s3071 + $0x5] sm:$0x1]
      %v3078 = vld [vmem:[%s3071 + $0x6] sm:$0x1]
      %v3079 = vld [vmem:[%s3071 + $0x7] sm:$0x1]
      %v3088 = vlaneseq
      %v3089 = vshrl.u32 %v3088, 7
      %v3090 = vsub.s32 0, %v3089
      %v3091 = vrot.slane %v3072, %v3090
      %v3092 = vlaneseq
      %v3093 = vshrl.u32 %v3092, 7
      %v3094 = vsub.s32 0, %v3093
      %v3095 = vrot.slane %v3073, %v3094
      %v3096 = vlaneseq
      %v3097 = vshrl.u32 %v3096, 7
      %v3098 = vsub.s32 0, %v3097
      %v3099 = vrot.slane %v3074, %v3098
      %v3100 = vlaneseq
      %v3101 = vshrl.u32 %v3100, 7
      %v3102 = vsub.s32 0, %v3101
      %v3103 = vrot.slane %v3075, %v3102
      %v3104 = vlaneseq
      %v3105 = vshrl.u32 %v3104, 7
      %v3106 = vsub.s32 0, %v3105
      %v3107 = vrot.slane %v3076, %v3106
      %v3108 = vlaneseq
      %v3109 = vshrl.u32 %v3108, 7
      %v3110 = vsub.s32 0, %v3109
      %v3111 = vrot.slane %v3077, %v3110
      %v3112 = vlaneseq
      %v3113 = vshrl.u32 %v3112, 7
      %v3114 = vsub.s32 0, %v3113
      %v3115 = vrot.slane %v3078, %v3114
      %v3116 = vlaneseq
      %v3117 = vshrl.u32 %v3116, 7
      %v3118 = vsub.s32 0, %v3117
      %v3119 = vrot.slane %v3079, %v3118
      %3120 = vset.pattern.permute.xlu0 0
      %3121 = vperm.xlu0 %3120, %v3091
      %v3122 = vpop.permute.xlu0 %3121
      %3124 = vset.pattern.permute.xlu0 0
      %3125 = vperm.xlu0 %3124, %v3095
      %v3126 = vpop.permute.xlu0 %3125
      %3128 = vset.pattern.permute.xlu0 0
      %3129 = vperm.xlu0 %3128, %v3099
      %v3130 = vpop.permute.xlu0 %3129
      %3132 = vset.pattern.permute.xlu0 0
      %3133 = vperm.xlu0 %3132, %v3103
      %v3134 = vpop.permute.xlu0 %3133
      %3136 = vset.pattern.permute.xlu0 0
      %3137 = vperm.xlu0 %3136, %v3107
      %v3138 = vpop.permute.xlu0 %3137
      %3140 = vset.pattern.permute.xlu0 0
      %3141 = vperm.xlu0 %3140, %v3111
      %v3142 = vpop.permute.xlu0 %3141
      %3144 = vset.pattern.permute.xlu0 0
      %3145 = vperm.xlu0 %3144, %v3115
      %v3146 = vpop.permute.xlu0 %3145
      %3148 = vset.pattern.permute.xlu0 0
      %3149 = vperm.xlu0 %3148, %v3119
      %v3150 = vpop.permute.xlu0 %3149
      %v3152 = vmul.f32 %v3122, %v2925
      %v3153 = vmul.f32 %v3122, %v2931
      %v3154 = vmul.f32 %v3126, %v2925
      %v3155 = vmul.f32 %v3126, %v2931
      %v3156 = vmul.f32 %v3130, %v2925
      %v3157 = vmul.f32 %v3130, %v2931
      %v3158 = vmul.f32 %v3134, %v2925
      %v3159 = vmul.f32 %v3134, %v2931
      %v3160 = vmul.f32 %v3138, %v2925
      %v3161 = vmul.f32 %v3138, %v2931
      %v3162 = vmul.f32 %v3142, %v2925
      %v3163 = vmul.f32 %v3142, %v2931
      %v3164 = vmul.f32 %v3146, %v2925
      %v3165 = vmul.f32 %v3146, %v2931
      %v3166 = vmul.f32 %v3150, %v2925
      %v3167 = vmul.f32 %v3150, %v2931
      %v3168 = vadd.f32 %v3055, %v3152
      %v3169 = vadd.f32 %v3056, %v3153
      %v3170 = vadd.f32 %v3057, %v3154
      %v3171 = vadd.f32 %v3058, %v3155
      %v3172 = vadd.f32 %v3059, %v3156
      %v3173 = vadd.f32 %v3060, %v3157
      %v3174 = vadd.f32 %v3061, %v3158
      %v3175 = vadd.f32 %v3062, %v3159
      %v3176 = vadd.f32 %v3063, %v3160
      %v3177 = vadd.f32 %v3064, %v3161
      %v3178 = vadd.f32 %v3065, %v3162
      %v3179 = vadd.f32 %v3066, %v3163
      %v3180 = vadd.f32 %v3067, %v3164
      %v3181 = vadd.f32 %v3068, %v3165
      %v3182 = vadd.f32 %v3069, %v3166
      %v3183 = vadd.f32 %v3070, %v3167
      %s3184 = scalar_lea.vmem %s257, 80
      %v3185 = vld [vmem:[%s3184] sm:$0x1]
      %v3186 = vld [vmem:[%s3184 + $0x1] sm:$0x1]
      %v3187 = vld [vmem:[%s3184 + $0x2] sm:$0x1]
      %v3188 = vld [vmem:[%s3184 + $0x3] sm:$0x1]
      %v3189 = vld [vmem:[%s3184 + $0x4] sm:$0x1]
      %v3190 = vld [vmem:[%s3184 + $0x5] sm:$0x1]
      %v3191 = vld [vmem:[%s3184 + $0x6] sm:$0x1]
      %v3192 = vld [vmem:[%s3184 + $0x7] sm:$0x1]
      %v3201 = vlaneseq
      %v3202 = vshrl.u32 %v3201, 7
      %v3203 = vsub.s32 0, %v3202
      %v3204 = vrot.slane %v3185, %v3203
      %v3205 = vlaneseq
      %v3206 = vshrl.u32 %v3205, 7
      %v3207 = vsub.s32 0, %v3206
      %v3208 = vrot.slane %v3186, %v3207
      %v3209 = vlaneseq
      %v3210 = vshrl.u32 %v3209, 7
      %v3211 = vsub.s32 0, %v3210
      %v3212 = vrot.slane %v3187, %v3211
      %v3213 = vlaneseq
      %v3214 = vshrl.u32 %v3213, 7
      %v3215 = vsub.s32 0, %v3214
      %v3216 = vrot.slane %v3188, %v3215
      %v3217 = vlaneseq
      %v3218 = vshrl.u32 %v3217, 7
      %v3219 = vsub.s32 0, %v3218
      %v3220 = vrot.slane %v3189, %v3219
      %v3221 = vlaneseq
      %v3222 = vshrl.u32 %v3221, 7
      %v3223 = vsub.s32 0, %v3222
      %v3224 = vrot.slane %v3190, %v3223
      %v3225 = vlaneseq
      %v3226 = vshrl.u32 %v3225, 7
      %v3227 = vsub.s32 0, %v3226
      %v3228 = vrot.slane %v3191, %v3227
      %v3229 = vlaneseq
      %v3230 = vshrl.u32 %v3229, 7
      %v3231 = vsub.s32 0, %v3230
      %v3232 = vrot.slane %v3192, %v3231
      %3233 = vset.pattern.permute.xlu0 0
      %3234 = vperm.xlu0 %3233, %v3204
      %v3235 = vpop.permute.xlu0 %3234
      %3237 = vset.pattern.permute.xlu0 0
      %3238 = vperm.xlu0 %3237, %v3208
      %v3239 = vpop.permute.xlu0 %3238
      %3241 = vset.pattern.permute.xlu0 0
      %3242 = vperm.xlu0 %3241, %v3212
      %v3243 = vpop.permute.xlu0 %3242
      %3245 = vset.pattern.permute.xlu0 0
      %3246 = vperm.xlu0 %3245, %v3216
      %v3247 = vpop.permute.xlu0 %3246
      %3249 = vset.pattern.permute.xlu0 0
      %3250 = vperm.xlu0 %3249, %v3220
      %v3251 = vpop.permute.xlu0 %3250
      %3253 = vset.pattern.permute.xlu0 0
      %3254 = vperm.xlu0 %3253, %v3224
      %v3255 = vpop.permute.xlu0 %3254
      %3257 = vset.pattern.permute.xlu0 0
      %3258 = vperm.xlu0 %3257, %v3228
      %v3259 = vpop.permute.xlu0 %3258
      %3261 = vset.pattern.permute.xlu0 0
      %3262 = vperm.xlu0 %3261, %v3232
      %v3263 = vpop.permute.xlu0 %3262
      %v3265 = vmul.f32 %v3235, %v2937
      %v3266 = vmul.f32 %v3235, %v2943
      %v3267 = vmul.f32 %v3239, %v2937
      %v3268 = vmul.f32 %v3239, %v2943
      %v3269 = vmul.f32 %v3243, %v2937
      %v3270 = vmul.f32 %v3243, %v2943
      %v3271 = vmul.f32 %v3247, %v2937
      %v3272 = vmul.f32 %v3247, %v2943
      %v3273 = vmul.f32 %v3251, %v2937
      %v3274 = vmul.f32 %v3251, %v2943
      %v3275 = vmul.f32 %v3255, %v2937
      %v3276 = vmul.f32 %v3255, %v2943
      %v3277 = vmul.f32 %v3259, %v2937
      %v3278 = vmul.f32 %v3259, %v2943
      %v3279 = vmul.f32 %v3263, %v2937
      %v3280 = vmul.f32 %v3263, %v2943
      %v3281 = vadd.f32 %v3168, %v3265
      %v3282 = vadd.f32 %v3169, %v3266
      %v3283 = vadd.f32 %v3170, %v3267
      %v3284 = vadd.f32 %v3171, %v3268
      %v3285 = vadd.f32 %v3172, %v3269
      %v3286 = vadd.f32 %v3173, %v3270
      %v3287 = vadd.f32 %v3174, %v3271
      %v3288 = vadd.f32 %v3175, %v3272
      %v3289 = vadd.f32 %v3176, %v3273
      %v3290 = vadd.f32 %v3177, %v3274
      %v3291 = vadd.f32 %v3178, %v3275
      %v3292 = vadd.f32 %v3179, %v3276
      %v3293 = vadd.f32 %v3180, %v3277
      %v3294 = vadd.f32 %v3181, %v3278
      %v3295 = vadd.f32 %v3182, %v3279
      %v3296 = vadd.f32 %v3183, %v3280
      %s3297 = scalar_lea.vmem %s257, 88
      %v3298 = vld [vmem:[%s3297] sm:$0x1]
      %v3299 = vld [vmem:[%s3297 + $0x1] sm:$0x1]
      %v3300 = vld [vmem:[%s3297 + $0x2] sm:$0x1]
      %v3301 = vld [vmem:[%s3297 + $0x3] sm:$0x1]
      %v3302 = vld [vmem:[%s3297 + $0x4] sm:$0x1]
      %v3303 = vld [vmem:[%s3297 + $0x5] sm:$0x1]
      %v3304 = vld [vmem:[%s3297 + $0x6] sm:$0x1]
      %v3305 = vld [vmem:[%s3297 + $0x7] sm:$0x1]
      %v3314 = vlaneseq
      %v3315 = vshrl.u32 %v3314, 7
      %v3316 = vsub.s32 0, %v3315
      %v3317 = vrot.slane %v3298, %v3316
      %v3318 = vlaneseq
      %v3319 = vshrl.u32 %v3318, 7
      %v3320 = vsub.s32 0, %v3319
      %v3321 = vrot.slane %v3299, %v3320
      %v3322 = vlaneseq
      %v3323 = vshrl.u32 %v3322, 7
      %v3324 = vsub.s32 0, %v3323
      %v3325 = vrot.slane %v3300, %v3324
      %v3326 = vlaneseq
      %v3327 = vshrl.u32 %v3326, 7
      %v3328 = vsub.s32 0, %v3327
      %v3329 = vrot.slane %v3301, %v3328
      %v3330 = vlaneseq
      %v3331 = vshrl.u32 %v3330, 7
      %v3332 = vsub.s32 0, %v3331
      %v3333 = vrot.slane %v3302, %v3332
      %v3334 = vlaneseq
      %v3335 = vshrl.u32 %v3334, 7
      %v3336 = vsub.s32 0, %v3335
      %v3337 = vrot.slane %v3303, %v3336
      %v3338 = vlaneseq
      %v3339 = vshrl.u32 %v3338, 7
      %v3340 = vsub.s32 0, %v3339
      %v3341 = vrot.slane %v3304, %v3340
      %v3342 = vlaneseq
      %v3343 = vshrl.u32 %v3342, 7
      %v3344 = vsub.s32 0, %v3343
      %v3345 = vrot.slane %v3305, %v3344
      %3346 = vset.pattern.permute.xlu0 0
      %3347 = vperm.xlu0 %3346, %v3317
      %v3348 = vpop.permute.xlu0 %3347
      %3350 = vset.pattern.permute.xlu0 0
      %3351 = vperm.xlu0 %3350, %v3321
      %v3352 = vpop.permute.xlu0 %3351
      %3354 = vset.pattern.permute.xlu0 0
      %3355 = vperm.xlu0 %3354, %v3325
      %v3356 = vpop.permute.xlu0 %3355
      %3358 = vset.pattern.permute.xlu0 0
      %3359 = vperm.xlu0 %3358, %v3329
      %v3360 = vpop.permute.xlu0 %3359
      %3362 = vset.pattern.permute.xlu0 0
      %3363 = vperm.xlu0 %3362, %v3333
      %v3364 = vpop.permute.xlu0 %3363
      %3366 = vset.pattern.permute.xlu0 0
      %3367 = vperm.xlu0 %3366, %v3337
      %v3368 = vpop.permute.xlu0 %3367
      %3370 = vset.pattern.permute.xlu0 0
      %3371 = vperm.xlu0 %3370, %v3341
      %v3372 = vpop.permute.xlu0 %3371
      %3374 = vset.pattern.permute.xlu0 0
      %3375 = vperm.xlu0 %3374, %v3345
      %v3376 = vpop.permute.xlu0 %3375
      %v3378 = vmul.f32 %v3348, %v2949
      %v3379 = vmul.f32 %v3348, %v2955
      %v3380 = vmul.f32 %v3352, %v2949
      %v3381 = vmul.f32 %v3352, %v2955
      %v3382 = vmul.f32 %v3356, %v2949
      %v3383 = vmul.f32 %v3356, %v2955
      %v3384 = vmul.f32 %v3360, %v2949
      %v3385 = vmul.f32 %v3360, %v2955
      %v3386 = vmul.f32 %v3364, %v2949
      %v3387 = vmul.f32 %v3364, %v2955
      %v3388 = vmul.f32 %v3368, %v2949
      %v3389 = vmul.f32 %v3368, %v2955
      %v3390 = vmul.f32 %v3372, %v2949
      %v3391 = vmul.f32 %v3372, %v2955
      %v3392 = vmul.f32 %v3376, %v2949
      %v3393 = vmul.f32 %v3376, %v2955
      %v3394 = vadd.f32 %v3281, %v3378
      %v3395 = vadd.f32 %v3282, %v3379
      %v3396 = vadd.f32 %v3283, %v3380
      %v3397 = vadd.f32 %v3284, %v3381
      %v3398 = vadd.f32 %v3285, %v3382
      %v3399 = vadd.f32 %v3286, %v3383
      %v3400 = vadd.f32 %v3287, %v3384
      %v3401 = vadd.f32 %v3288, %v3385
      %v3402 = vadd.f32 %v3289, %v3386
      %v3403 = vadd.f32 %v3290, %v3387
      %v3404 = vadd.f32 %v3291, %v3388
      %v3405 = vadd.f32 %v3292, %v3389
      %v3406 = vadd.f32 %v3293, %v3390
      %v3407 = vadd.f32 %v3294, %v3391
      %v3408 = vadd.f32 %v3295, %v3392
      %v3409 = vadd.f32 %v3296, %v3393
      %v3410 = vld [vmem:[#allocation2] sm:$0xff]
      %v3411 = vld [vmem:[#allocation2 + $0x8] sm:$0xff]
      %v3412 = vld [vmem:[#allocation2 + $0x10] sm:$0xff]
      %v3413 = vld [vmem:[#allocation2 + $0x18] sm:$0xff]
      %v3414 = vld [vmem:[#allocation2 + $0x20] sm:$0xff]
      %v3415 = vld [vmem:[#allocation2 + $0x28] sm:$0xff]
      %v3416 = vld [vmem:[#allocation2 + $0x30] sm:$0xff]
      %v3417 = vld [vmem:[#allocation2 + $0x38] sm:$0xff]
      %v3418 = vld [vmem:[#allocation2 + $0x40] sm:$0xff]
      %v3419 = vld [vmem:[#allocation2 + $0x48] sm:$0xff]
      %v3420 = vld [vmem:[#allocation2 + $0x50] sm:$0xff]
      %v3421 = vld [vmem:[#allocation2 + $0x58] sm:$0xff]
      %v3422 = vld [vmem:[#allocation2 + $0x60] sm:$0xff]
      %v3423 = vld [vmem:[#allocation2 + $0x68] sm:$0xff]
      %v3424 = vld [vmem:[#allocation2 + $0x70] sm:$0xff]
      %v3425 = vld [vmem:[#allocation2 + $0x78] sm:$0xff]
      %v3426 = vadd.f32 %v3410, %v3394
      %v3427 = vadd.f32 %v3411, %v3395
      %v3428 = vadd.f32 %v3412, %v3396
      %v3429 = vadd.f32 %v3413, %v3397
      %v3430 = vadd.f32 %v3414, %v3398
      %v3431 = vadd.f32 %v3415, %v3399
      %v3432 = vadd.f32 %v3416, %v3400
      %v3433 = vadd.f32 %v3417, %v3401
      %v3434 = vadd.f32 %v3418, %v3402
      %v3435 = vadd.f32 %v3419, %v3403
      %v3436 = vadd.f32 %v3420, %v3404
      %v3437 = vadd.f32 %v3421, %v3405
      %v3438 = vadd.f32 %v3422, %v3406
      %v3439 = vadd.f32 %v3423, %v3407
      %v3440 = vadd.f32 %v3424, %v3408
      %v3441 = vadd.f32 %v3425, %v3409
      %3442 = vst.msk [vmem:[#allocation2] sm:$0xff] %vm1567, %v3426
      %3443 = vst.msk [vmem:[#allocation2 + $0x8] sm:$0xff] %vm1567, %v3427
      %3444 = vst.msk [vmem:[#allocation2 + $0x10] sm:$0xff] %vm1567, %v3428
      %3445 = vst.msk [vmem:[#allocation2 + $0x18] sm:$0xff] %vm1567, %v3429
      %3446 = vst.msk [vmem:[#allocation2 + $0x20] sm:$0xff] %vm1567, %v3430
      %3447 = vst.msk [vmem:[#allocation2 + $0x28] sm:$0xff] %vm1567, %v3431
      %3448 = vst.msk [vmem:[#allocation2 + $0x30] sm:$0xff] %vm1567, %v3432
      %3449 = vst.msk [vmem:[#allocation2 + $0x38] sm:$0xff] %vm1567, %v3433
      %3450 = vst.msk [vmem:[#allocation2 + $0x40] sm:$0xff] %vm1567, %v3434
      %3451 = vst.msk [vmem:[#allocation2 + $0x48] sm:$0xff] %vm1567, %v3435
      %3452 = vst.msk [vmem:[#allocation2 + $0x50] sm:$0xff] %vm1567, %v3436
      %3453 = vst.msk [vmem:[#allocation2 + $0x58] sm:$0xff] %vm1567, %v3437
      %3454 = vst.msk [vmem:[#allocation2 + $0x60] sm:$0xff] %vm1567, %v3438
      %3455 = vst.msk [vmem:[#allocation2 + $0x68] sm:$0xff] %vm1567, %v3439
      %3456 = vst.msk [vmem:[#allocation2 + $0x70] sm:$0xff] %vm1567, %v3440
      %3457 = vst.msk [vmem:[#allocation2 + $0x78] sm:$0xff] %vm1567, %v3441
      %s3458 = scalar_lea.vmem %s257, 96
      %v3459 = vld [vmem:[%s3458] sm:$0x1]
      %v3460 = vld [vmem:[%s3458 + $0x1] sm:$0x1]
      %v3461 = vld [vmem:[%s3458 + $0x2] sm:$0x1]
      %v3462 = vld [vmem:[%s3458 + $0x3] sm:$0x1]
      %v3463 = vld [vmem:[%s3458 + $0x4] sm:$0x1]
      %v3464 = vld [vmem:[%s3458 + $0x5] sm:$0x1]
      %v3465 = vld [vmem:[%s3458 + $0x6] sm:$0x1]
      %v3466 = vld [vmem:[%s3458 + $0x7] sm:$0x1]
      %v3475 = vlaneseq
      %v3476 = vshrl.u32 %v3475, 7
      %v3477 = vsub.s32 0, %v3476
      %v3478 = vrot.slane %v3459, %v3477
      %v3479 = vlaneseq
      %v3480 = vshrl.u32 %v3479, 7
      %v3481 = vsub.s32 0, %v3480
      %v3482 = vrot.slane %v3460, %v3481
      %v3483 = vlaneseq
      %v3484 = vshrl.u32 %v3483, 7
      %v3485 = vsub.s32 0, %v3484
      %v3486 = vrot.slane %v3461, %v3485
      %v3487 = vlaneseq
      %v3488 = vshrl.u32 %v3487, 7
      %v3489 = vsub.s32 0, %v3488
      %v3490 = vrot.slane %v3462, %v3489
      %v3491 = vlaneseq
      %v3492 = vshrl.u32 %v3491, 7
      %v3493 = vsub.s32 0, %v3492
      %v3494 = vrot.slane %v3463, %v3493
      %v3495 = vlaneseq
      %v3496 = vshrl.u32 %v3495, 7
      %v3497 = vsub.s32 0, %v3496
      %v3498 = vrot.slane %v3464, %v3497
      %v3499 = vlaneseq
      %v3500 = vshrl.u32 %v3499, 7
      %v3501 = vsub.s32 0, %v3500
      %v3502 = vrot.slane %v3465, %v3501
      %v3503 = vlaneseq
      %v3504 = vshrl.u32 %v3503, 7
      %v3505 = vsub.s32 0, %v3504
      %v3506 = vrot.slane %v3466, %v3505
      %3507 = vset.pattern.permute.xlu0 0
      %3508 = vperm.xlu0 %3507, %v3478
      %v3509 = vpop.permute.xlu0 %3508
      %3511 = vset.pattern.permute.xlu0 0
      %3512 = vperm.xlu0 %3511, %v3482
      %v3513 = vpop.permute.xlu0 %3512
      %3515 = vset.pattern.permute.xlu0 0
      %3516 = vperm.xlu0 %3515, %v3486
      %v3517 = vpop.permute.xlu0 %3516
      %3519 = vset.pattern.permute.xlu0 0
      %3520 = vperm.xlu0 %3519, %v3490
      %v3521 = vpop.permute.xlu0 %3520
      %3523 = vset.pattern.permute.xlu0 0
      %3524 = vperm.xlu0 %3523, %v3494
      %v3525 = vpop.permute.xlu0 %3524
      %3527 = vset.pattern.permute.xlu0 0
      %3528 = vperm.xlu0 %3527, %v3498
      %v3529 = vpop.permute.xlu0 %3528
      %3531 = vset.pattern.permute.xlu0 0
      %3532 = vperm.xlu0 %3531, %v3502
      %v3533 = vpop.permute.xlu0 %3532
      %3535 = vset.pattern.permute.xlu0 0
      %3536 = vperm.xlu0 %3535, %v3506
      %v3537 = vpop.permute.xlu0 %3536
      %v3539 = vmul.f32 %v3509, %v2913
      %v3540 = vmul.f32 %v3509, %v2919
      %v3541 = vmul.f32 %v3513, %v2913
      %v3542 = vmul.f32 %v3513, %v2919
      %v3543 = vmul.f32 %v3517, %v2913
      %v3544 = vmul.f32 %v3517, %v2919
      %v3545 = vmul.f32 %v3521, %v2913
      %v3546 = vmul.f32 %v3521, %v2919
      %v3547 = vmul.f32 %v3525, %v2913
      %v3548 = vmul.f32 %v3525, %v2919
      %v3549 = vmul.f32 %v3529, %v2913
      %v3550 = vmul.f32 %v3529, %v2919
      %v3551 = vmul.f32 %v3533, %v2913
      %v3552 = vmul.f32 %v3533, %v2919
      %v3553 = vmul.f32 %v3537, %v2913
      %v3554 = vmul.f32 %v3537, %v2919
      %v3555 = vadd.f32 %v3539, 0.0
      %v3556 = vadd.f32 %v3540, 0.0
      %v3557 = vadd.f32 %v3541, 0.0
      %v3558 = vadd.f32 %v3542, 0.0
      %v3559 = vadd.f32 %v3543, 0.0
      %v3560 = vadd.f32 %v3544, 0.0
      %v3561 = vadd.f32 %v3545, 0.0
      %v3562 = vadd.f32 %v3546, 0.0
      %v3563 = vadd.f32 %v3547, 0.0
      %v3564 = vadd.f32 %v3548, 0.0
      %v3565 = vadd.f32 %v3549, 0.0
      %v3566 = vadd.f32 %v3550, 0.0
      %v3567 = vadd.f32 %v3551, 0.0
      %v3568 = vadd.f32 %v3552, 0.0
      %v3569 = vadd.f32 %v3553, 0.0
      %v3570 = vadd.f32 %v3554, 0.0
      %s3571 = scalar_lea.vmem %s257, 104
      %v3572 = vld [vmem:[%s3571] sm:$0x1]
      %v3573 = vld [vmem:[%s3571 + $0x1] sm:$0x1]
      %v3574 = vld [vmem:[%s3571 + $0x2] sm:$0x1]
      %v3575 = vld [vmem:[%s3571 + $0x3] sm:$0x1]
      %v3576 = vld [vmem:[%s3571 + $0x4] sm:$0x1]
      %v3577 = vld [vmem:[%s3571 + $0x5] sm:$0x1]
      %v3578 = vld [vmem:[%s3571 + $0x6] sm:$0x1]
      %v3579 = vld [vmem:[%s3571 + $0x7] sm:$0x1]
      %v3588 = vlaneseq
      %v3589 = vshrl.u32 %v3588, 7
      %v3590 = vsub.s32 0, %v3589
      %v3591 = vrot.slane %v3572, %v3590
      %v3592 = vlaneseq
      %v3593 = vshrl.u32 %v3592, 7
      %v3594 = vsub.s32 0, %v3593
      %v3595 = vrot.slane %v3573, %v3594
      %v3596 = vlaneseq
      %v3597 = vshrl.u32 %v3596, 7
      %v3598 = vsub.s32 0, %v3597
      %v3599 = vrot.slane %v3574, %v3598
      %v3600 = vlaneseq
      %v3601 = vshrl.u32 %v3600, 7
      %v3602 = vsub.s32 0, %v3601
      %v3603 = vrot.slane %v3575, %v3602
      %v3604 = vlaneseq
      %v3605 = vshrl.u32 %v3604, 7
      %v3606 = vsub.s32 0, %v3605
      %v3607 = vrot.slane %v3576, %v3606
      %v3608 = vlaneseq
      %v3609 = vshrl.u32 %v3608, 7
      %v3610 = vsub.s32 0, %v3609
      %v3611 = vrot.slane %v3577, %v3610
      %v3612 = vlaneseq
      %v3613 = vshrl.u32 %v3612, 7
      %v3614 = vsub.s32 0, %v3613
      %v3615 = vrot.slane %v3578, %v3614
      %v3616 = vlaneseq
      %v3617 = vshrl.u32 %v3616, 7
      %v3618 = vsub.s32 0, %v3617
      %v3619 = vrot.slane %v3579, %v3618
      %3620 = vset.pattern.permute.xlu0 0
      %3621 = vperm.xlu0 %3620, %v3591
      %v3622 = vpop.permute.xlu0 %3621
      %3624 = vset.pattern.permute.xlu0 0
      %3625 = vperm.xlu0 %3624, %v3595
      %v3626 = vpop.permute.xlu0 %3625
      %3628 = vset.pattern.permute.xlu0 0
      %3629 = vperm.xlu0 %3628, %v3599
      %v3630 = vpop.permute.xlu0 %3629
      %3632 = vset.pattern.permute.xlu0 0
      %3633 = vperm.xlu0 %3632, %v3603
      %v3634 = vpop.permute.xlu0 %3633
      %3636 = vset.pattern.permute.xlu0 0
      %3637 = vperm.xlu0 %3636, %v3607
      %v3638 = vpop.permute.xlu0 %3637
      %3640 = vset.pattern.permute.xlu0 0
      %3641 = vperm.xlu0 %3640, %v3611
      %v3642 = vpop.permute.xlu0 %3641
      %3644 = vset.pattern.permute.xlu0 0
      %3645 = vperm.xlu0 %3644, %v3615
      %v3646 = vpop.permute.xlu0 %3645
      %3648 = vset.pattern.permute.xlu0 0
      %3649 = vperm.xlu0 %3648, %v3619
      %v3650 = vpop.permute.xlu0 %3649
      %v3652 = vmul.f32 %v3622, %v2925
      %v3653 = vmul.f32 %v3622, %v2931
      %v3654 = vmul.f32 %v3626, %v2925
      %v3655 = vmul.f32 %v3626, %v2931
      %v3656 = vmul.f32 %v3630, %v2925
      %v3657 = vmul.f32 %v3630, %v2931
      %v3658 = vmul.f32 %v3634, %v2925
      %v3659 = vmul.f32 %v3634, %v2931
      %v3660 = vmul.f32 %v3638, %v2925
      %v3661 = vmul.f32 %v3638, %v2931
      %v3662 = vmul.f32 %v3642, %v2925
      %v3663 = vmul.f32 %v3642, %v2931
      %v3664 = vmul.f32 %v3646, %v2925
      %v3665 = vmul.f32 %v3646, %v2931
      %v3666 = vmul.f32 %v3650, %v2925
      %v3667 = vmul.f32 %v3650, %v2931
      %v3668 = vadd.f32 %v3555, %v3652
      %v3669 = vadd.f32 %v3556, %v3653
      %v3670 = vadd.f32 %v3557, %v3654
      %v3671 = vadd.f32 %v3558, %v3655
      %v3672 = vadd.f32 %v3559, %v3656
      %v3673 = vadd.f32 %v3560, %v3657
      %v3674 = vadd.f32 %v3561, %v3658
      %v3675 = vadd.f32 %v3562, %v3659
      %v3676 = vadd.f32 %v3563, %v3660
      %v3677 = vadd.f32 %v3564, %v3661
      %v3678 = vadd.f32 %v3565, %v3662
      %v3679 = vadd.f32 %v3566, %v3663
      %v3680 = vadd.f32 %v3567, %v3664
      %v3681 = vadd.f32 %v3568, %v3665
      %v3682 = vadd.f32 %v3569, %v3666
      %v3683 = vadd.f32 %v3570, %v3667
      %s3684 = scalar_lea.vmem %s257, 112
      %v3685 = vld [vmem:[%s3684] sm:$0x1]
      %v3686 = vld [vmem:[%s3684 + $0x1] sm:$0x1]
      %v3687 = vld [vmem:[%s3684 + $0x2] sm:$0x1]
      %v3688 = vld [vmem:[%s3684 + $0x3] sm:$0x1]
      %v3689 = vld [vmem:[%s3684 + $0x4] sm:$0x1]
      %v3690 = vld [vmem:[%s3684 + $0x5] sm:$0x1]
      %v3691 = vld [vmem:[%s3684 + $0x6] sm:$0x1]
      %v3692 = vld [vmem:[%s3684 + $0x7] sm:$0x1]
      %v3701 = vlaneseq
      %v3702 = vshrl.u32 %v3701, 7
      %v3703 = vsub.s32 0, %v3702
      %v3704 = vrot.slane %v3685, %v3703
      %v3705 = vlaneseq
      %v3706 = vshrl.u32 %v3705, 7
      %v3707 = vsub.s32 0, %v3706
      %v3708 = vrot.slane %v3686, %v3707
      %v3709 = vlaneseq
      %v3710 = vshrl.u32 %v3709, 7
      %v3711 = vsub.s32 0, %v3710
      %v3712 = vrot.slane %v3687, %v3711
      %v3713 = vlaneseq
      %v3714 = vshrl.u32 %v3713, 7
      %v3715 = vsub.s32 0, %v3714
      %v3716 = vrot.slane %v3688, %v3715
      %v3717 = vlaneseq
      %v3718 = vshrl.u32 %v3717, 7
      %v3719 = vsub.s32 0, %v3718
      %v3720 = vrot.slane %v3689, %v3719
      %v3721 = vlaneseq
      %v3722 = vshrl.u32 %v3721, 7
      %v3723 = vsub.s32 0, %v3722
      %v3724 = vrot.slane %v3690, %v3723
      %v3725 = vlaneseq
      %v3726 = vshrl.u32 %v3725, 7
      %v3727 = vsub.s32 0, %v3726
      %v3728 = vrot.slane %v3691, %v3727
      %v3729 = vlaneseq
      %v3730 = vshrl.u32 %v3729, 7
      %v3731 = vsub.s32 0, %v3730
      %v3732 = vrot.slane %v3692, %v3731
      %3733 = vset.pattern.permute.xlu0 0
      %3734 = vperm.xlu0 %3733, %v3704
      %v3735 = vpop.permute.xlu0 %3734
      %3737 = vset.pattern.permute.xlu0 0
      %3738 = vperm.xlu0 %3737, %v3708
      %v3739 = vpop.permute.xlu0 %3738
      %3741 = vset.pattern.permute.xlu0 0
      %3742 = vperm.xlu0 %3741, %v3712
      %v3743 = vpop.permute.xlu0 %3742
      %3745 = vset.pattern.permute.xlu0 0
      %3746 = vperm.xlu0 %3745, %v3716
      %v3747 = vpop.permute.xlu0 %3746
      %3749 = vset.pattern.permute.xlu0 0
      %3750 = vperm.xlu0 %3749, %v3720
      %v3751 = vpop.permute.xlu0 %3750
      %3753 = vset.pattern.permute.xlu0 0
      %3754 = vperm.xlu0 %3753, %v3724
      %v3755 = vpop.permute.xlu0 %3754
      %3757 = vset.pattern.permute.xlu0 0
      %3758 = vperm.xlu0 %3757, %v3728
      %v3759 = vpop.permute.xlu0 %3758
      %3761 = vset.pattern.permute.xlu0 0
      %3762 = vperm.xlu0 %3761, %v3732
      %v3763 = vpop.permute.xlu0 %3762
      %v3765 = vmul.f32 %v3735, %v2937
      %v3766 = vmul.f32 %v3735, %v2943
      %v3767 = vmul.f32 %v3739, %v2937
      %v3768 = vmul.f32 %v3739, %v2943
      %v3769 = vmul.f32 %v3743, %v2937
      %v3770 = vmul.f32 %v3743, %v2943
      %v3771 = vmul.f32 %v3747, %v2937
      %v3772 = vmul.f32 %v3747, %v2943
      %v3773 = vmul.f32 %v3751, %v2937
      %v3774 = vmul.f32 %v3751, %v2943
      %v3775 = vmul.f32 %v3755, %v2937
      %v3776 = vmul.f32 %v3755, %v2943
      %v3777 = vmul.f32 %v3759, %v2937
      %v3778 = vmul.f32 %v3759, %v2943
      %v3779 = vmul.f32 %v3763, %v2937
      %v3780 = vmul.f32 %v3763, %v2943
      %v3781 = vadd.f32 %v3668, %v3765
      %v3782 = vadd.f32 %v3669, %v3766
      %v3783 = vadd.f32 %v3670, %v3767
      %v3784 = vadd.f32 %v3671, %v3768
      %v3785 = vadd.f32 %v3672, %v3769
      %v3786 = vadd.f32 %v3673, %v3770
      %v3787 = vadd.f32 %v3674, %v3771
      %v3788 = vadd.f32 %v3675, %v3772
      %v3789 = vadd.f32 %v3676, %v3773
      %v3790 = vadd.f32 %v3677, %v3774
      %v3791 = vadd.f32 %v3678, %v3775
      %v3792 = vadd.f32 %v3679, %v3776
      %v3793 = vadd.f32 %v3680, %v3777
      %v3794 = vadd.f32 %v3681, %v3778
      %v3795 = vadd.f32 %v3682, %v3779
      %v3796 = vadd.f32 %v3683, %v3780
      %s3797 = scalar_lea.vmem %s257, 120
      %v3798 = vld [vmem:[%s3797] sm:$0x1]
      %v3799 = vld [vmem:[%s3797 + $0x1] sm:$0x1]
      %v3800 = vld [vmem:[%s3797 + $0x2] sm:$0x1]
      %v3801 = vld [vmem:[%s3797 + $0x3] sm:$0x1]
      %v3802 = vld [vmem:[%s3797 + $0x4] sm:$0x1]
      %v3803 = vld [vmem:[%s3797 + $0x5] sm:$0x1]
      %v3804 = vld [vmem:[%s3797 + $0x6] sm:$0x1]
      %v3805 = vld [vmem:[%s3797 + $0x7] sm:$0x1]
      %v3814 = vlaneseq
      %v3815 = vshrl.u32 %v3814, 7
      %v3816 = vsub.s32 0, %v3815
      %v3817 = vrot.slane %v3798, %v3816
      %v3818 = vlaneseq
      %v3819 = vshrl.u32 %v3818, 7
      %v3820 = vsub.s32 0, %v3819
      %v3821 = vrot.slane %v3799, %v3820
      %v3822 = vlaneseq
      %v3823 = vshrl.u32 %v3822, 7
      %v3824 = vsub.s32 0, %v3823
      %v3825 = vrot.slane %v3800, %v3824
      %v3826 = vlaneseq
      %v3827 = vshrl.u32 %v3826, 7
      %v3828 = vsub.s32 0, %v3827
      %v3829 = vrot.slane %v3801, %v3828
      %v3830 = vlaneseq
      %v3831 = vshrl.u32 %v3830, 7
      %v3832 = vsub.s32 0, %v3831
      %v3833 = vrot.slane %v3802, %v3832
      %v3834 = vlaneseq
      %v3835 = vshrl.u32 %v3834, 7
      %v3836 = vsub.s32 0, %v3835
      %v3837 = vrot.slane %v3803, %v3836
      %v3838 = vlaneseq
      %v3839 = vshrl.u32 %v3838, 7
      %v3840 = vsub.s32 0, %v3839
      %v3841 = vrot.slane %v3804, %v3840
      %v3842 = vlaneseq
      %v3843 = vshrl.u32 %v3842, 7
      %v3844 = vsub.s32 0, %v3843
      %v3845 = vrot.slane %v3805, %v3844
      %3846 = vset.pattern.permute.xlu0 0
      %3847 = vperm.xlu0 %3846, %v3817
      %v3848 = vpop.permute.xlu0 %3847
      %3850 = vset.pattern.permute.xlu0 0
      %3851 = vperm.xlu0 %3850, %v3821
      %v3852 = vpop.permute.xlu0 %3851
      %3854 = vset.pattern.permute.xlu0 0
      %3855 = vperm.xlu0 %3854, %v3825
      %v3856 = vpop.permute.xlu0 %3855
      %3858 = vset.pattern.permute.xlu0 0
      %3859 = vperm.xlu0 %3858, %v3829
      %v3860 = vpop.permute.xlu0 %3859
      %3862 = vset.pattern.permute.xlu0 0
      %3863 = vperm.xlu0 %3862, %v3833
      %v3864 = vpop.permute.xlu0 %3863
      %3866 = vset.pattern.permute.xlu0 0
      %3867 = vperm.xlu0 %3866, %v3837
      %v3868 = vpop.permute.xlu0 %3867
      %3870 = vset.pattern.permute.xlu0 0
      %3871 = vperm.xlu0 %3870, %v3841
      %v3872 = vpop.permute.xlu0 %3871
      %3874 = vset.pattern.permute.xlu0 0
      %3875 = vperm.xlu0 %3874, %v3845
      %v3876 = vpop.permute.xlu0 %3875
      %v3878 = vmul.f32 %v3848, %v2949
      %v3879 = vmul.f32 %v3848, %v2955
      %v3880 = vmul.f32 %v3852, %v2949
      %v3881 = vmul.f32 %v3852, %v2955
      %v3882 = vmul.f32 %v3856, %v2949
      %v3883 = vmul.f32 %v3856, %v2955
      %v3884 = vmul.f32 %v3860, %v2949
      %v3885 = vmul.f32 %v3860, %v2955
      %v3886 = vmul.f32 %v3864, %v2949
      %v3887 = vmul.f32 %v3864, %v2955
      %v3888 = vmul.f32 %v3868, %v2949
      %v3889 = vmul.f32 %v3868, %v2955
      %v3890 = vmul.f32 %v3872, %v2949
      %v3891 = vmul.f32 %v3872, %v2955
      %v3892 = vmul.f32 %v3876, %v2949
      %v3893 = vmul.f32 %v3876, %v2955
      %v3894 = vadd.f32 %v3781, %v3878
      %v3895 = vadd.f32 %v3782, %v3879
      %v3896 = vadd.f32 %v3783, %v3880
      %v3897 = vadd.f32 %v3784, %v3881
      %v3898 = vadd.f32 %v3785, %v3882
      %v3899 = vadd.f32 %v3786, %v3883
      %v3900 = vadd.f32 %v3787, %v3884
      %v3901 = vadd.f32 %v3788, %v3885
      %v3902 = vadd.f32 %v3789, %v3886
      %v3903 = vadd.f32 %v3790, %v3887
      %v3904 = vadd.f32 %v3791, %v3888
      %v3905 = vadd.f32 %v3792, %v3889
      %v3906 = vadd.f32 %v3793, %v3890
      %v3907 = vadd.f32 %v3794, %v3891
      %v3908 = vadd.f32 %v3795, %v3892
      %v3909 = vadd.f32 %v3796, %v3893
      %v3910 = vld [vmem:[#allocation2] sm:$0xff]
      %v3911 = vld [vmem:[#allocation2 + $0x8] sm:$0xff]
      %v3912 = vld [vmem:[#allocation2 + $0x10] sm:$0xff]
      %v3913 = vld [vmem:[#allocation2 + $0x18] sm:$0xff]
      %v3914 = vld [vmem:[#allocation2 + $0x20] sm:$0xff]
      %v3915 = vld [vmem:[#allocation2 + $0x28] sm:$0xff]
      %v3916 = vld [vmem:[#allocation2 + $0x30] sm:$0xff]
      %v3917 = vld [vmem:[#allocation2 + $0x38] sm:$0xff]
      %v3918 = vld [vmem:[#allocation2 + $0x40] sm:$0xff]
      %v3919 = vld [vmem:[#allocation2 + $0x48] sm:$0xff]
      %v3920 = vld [vmem:[#allocation2 + $0x50] sm:$0xff]
      %v3921 = vld [vmem:[#allocation2 + $0x58] sm:$0xff]
      %v3922 = vld [vmem:[#allocation2 + $0x60] sm:$0xff]
      %v3923 = vld [vmem:[#allocation2 + $0x68] sm:$0xff]
      %v3924 = vld [vmem:[#allocation2 + $0x70] sm:$0xff]
      %v3925 = vld [vmem:[#allocation2 + $0x78] sm:$0xff]
      %3942 = vrot.lane.b32.xlu0 %v3894, 120
      %v3943 = vpop.permute.xlu0 %3942
      %3944 = vrot.lane.b32.xlu0 %v3895, 120
      %v3945 = vpop.permute.xlu0 %3944
      %3946 = vrot.lane.b32.xlu0 %v3896, 120
      %v3947 = vpop.permute.xlu0 %3946
      %3948 = vrot.lane.b32.xlu0 %v3897, 120
      %v3949 = vpop.permute.xlu0 %3948
      %3950 = vrot.lane.b32.xlu0 %v3898, 120
      %v3951 = vpop.permute.xlu0 %3950
      %3952 = vrot.lane.b32.xlu0 %v3899, 120
      %v3953 = vpop.permute.xlu0 %3952
      %3954 = vrot.lane.b32.xlu0 %v3900, 120
      %v3955 = vpop.permute.xlu0 %3954
      %3956 = vrot.lane.b32.xlu0 %v3901, 120
      %v3957 = vpop.permute.xlu0 %3956
      %3958 = vrot.lane.b32.xlu0 %v3902, 120
      %v3959 = vpop.permute.xlu0 %3958
      %3960 = vrot.lane.b32.xlu0 %v3903, 120
      %v3961 = vpop.permute.xlu0 %3960
      %3962 = vrot.lane.b32.xlu0 %v3904, 120
      %v3963 = vpop.permute.xlu0 %3962
      %3964 = vrot.lane.b32.xlu0 %v3905, 120
      %v3965 = vpop.permute.xlu0 %3964
      %3966 = vrot.lane.b32.xlu0 %v3906, 120
      %v3967 = vpop.permute.xlu0 %3966
      %3968 = vrot.lane.b32.xlu0 %v3907, 120
      %v3969 = vpop.permute.xlu0 %3968
      %3970 = vrot.lane.b32.xlu0 %v3908, 120
      %v3971 = vpop.permute.xlu0 %3970
      %3972 = vrot.lane.b32.xlu0 %v3909, 120
      %v3973 = vpop.permute.xlu0 %3972
      %v3990 = vadd.f32 %v3910, %v3943
      %v3991 = vadd.f32 %v3911, %v3945
      %v3992 = vadd.f32 %v3912, %v3947
      %v3993 = vadd.f32 %v3913, %v3949
      %v3994 = vadd.f32 %v3914, %v3951
      %v3995 = vadd.f32 %v3915, %v3953
      %v3996 = vadd.f32 %v3916, %v3955
      %v3997 = vadd.f32 %v3917, %v3957
      %v3998 = vadd.f32 %v3918, %v3959
      %v3999 = vadd.f32 %v3919, %v3961
      %v4000 = vadd.f32 %v3920, %v3963
      %v4001 = vadd.f32 %v3921, %v3965
      %v4002 = vadd.f32 %v3922, %v3967
      %v4003 = vadd.f32 %v3923, %v3969
      %v4004 = vadd.f32 %v3924, %v3971
      %v4005 = vadd.f32 %v3925, %v3973
      %4006 = vst.msk [vmem:[#allocation2] sm:$0xff] %vm1567, %v3990
      %4007 = vst.msk [vmem:[#allocation2 + $0x8] sm:$0xff] %vm1567, %v3991
      %4008 = vst.msk [vmem:[#allocation2 + $0x10] sm:$0xff] %vm1567, %v3992
      %4009 = vst.msk [vmem:[#allocation2 + $0x18] sm:$0xff] %vm1567, %v3993
      %4010 = vst.msk [vmem:[#allocation2 + $0x20] sm:$0xff] %vm1567, %v3994
      %4011 = vst.msk [vmem:[#allocation2 + $0x28] sm:$0xff] %vm1567, %v3995
      %4012 = vst.msk [vmem:[#allocation2 + $0x30] sm:$0xff] %vm1567, %v3996
      %4013 = vst.msk [vmem:[#allocation2 + $0x38] sm:$0xff] %vm1567, %v3997
      %4014 = vst.msk [vmem:[#allocation2 + $0x40] sm:$0xff] %vm1567, %v3998
      %4015 = vst.msk [vmem:[#allocation2 + $0x48] sm:$0xff] %vm1567, %v3999
      %4016 = vst.msk [vmem:[#allocation2 + $0x50] sm:$0xff] %vm1567, %v4000
      %4017 = vst.msk [vmem:[#allocation2 + $0x58] sm:$0xff] %vm1567, %v4001
      %4018 = vst.msk [vmem:[#allocation2 + $0x60] sm:$0xff] %vm1567, %v4002
      %4019 = vst.msk [vmem:[#allocation2 + $0x68] sm:$0xff] %vm1567, %v4003
      %4020 = vst.msk [vmem:[#allocation2 + $0x70] sm:$0xff] %vm1567, %v4004
      %4021 = vst.msk [vmem:[#allocation2 + $0x78] sm:$0xff] %vm1567, %v4005
      // Predicated region
      $region41: #{tpu_custom_call.1} parent=35 // pred_check
        %p4022 = pneg %p268
      $region42: #{tpu_custom_call.1} parent=35 // pred_check_branch
        %4024 = sbr.rel (%p4022) target = $region44
      $region43: #{tpu_custom_call.1} parent=35 // pred_region
        %v4025 = vld [vmem:[#allocation2] sm:$0xff]
        %v4026 = vld [vmem:[#allocation2 + $0x8] sm:$0xff]
        %v4027 = vld [vmem:[#allocation2 + $0x10] sm:$0xff]
        %v4028 = vld [vmem:[#allocation2 + $0x18] sm:$0xff]
        %v4029 = vld [vmem:[#allocation2 + $0x20] sm:$0xff]
        %v4030 = vld [vmem:[#allocation2 + $0x28] sm:$0xff]
        %v4031 = vld [vmem:[#allocation2 + $0x30] sm:$0xff]
        %v4032 = vld [vmem:[#allocation2 + $0x38] sm:$0xff]
        %v4033 = vld [vmem:[#allocation2 + $0x40] sm:$0xff]
        %v4034 = vld [vmem:[#allocation2 + $0x48] sm:$0xff]
        %v4035 = vld [vmem:[#allocation2 + $0x50] sm:$0xff]
        %v4036 = vld [vmem:[#allocation2 + $0x58] sm:$0xff]
        %v4037 = vld [vmem:[#allocation2 + $0x60] sm:$0xff]
        %v4038 = vld [vmem:[#allocation2 + $0x68] sm:$0xff]
        %v4039 = vld [vmem:[#allocation2 + $0x70] sm:$0xff]
        %v4040 = vld [vmem:[#allocation2 + $0x78] sm:$0xff]
        %v4041 = vld [vmem:[%s3] sm:$0x1]
        %v4042 = vld [vmem:[%s3 + $0x1] sm:$0x1]
        %v4043 = vld [vmem:[%s3 + $0x2] sm:$0x1]
        %v4044 = vld [vmem:[%s3 + $0x3] sm:$0x1]
        %v4045 = vld [vmem:[%s3 + $0x4] sm:$0x1]
        %v4046 = vld [vmem:[%s3 + $0x5] sm:$0x1]
        %v4047 = vld [vmem:[%s3 + $0x6] sm:$0x1]
        %v4048 = vld [vmem:[%s3 + $0x7] sm:$0x1]
        %v4057 = vlaneseq
        %v4058 = vshrl.u32 %v4057, 7
        %v4059 = vsub.s32 0, %v4058
        %v4060 = vrot.slane %v4041, %v4059
        %v4061 = vlaneseq
        %v4062 = vshrl.u32 %v4061, 7
        %v4063 = vsub.s32 0, %v4062
        %v4064 = vrot.slane %v4042, %v4063
        %v4065 = vlaneseq
        %v4066 = vshrl.u32 %v4065, 7
        %v4067 = vsub.s32 0, %v4066
        %v4068 = vrot.slane %v4043, %v4067
        %v4069 = vlaneseq
        %v4070 = vshrl.u32 %v4069, 7
        %v4071 = vsub.s32 0, %v4070
        %v4072 = vrot.slane %v4044, %v4071
        %v4073 = vlaneseq
        %v4074 = vshrl.u32 %v4073, 7
        %v4075 = vsub.s32 0, %v4074
        %v4076 = vrot.slane %v4045, %v4075
        %v4077 = vlaneseq
        %v4078 = vshrl.u32 %v4077, 7
        %v4079 = vsub.s32 0, %v4078
        %v4080 = vrot.slane %v4046, %v4079
        %v4081 = vlaneseq
        %v4082 = vshrl.u32 %v4081, 7
        %v4083 = vsub.s32 0, %v4082
        %v4084 = vrot.slane %v4047, %v4083
        %v4085 = vlaneseq
        %v4086 = vshrl.u32 %v4085, 7
        %v4087 = vsub.s32 0, %v4086
        %v4088 = vrot.slane %v4048, %v4087
        %4089 = vset.pattern.permute.xlu0 0
        %4090 = vperm.xlu0 %4089, %v4060
        %v4091 = vpop.permute.xlu0 %4090
        %4093 = vset.pattern.permute.xlu0 0
        %4094 = vperm.xlu0 %4093, %v4064
        %v4095 = vpop.permute.xlu0 %4094
        %4097 = vset.pattern.permute.xlu0 0
        %4098 = vperm.xlu0 %4097, %v4068
        %v4099 = vpop.permute.xlu0 %4098
        %4101 = vset.pattern.permute.xlu0 0
        %4102 = vperm.xlu0 %4101, %v4072
        %v4103 = vpop.permute.xlu0 %4102
        %4105 = vset.pattern.permute.xlu0 0
        %4106 = vperm.xlu0 %4105, %v4076
        %v4107 = vpop.permute.xlu0 %4106
        %4109 = vset.pattern.permute.xlu0 0
        %4110 = vperm.xlu0 %4109, %v4080
        %v4111 = vpop.permute.xlu0 %4110
        %4113 = vset.pattern.permute.xlu0 0
        %4114 = vperm.xlu0 %4113, %v4084
        %v4115 = vpop.permute.xlu0 %4114
        %4117 = vset.pattern.permute.xlu0 0
        %4118 = vperm.xlu0 %4117, %v4088
        %v4119 = vpop.permute.xlu0 %4118
        %v4121 = vadd.f32 %v4025, %v4091
        %v4122 = vadd.f32 %v4026, %v4091
        %v4123 = vadd.f32 %v4027, %v4095
        %v4124 = vadd.f32 %v4028, %v4095
        %v4125 = vadd.f32 %v4029, %v4099
        %v4126 = vadd.f32 %v4030, %v4099
        %v4127 = vadd.f32 %v4031, %v4103
        %v4128 = vadd.f32 %v4032, %v4103
        %v4129 = vadd.f32 %v4033, %v4107
        %v4130 = vadd.f32 %v4034, %v4107
        %v4131 = vadd.f32 %v4035, %v4111
        %v4132 = vadd.f32 %v4036, %v4111
        %v4133 = vadd.f32 %v4037, %v4115
        %v4134 = vadd.f32 %v4038, %v4115
        %v4135 = vadd.f32 %v4039, %v4119
        %v4136 = vadd.f32 %v4040, %v4119
        %vm4137 = vcmp.gt.f32.partialorder %v4121, 0.0
        %vm4138 = vcmp.gt.f32.partialorder %v4122, 0.0
        %vm4139 = vcmp.gt.f32.partialorder %v4123, 0.0
        %vm4140 = vcmp.gt.f32.partialorder %v4124, 0.0
        %vm4141 = vcmp.gt.f32.partialorder %v4125, 0.0
        %vm4142 = vcmp.gt.f32.partialorder %v4126, 0.0
        %vm4143 = vcmp.gt.f32.partialorder %v4127, 0.0
        %vm4144 = vcmp.gt.f32.partialorder %v4128, 0.0
        %vm4145 = vcmp.gt.f32.partialorder %v4129, 0.0
        %vm4146 = vcmp.gt.f32.partialorder %v4130, 0.0
        %vm4147 = vcmp.gt.f32.partialorder %v4131, 0.0
        %vm4148 = vcmp.gt.f32.partialorder %v4132, 0.0
        %vm4149 = vcmp.gt.f32.partialorder %v4133, 0.0
        %vm4150 = vcmp.gt.f32.partialorder %v4134, 0.0
        %vm4151 = vcmp.gt.f32.partialorder %v4135, 0.0
        %vm4152 = vcmp.gt.f32.partialorder %v4136, 0.0
        %v4153 = vmul.f32 %v4121, 0.333
        %v4154 = vmul.f32 %v4122, 0.333
        %v4155 = vmul.f32 %v4123, 0.333
        %v4156 = vmul.f32 %v4124, 0.333
        %v4157 = vmul.f32 %v4125, 0.333
        %v4158 = vmul.f32 %v4126, 0.333
        %v4159 = vmul.f32 %v4127, 0.333
        %v4160 = vmul.f32 %v4128, 0.333
        %v4161 = vmul.f32 %v4129, 0.333
        %v4162 = vmul.f32 %v4130, 0.333
        %v4163 = vmul.f32 %v4131, 0.333
        %v4164 = vmul.f32 %v4132, 0.333
        %v4165 = vmul.f32 %v4133, 0.333
        %v4166 = vmul.f32 %v4134, 0.333
        %v4167 = vmul.f32 %v4135, 0.333
        %v4168 = vmul.f32 %v4136, 0.333
        %v4169 = vsel %vm4137, %v4121, %v4153
        %v4170 = vsel %vm4138, %v4122, %v4154
        %v4171 = vsel %vm4139, %v4123, %v4155
        %v4172 = vsel %vm4140, %v4124, %v4156
        %v4173 = vsel %vm4141, %v4125, %v4157
        %v4174 = vsel %vm4142, %v4126, %v4158
        %v4175 = vsel %vm4143, %v4127, %v4159
        %v4176 = vsel %vm4144, %v4128, %v4160
        %v4177 = vsel %vm4145, %v4129, %v4161
        %v4178 = vsel %vm4146, %v4130, %v4162
        %v4179 = vsel %vm4147, %v4131, %v4163
        %v4180 = vsel %vm4148, %v4132, %v4164
        %v4181 = vsel %vm4149, %v4133, %v4165
        %v4182 = vsel %vm4150, %v4134, %v4166
        %v4183 = vsel %vm4151, %v4135, %v4167
        %v4184 = vsel %vm4152, %v4136, %v4168
        %4185 = vst.msk [vmem:[%s266] sm:$0xff] %vm1567, %v4169
        %4186 = vst.msk [vmem:[%s266 + $0x8] sm:$0xff] %vm1567, %v4170
        %4187 = vst.msk [vmem:[%s266 + $0x10] sm:$0xff] %vm1567, %v4171
        %4188 = vst.msk [vmem:[%s266 + $0x18] sm:$0xff] %vm1567, %v4172
        %4189 = vst.msk [vmem:[%s266 + $0x20] sm:$0xff] %vm1567, %v4173
        %4190 = vst.msk [vmem:[%s266 + $0x28] sm:$0xff] %vm1567, %v4174
        %4191 = vst.msk [vmem:[%s266 + $0x30] sm:$0xff] %vm1567, %v4175
        %4192 = vst.msk [vmem:[%s266 + $0x38] sm:$0xff] %vm1567, %v4176
        %4193 = vst.msk [vmem:[%s266 + $0x40] sm:$0xff] %vm1567, %v4177
        %4194 = vst.msk [vmem:[%s266 + $0x48] sm:$0xff] %vm1567, %v4178
        %4195 = vst.msk [vmem:[%s266 + $0x50] sm:$0xff] %vm1567, %v4179
        %4196 = vst.msk [vmem:[%s266 + $0x58] sm:$0xff] %vm1567, %v4180
        %4197 = vst.msk [vmem:[%s266 + $0x60] sm:$0xff] %vm1567, %v4181
        %4198 = vst.msk [vmem:[%s266 + $0x68] sm:$0xff] %vm1567, %v4182
        %4199 = vst.msk [vmem:[%s266 + $0x70] sm:$0xff] %vm1567, %v4183
        %4200 = vst.msk [vmem:[%s266 + $0x78] sm:$0xff] %vm1567, %v4184
      $region44: #{tpu_custom_call.1} parent=35 // pred_fallthru
        _
      %s4201 = smul.u32 2, %s21
      %p4202 = scmp.lt.s32.totalorder %s20, 1
      %s4203 = scalar_select %p4202, %s20, 1
      %p4204 = scmp.lt.s32.totalorder %s4201, 1
      %s4205 = scalar_select %p4204, %s4201, 1
      %s4206 = smul.addr %s4203, 16
      %s4207 = sadd.s32 %s4205, %s4206
      %s4208 = smul.addr %s4207, 8
      %s4209 = scalar_lea.vmem %s4, %s4208
      // Predicated region
      $region45: #{tpu_custom_call.1} parent=35 // pred_check
        %p4210 = pneg %p152
      $region46: #{tpu_custom_call.1} parent=35 // pred_check_branch
        %4212 = sbr.rel (%p4210) target = $region48
      $region47: #{tpu_custom_call.1} parent=35 // pred_region
        %s4213 = smul.u32 2, %s21
      $region48: #{tpu_custom_call.1} parent=35 // pred_fallthru
        _
    $region36: #{tpu_custom_call.1} parent=5 // pred_fallthru
      _
    %p4214 = scmp.le.s32.totalorder 2, %s10
    // Predicated region
    $region49: #{tpu_custom_call.1} parent=5 // pred_check
      %p4215 = pneg %p4214
    $region50: #{tpu_custom_call.1} parent=5 // pred_check_branch
      %4217 = sbr.rel (%p4215) target = $region52
    $region51: #{tpu_custom_call.1} parent=5 // pred_region
      %s4218 = ssub.s32 %s10, 2
      // Predicated region
      $region53: #{tpu_custom_call.1} parent=51 // pred_check
        %p4219 = pneg %p158
      $region54: #{tpu_custom_call.1} parent=51 // pred_check_branch
        %4221 = sbr.rel (%p4219) target = $region56
      $region55: #{tpu_custom_call.1} parent=51 // pred_region
        %s4222 = smul.u32 2, %s24
        %p4223 = scmp.lt.s32.totalorder %s23, 1
        %s4224 = scalar_select %p4223, %s23, 1
        %p4225 = scmp.lt.s32.totalorder %s4222, 1
        %s4226 = scalar_select %p4225, %s4222, 1
        %s4227 = smul.addr %s4224, 16
        %s4228 = sadd.s32 %s4226, %s4227
        %s4229 = smul.addr %s4228, 8
        %s4230 = scalar_lea.vmem %s4, %s4229
      $region56: #{tpu_custom_call.1} parent=51 // pred_fallthru
        _
    $region52: #{tpu_custom_call.1} parent=5 // pred_fallthru
      _
  $region6: #{tpu_custom_call.1} parent=0 // loop_footer
    %s14 = sadd.s32 1, %s10
  $region7: #{tpu_custom_call.1} parent=0 // loop_footer_branch
    %9 = sbr.rel target = $region3
  $region8: #{tpu_custom_call.1} parent=0 // loop_exit
    _

</llo_original>
